<compile_context>
chip_gen: v6e
topology: v6e:2x2x1
jax: 0.10.0
libtpu: 0.0.40
codegen_flags: <defaults>
</compile_context>

<pallas_src>
import math
from functools import partial

import jax
import jax.numpy as jnp
from jax import lax
from jax.experimental import pallas as pl
from jax.experimental.pallas import tpu as pltpu


def _round_up(x, m):
    return (x + m - 1) // m * m


# ---------------------------------------------------------------------------
# Pallas kernel: per-batch fused downsample conv
#   y_ref : (1, Ho+2, Wo+2, 4*Cin)  zero-padded space-to-depth image (one batch)
#   w_ref : (9, 4*Cin, Np)          3x3 tap weight matrices, Np = round_up(C_out, 128)
#   b_ref : (1, Np)                 bias (f32)
#   o_ref : (1, Ho*Wo, Np)          lane-dense output tile
# ---------------------------------------------------------------------------
def _downsample_kernel(y_ref, w_ref, b_ref, o_ref, *, Ho, Wo):
    np_out = w_ref.shape[-1]
    yb = y_ref[0]                                      # (Ho+2, Wo+2, 4*Cin)
    acc = jnp.zeros((Ho * Wo, np_out), jnp.float32)
    # 9 shifted taps of the s2d image; unrolled at trace time, all feed the same f32 acc.
    # (w_ref holds ~2.25x structural zeros vs raw im2col weights; negligible for this
    #  memory-bound op and it keeps every tap slice contiguous / stride-1.)
    for ai in range(3):
        for bj in range(3):
            tap = yb[ai:ai + Ho, bj:bj + Wo, :].reshape(Ho * Wo, -1)
            acc = acc + jnp.dot(tap, w_ref[ai * 3 + bj],
                                preferred_element_type=jnp.float32)
    o_ref[0] = (acc + b_ref[...]).astype(o_ref.dtype)  # f32 epilogue (v5e-friendly)


def downsample_conv_pallas(y_pad, w3, bias_pad, Ho, Wo, out_dtype):
    """(B, Ho+2, Wo+2, 4C) s2d image -> (B, Ho*Wo, Np) via fused 9-tap conv GEMM."""
    B, hp, wp, K4 = y_pad.shape
    assert hp == Ho + 2 and wp == Wo + 2
    Np = w3.shape[-1]
    M_img = Ho * Wo
    out_itemsize = jnp.dtype(out_dtype).itemsize

    kernel = partial(_downsample_kernel, Ho=Ho, Wo=Wo)

    # Dtype-aware advisory cost.
    cost = pl.CostEstimate(
        flops=2 * B * M_img * (9 * K4) * Np,
        transcendentals=0,
        bytes_accessed=(y_pad.size * y_pad.dtype.itemsize
                        + w3.size * w3.dtype.itemsize
                        + bias_pad.size * bias_pad.dtype.itemsize
                        + B * M_img * Np * out_itemsize),
    )

    # VMEM footprint: double-buffered y block + resident (but possibly double-buffered)
    # weights + double-buffered out block + f32 accumulator & tap temporaries.
    y_blk = hp * wp * K4 * y_pad.dtype.itemsize
    w_bytes = w3.size * w3.dtype.itemsize
    o_blk = M_img * Np * out_itemsize
    acc_bytes = M_img * Np * 4
    est = 2 * y_blk + 2 * w_bytes + 2 * o_blk + 4 * acc_bytes
    vmem_limit = min(max(2 * est, 32 << 20), 64 << 20)   # sized for v7x's 64 MiB VMEM

    return pl.pallas_call(
        kernel,
        out_shape=jax.ShapeDtypeStruct((B, M_img, Np), out_dtype),
        grid_spec=pltpu.PrefetchScalarGridSpec(
            num_scalar_prefetch=0,
            grid=(B,),
            in_specs=[
                pl.BlockSpec((1, hp, wp, K4), lambda b: (b, 0, 0, 0)),
                pl.BlockSpec((9, K4, Np), lambda b: (0, 0, 0)),   # resident across b
                pl.BlockSpec((1, Np), lambda b: (0, 0)),
            ],
            out_specs=pl.BlockSpec((1, M_img, Np), lambda b: (b, 0, 0)),
        ),
        compiler_params=pltpu.CompilerParams(
            dimension_semantics=("parallel",),      # v7x: batches split across both TCs
            vmem_limit_bytes=vmem_limit,
        ),
        cost_estimate=cost,
    )(y_pad, w3, bias_pad.reshape(1, Np))


# ---------------------------------------------------------------------------
# Init-time weight transform: Conv2d OIHW (Cout, Cin, 4, 4) -> 9 tap matrices
# (3, 3, 2, 2, Cin, Np) -> (9, 4*Cin, Np), channel order (p, q, c) matching the
# space-to-depth layout. kh = 2a + p + 1, kw = 2b + q + 1.
# ---------------------------------------------------------------------------
def _conv_weight_to_tap_matrices(w_oihw, n_pad):
    c_out, c_in, _, _ = w_oihw.shape
    w3 = jnp.zeros((3, 3, 2, 2, c_in, n_pad), jnp.float32)
    for kh in range(4):
        a, p = divmod(kh - 1, 2)
        for kw in range(4):
            b, q = divmod(kw - 1, 2)
            w_cio = jnp.transpose(w_oihw[:, :, kh, kw], (1, 0))   # (Cin, Cout)
            w3 = w3.at[a + 1, b + 1, p, q, :, :c_out].set(w_cio)
    return w3.reshape(9, 4 * c_in, n_pad)


def init_downsample_params(key, in_channels, out_channels):
    """Synthetic deterministic init matching nn.Conv2d(C_in, C_out, 4, 2, 1) shapes."""
    k1, k2 = jax.random.split(key)
    w_oihw = jax.random.normal(k1, (out_channels, in_channels, 4, 4), jnp.float32) * 0.02
    b = jax.random.normal(k2, (out_channels,), jnp.float32) * 0.02
    n_pad = _round_up(out_channels, 128)              # lane-dense N (review item #2)
    w3 = _conv_weight_to_tap_matrices(w_oihw, n_pad)
    b_pad = jnp.zeros((n_pad,), jnp.float32).at[:out_channels].set(b)
    return {"w_oihw": w_oihw, "b": b, "w3": w3, "b_pad": b_pad}


# ---------------------------------------------------------------------------
# Layout glue kept in JAX: 2x2 space-to-depth + 1-pixel zero pad (no 16x expansion).
# ---------------------------------------------------------------------------
def _space_to_depth_pad(x_nhwc):
    B, H, W, C = x_nhwc.shape
    Ho, Wo = H // 2, W // 2
    y = (x_nhwc.reshape(B, Ho, 2, Wo, 2, C)
         .transpose(0, 1, 3, 2, 4, 5)                 # (B, Ho, Wo, p, q, C)
         .reshape(B, Ho, Wo, 4 * C))
    return jnp.pad(y, ((0, 0), (1, 1), (1, 1), (0, 0)))


# ---------------------------------------------------------------------------
# Module forward
# ---------------------------------------------------------------------------
@partial(jax.jit, static_argnames=("compute_dtype",))
def downsample_block_forward(params, x, compute_dtype=None):
    """Pallas implementation of DownSampleBlock.forward. x: (B, L, C_in) -> (B, L/4, C_out)."""
    B, L, C = x.shape
    H = W = int(round(math.sqrt(L)))
    assert H * W == L, "DownSampleBlock expects a square token grid"
    assert H % 2 == 0 and W % 2 == 0
    Ho, Wo = H // 2, W // 2
    c_out = params["b"].shape[0]

    x_nhwc = x.reshape(B, H, W, C)
    if compute_dtype is not None:                     # cast BEFORE the layout transform
        x_nhwc = x_nhwc.astype(compute_dtype)         # (halves the dominant HBM stream)
    y_pad = _space_to_depth_pad(x_nhwc)               # (B, Ho+2, Wo+2, 4*C)

    w3 = params["w3"]
    if compute_dtype is not None:                     # e.g. jnp.bfloat16 on v6e/v7x
        w3 = w3.astype(compute_dtype)

    out = downsample_conv_pallas(y_pad, w3, params["b_pad"], Ho, Wo,
                                 out_dtype=x.dtype)   # (B, Ho*Wo, Np)
    return out[:, :, :c_out]                          # drop the lane padding


if __name__ == "__main__":
    # Small but MXU-relevant shapes: B=2, H=W=32 (L=1024), C_in=32 -> C_out=64.
    B, H, W = 2, 32, 32
    Cin, Cout = 32, 64
    L = H * W

    key = jax.random.PRNGKey(0)
    kx, kp = jax.random.split(key)
    x = jax.random.normal(kx, (B, L, Cin), jnp.float32)
    params = init_downsample_params(kp, Cin, Cout)

    out = downsample_block_forward(params, x)
    jax.block_until_ready(out)

    # Reference: exact mirror of the torch module via lax.conv (NCHW / OIHW).
    Ho, Wo = H // 2, W // 2
    x_nchw = x.reshape(B, H, W, Cin).transpose(0, 3, 1, 2)
    ref = lax.conv_general_dilated(
        x_nchw, params["w_oihw"], window_strides=(2, 2),
        padding=((1, 1), (1, 1)),
        dimension_numbers=("NCHW", "OIHW", "NCHW"),
        precision=lax.Precision.HIGHEST)
    ref = ref + params["b"][None, :, None, None]
    ref = ref.reshape(B, Cout, Ho * Wo).transpose(0, 2, 1)          # (B, L/4, C_out)

    assert out.shape == (B, Ho * Wo, Cout), out.shape
    max_err = float(jnp.max(jnp.abs(out - ref)))
    assert max_err < 1e-3, f"max abs err {max_err}"
    print("KERNEL_OK")
</pallas_src>

<mosaic_0001>
module attributes {stable_mosaic.version = 11 : i64} {
  func.func @_downsample_kernel(%arg0: i32, %arg1: memref<1x18x18x128xf32, #tpu.memory_space<vmem>>, %arg2: memref<9x128x128xf32, #tpu.memory_space<vmem>>, %arg3: memref<1x128xf32, #tpu.memory_space<vmem>>, %arg4: memref<1x256x128xf32, #tpu.memory_space<vmem>>) attributes {dimension_semantics = [#tpu.dimension_semantics<parallel>], iteration_bounds = array<i64: 2>, scalar_prefetch = 0 : i64, scratch_operands = 0 : i64, tpu.core_type = #tpu.core_type<tc>, window_params = [{transform_indices = @transform_0, window_bounds = array<i64: 1, 18, 18, 128>}, {pipeline_mode = #tpu.pipeline_mode<synchronous>, transform_indices = @transform_1, window_bounds = array<i64: 9, 128, 128>}, {pipeline_mode = #tpu.pipeline_mode<synchronous>, transform_indices = @transform_2, window_bounds = array<i64: 1, 128>}, {transform_indices = @transform_3, window_bounds = array<i64: 1, 256, 128>}]} {
    %c0 = arith.constant 0 : index
    %c0_0 = arith.constant 0 : index
    %c0_1 = arith.constant 0 : index
    %c0_2 = arith.constant 0 : index
    %0 = vector.load %arg1[%c0, %c0_0, %c0_1, %c0_2] : memref<1x18x18x128xf32, #tpu.memory_space<vmem>>, vector<1x18x18x128xf32>
    %1 = vector.shape_cast %0 : vector<1x18x18x128xf32> to vector<18x18x128xf32>
    %cst = arith.constant 0.000000e+00 : f32
    %2 = vector.broadcast %cst : f32 to vector<256x128xf32>
    %3 = vector.extract_strided_slice %1 {offsets = [0, 0, 0], sizes = [16, 16, 128], strides = [1, 1, 1]} : vector<18x18x128xf32> to vector<16x16x128xf32>
    %4 = vector.shape_cast %3 : vector<16x16x128xf32> to vector<256x128xf32>
    %c0_3 = arith.constant 0 : index
    %c0_4 = arith.constant 0 : index
    %c0_5 = arith.constant 0 : index
    %5 = vector.load %arg2[%c0_3, %c0_4, %c0_5] : memref<9x128x128xf32, #tpu.memory_space<vmem>>, vector<1x128x128xf32>
    %6 = vector.shape_cast %5 : vector<1x128x128xf32> to vector<128x128xf32>
    %cst_6 = arith.constant dense<0.000000e+00> : vector<256x128xf32>
    %7 = tpu.matmul %4, %6, %cst_6 {dimension_numbers = #tpu.dot_dimension_numbers<[1], [0], [0], [1], [0, 0, 1, 1], [], []>} : vector<256x128xf32>, vector<128x128xf32>, vector<256x128xf32> -> vector<256x128xf32>
    %8 = arith.addf %2, %7 : vector<256x128xf32>
    %9 = vector.extract_strided_slice %1 {offsets = [0, 1, 0], sizes = [16, 16, 128], strides = [1, 1, 1]} : vector<18x18x128xf32> to vector<16x16x128xf32>
    %10 = vector.shape_cast %9 : vector<16x16x128xf32> to vector<256x128xf32>
    %c1 = arith.constant 1 : index
    %c0_7 = arith.constant 0 : index
    %c0_8 = arith.constant 0 : index
    %11 = vector.load %arg2[%c1, %c0_7, %c0_8] : memref<9x128x128xf32, #tpu.memory_space<vmem>>, vector<1x128x128xf32>
    %12 = vector.shape_cast %11 : vector<1x128x128xf32> to vector<128x128xf32>
    %cst_9 = arith.constant dense<0.000000e+00> : vector<256x128xf32>
    %13 = tpu.matmul %10, %12, %cst_9 {dimension_numbers = #tpu.dot_dimension_numbers<[1], [0], [0], [1], [0, 0, 1, 1], [], []>} : vector<256x128xf32>, vector<128x128xf32>, vector<256x128xf32> -> vector<256x128xf32>
    %14 = arith.addf %8, %13 : vector<256x128xf32>
    %15 = vector.extract_strided_slice %1 {offsets = [0, 2, 0], sizes = [16, 16, 128], strides = [1, 1, 1]} : vector<18x18x128xf32> to vector<16x16x128xf32>
    %16 = vector.shape_cast %15 : vector<16x16x128xf32> to vector<256x128xf32>
    %c2 = arith.constant 2 : index
    %c0_10 = arith.constant 0 : index
    %c0_11 = arith.constant 0 : index
    %17 = vector.load %arg2[%c2, %c0_10, %c0_11] : memref<9x128x128xf32, #tpu.memory_space<vmem>>, vector<1x128x128xf32>
    %18 = vector.shape_cast %17 : vector<1x128x128xf32> to vector<128x128xf32>
    %cst_12 = arith.constant dense<0.000000e+00> : vector<256x128xf32>
    %19 = tpu.matmul %16, %18, %cst_12 {dimension_numbers = #tpu.dot_dimension_numbers<[1], [0], [0], [1], [0, 0, 1, 1], [], []>} : vector<256x128xf32>, vector<128x128xf32>, vector<256x128xf32> -> vector<256x128xf32>
    %20 = arith.addf %14, %19 : vector<256x128xf32>
    %21 = vector.extract_strided_slice %1 {offsets = [1, 0, 0], sizes = [16, 16, 128], strides = [1, 1, 1]} : vector<18x18x128xf32> to vector<16x16x128xf32>
    %22 = vector.shape_cast %21 : vector<16x16x128xf32> to vector<256x128xf32>
    %c3 = arith.constant 3 : index
    %c0_13 = arith.constant 0 : index
    %c0_14 = arith.constant 0 : index
    %23 = vector.load %arg2[%c3, %c0_13, %c0_14] : memref<9x128x128xf32, #tpu.memory_space<vmem>>, vector<1x128x128xf32>
    %24 = vector.shape_cast %23 : vector<1x128x128xf32> to vector<128x128xf32>
    %cst_15 = arith.constant dense<0.000000e+00> : vector<256x128xf32>
    %25 = tpu.matmul %22, %24, %cst_15 {dimension_numbers = #tpu.dot_dimension_numbers<[1], [0], [0], [1], [0, 0, 1, 1], [], []>} : vector<256x128xf32>, vector<128x128xf32>, vector<256x128xf32> -> vector<256x128xf32>
    %26 = arith.addf %20, %25 : vector<256x128xf32>
    %27 = vector.extract_strided_slice %1 {offsets = [1, 1, 0], sizes = [16, 16, 128], strides = [1, 1, 1]} : vector<18x18x128xf32> to vector<16x16x128xf32>
    %28 = vector.shape_cast %27 : vector<16x16x128xf32> to vector<256x128xf32>
    %c4 = arith.constant 4 : index
    %c0_16 = arith.constant 0 : index
    %c0_17 = arith.constant 0 : index
    %29 = vector.load %arg2[%c4, %c0_16, %c0_17] : memref<9x128x128xf32, #tpu.memory_space<vmem>>, vector<1x128x128xf32>
    %30 = vector.shape_cast %29 : vector<1x128x128xf32> to vector<128x128xf32>
    %cst_18 = arith.constant dense<0.000000e+00> : vector<256x128xf32>
    %31 = tpu.matmul %28, %30, %cst_18 {dimension_numbers = #tpu.dot_dimension_numbers<[1], [0], [0], [1], [0, 0, 1, 1], [], []>} : vector<256x128xf32>, vector<128x128xf32>, vector<256x128xf32> -> vector<256x128xf32>
    %32 = arith.addf %26, %31 : vector<256x128xf32>
    %33 = vector.extract_strided_slice %1 {offsets = [1, 2, 0], sizes = [16, 16, 128], strides = [1, 1, 1]} : vector<18x18x128xf32> to vector<16x16x128xf32>
    %34 = vector.shape_cast %33 : vector<16x16x128xf32> to vector<256x128xf32>
    %c5 = arith.constant 5 : index
    %c0_19 = arith.constant 0 : index
    %c0_20 = arith.constant 0 : index
    %35 = vector.load %arg2[%c5, %c0_19, %c0_20] : memref<9x128x128xf32, #tpu.memory_space<vmem>>, vector<1x128x128xf32>
    %36 = vector.shape_cast %35 : vector<1x128x128xf32> to vector<128x128xf32>
    %cst_21 = arith.constant dense<0.000000e+00> : vector<256x128xf32>
    %37 = tpu.matmul %34, %36, %cst_21 {dimension_numbers = #tpu.dot_dimension_numbers<[1], [0], [0], [1], [0, 0, 1, 1], [], []>} : vector<256x128xf32>, vector<128x128xf32>, vector<256x128xf32> -> vector<256x128xf32>
    %38 = arith.addf %32, %37 : vector<256x128xf32>
    %39 = vector.extract_strided_slice %1 {offsets = [2, 0, 0], sizes = [16, 16, 128], strides = [1, 1, 1]} : vector<18x18x128xf32> to vector<16x16x128xf32>
    %40 = vector.shape_cast %39 : vector<16x16x128xf32> to vector<256x128xf32>
    %c6 = arith.constant 6 : index
    %c0_22 = arith.constant 0 : index
    %c0_23 = arith.constant 0 : index
    %41 = vector.load %arg2[%c6, %c0_22, %c0_23] : memref<9x128x128xf32, #tpu.memory_space<vmem>>, vector<1x128x128xf32>
    %42 = vector.shape_cast %41 : vector<1x128x128xf32> to vector<128x128xf32>
    %cst_24 = arith.constant dense<0.000000e+00> : vector<256x128xf32>
    %43 = tpu.matmul %40, %42, %cst_24 {dimension_numbers = #tpu.dot_dimension_numbers<[1], [0], [0], [1], [0, 0, 1, 1], [], []>} : vector<256x128xf32>, vector<128x128xf32>, vector<256x128xf32> -> vector<256x128xf32>
    %44 = arith.addf %38, %43 : vector<256x128xf32>
    %45 = vector.extract_strided_slice %1 {offsets = [2, 1, 0], sizes = [16, 16, 128], strides = [1, 1, 1]} : vector<18x18x128xf32> to vector<16x16x128xf32>
    %46 = vector.shape_cast %45 : vector<16x16x128xf32> to vector<256x128xf32>
    %c7 = arith.constant 7 : index
    %c0_25 = arith.constant 0 : index
    %c0_26 = arith.constant 0 : index
    %47 = vector.load %arg2[%c7, %c0_25, %c0_26] : memref<9x128x128xf32, #tpu.memory_space<vmem>>, vector<1x128x128xf32>
    %48 = vector.shape_cast %47 : vector<1x128x128xf32> to vector<128x128xf32>
    %cst_27 = arith.constant dense<0.000000e+00> : vector<256x128xf32>
    %49 = tpu.matmul %46, %48, %cst_27 {dimension_numbers = #tpu.dot_dimension_numbers<[1], [0], [0], [1], [0, 0, 1, 1], [], []>} : vector<256x128xf32>, vector<128x128xf32>, vector<256x128xf32> -> vector<256x128xf32>
    %50 = arith.addf %44, %49 : vector<256x128xf32>
    %51 = vector.extract_strided_slice %1 {offsets = [2, 2, 0], sizes = [16, 16, 128], strides = [1, 1, 1]} : vector<18x18x128xf32> to vector<16x16x128xf32>
    %52 = vector.shape_cast %51 : vector<16x16x128xf32> to vector<256x128xf32>
    %c8 = arith.constant 8 : index
    %c0_28 = arith.constant 0 : index
    %c0_29 = arith.constant 0 : index
    %53 = vector.load %arg2[%c8, %c0_28, %c0_29] : memref<9x128x128xf32, #tpu.memory_space<vmem>>, vector<1x128x128xf32>
    %54 = vector.shape_cast %53 : vector<1x128x128xf32> to vector<128x128xf32>
    %cst_30 = arith.constant dense<0.000000e+00> : vector<256x128xf32>
    %55 = tpu.matmul %52, %54, %cst_30 {dimension_numbers = #tpu.dot_dimension_numbers<[1], [0], [0], [1], [0, 0, 1, 1], [], []>} : vector<256x128xf32>, vector<128x128xf32>, vector<256x128xf32> -> vector<256x128xf32>
    %56 = arith.addf %50, %55 : vector<256x128xf32>
    %c0_31 = arith.constant 0 : index
    %c0_32 = arith.constant 0 : index
    %57 = vector.load %arg3[%c0_31, %c0_32] : memref<1x128xf32, #tpu.memory_space<vmem>>, vector<1x128xf32>
    %58 = vector.broadcast %57 : vector<1x128xf32> to vector<256x128xf32>
    %59 = arith.addf %56, %58 : vector<256x128xf32>
    %c0_33 = arith.constant 0 : index
    %c0_34 = arith.constant 0 : index
    %c0_35 = arith.constant 0 : index
    %60 = vector.load %arg4[%c0_33, %c0_34, %c0_35] : memref<1x256x128xf32, #tpu.memory_space<vmem>>, vector<1x256x128xf32>
    %61 = vector.shape_cast %60 : vector<1x256x128xf32> to vector<256x128xf32>
    %62 = vector.shape_cast %59 : vector<256x128xf32> to vector<1x256x128xf32>
    tpu.vector_store %arg4[%c0_33, %c0_34, %c0_35], %62 {strides = array<i32>} : memref<1x256x128xf32, #tpu.memory_space<vmem>>, vector<1x256x128xf32>,
    return
  }
  func.func @transform_0(%arg0: i32) -> (i32, i32, i32, i32) {
    %c0_i32 = arith.constant 0 : i32
    %c0_i32_0 = arith.constant 0 : i32
    %c0_i32_1 = arith.constant 0 : i32
    %c0_i32_2 = arith.constant 0 : i32
    return %arg0, %c0_i32, %c0_i32_0, %c0_i32_1 : i32, i32, i32, i32
  }
  func.func @transform_1(%arg0: i32) -> (i32, i32, i32) {
    %c0_i32 = arith.constant 0 : i32
    %c0_i32_0 = arith.constant 0 : i32
    %c0_i32_1 = arith.constant 0 : i32
    %c0_i32_2 = arith.constant 0 : i32
    return %c0_i32, %c0_i32_0, %c0_i32_1 : i32, i32, i32
  }
  func.func @transform_2(%arg0: i32) -> (i32, i32) {
    %c0_i32 = arith.constant 0 : i32
    %c0_i32_0 = arith.constant 0 : i32
    %c0_i32_1 = arith.constant 0 : i32
    return %c0_i32, %c0_i32_0 : i32, i32
  }
  func.func @transform_3(%arg0: i32) -> (i32, i32, i32) {
    %c0_i32 = arith.constant 0 : i32
    %c0_i32_0 = arith.constant 0 : i32
    %c0_i32_1 = arith.constant 0 : i32
    return %arg0, %c0_i32, %c0_i32_0 : i32, i32, i32
  }
}

</mosaic_0001>

<llo_original>
// kernel: downsample_block_forward.1
$region0: #{downsample_block_forward.1}
  #allocation0 [shape = 'u32[]', space=smem, size = 0x4, offset = 0x4, fixed_abs, tag = 'smem constant byte address 0x4 - core index']
  #allocation1 [shape = 'u32[144,128]{1,0:T(1,128)}', space=vmem, size = 0x12000, scoped, tag = 'internal scratch']
  %s0 = inlined_call_operand.vmem [shape: f32[2,18,18,128], index: 0, kind: input, shape index: {}]
  %s1 = inlined_call_operand.vmem [shape: f32[9,128,128], index: 1, kind: input, shape index: {}]
  %s2 = inlined_call_operand.vmem [shape: f32[1,128], index: 2, kind: input, shape index: {}]
  %s3 = inlined_call_operand.vmem [shape: f32[2,256,128], index: 3, kind: output, shape index: {}]
  %s4 = sld [smem:[#allocation0]]
  $region45: #{downsample_block_forward.1} parent=0
    _
  %s6 = ssub.s32 1, %s4
  %s7 = scalar_select 0, %s6, %s4
  loop: start=0, step=1, limit=4
  $region2: #{downsample_block_forward.1} parent=0 // loop_pre_header
    _
  $region3: #{downsample_block_forward.1} parent=0 // loop_header
    %s9 = sphi 0, %s13
    %p10 = scmp.ge.s32.totalorder %s9, 4
    %s19 = sphi 0, %s21
    %s22 = sphi 0, %s19
    %s23 = sphi 0, %s22
    %s39 = sphi 0, %s23
    %s43 = sphi 0, %s43
    %s45 = sphi 0, %s43
    %s46 = sphi 0, %s45
    %s60 = sphi 0, %s46
    %s64 = sphi 0, %s64
    %s66 = sphi 0, %s64
    %s67 = sphi 0, %s66
    %s81 = sphi 0, %s67
    %s87 = sphi 0, %s89
    %s90 = sphi 0, %s87
    %s91 = sphi 0, %s90
    %s107 = sphi 0, %s91
  $region4: #{downsample_block_forward.1} parent=0 // loop_header_branch
    %12 = sbr.rel (%p10) target = $region8
  $region5: #{downsample_block_forward.1} parent=0 // loop_body
    %s14 = ssub.s32 %s9, 1
    %s15 = ssub.s32 %s9, 2
    %s16 = sadd.s32 %s9, 1
    %s17 = ssub.s32 %s9, %s16
    %p18 = scmp.eq.s32.totalorder %s17, 0
    %s20 = sadd.s32 %s19, 1
    %s21 = scalar_select %p18, %s19, %s20
    %p24 = pneg %p18
    %p25 = scmp.eq.s32.totalorder %s9, 1
    %p26 = por %p24, %p25
    %p27 = scmp.ne.s32.totalorder %s19, %s22
    %p28 = scmp.eq.s32.totalorder %s9, 0
    %p29 = por %p27, %p28
    %p30 = scmp.ne.s32.totalorder %s19, %s22
    %p31 = scmp.eq.s32.totalorder %s14, 1
    %p32 = por %p30, %p31
    %p33 = scmp.ne.s32.totalorder %s22, %s23
    %p34 = scmp.eq.s32.totalorder %s14, 0
    %p35 = por %p33, %p34
    %p36 = scmp.ne.s32.totalorder %s22, %s23
    %p37 = scmp.eq.s32.totalorder %s15, 1
    %p38 = por %p36, %p37
    %p40 = scmp.ne.s32.totalorder %s23, %s39
    %p41 = scmp.eq.s32.totalorder %s15, 0
    %p42 = por %p40, %p41
    %s44 = sadd.s32 %s43, 1
    %p47 = scmp.eq.s32.totalorder %s9, 1
    %p48 = scmp.ne.s32.totalorder %s43, %s45
    %p49 = scmp.eq.s32.totalorder %s9, 0
    %p50 = por %p48, %p49
    %p51 = scmp.ne.s32.totalorder %s43, %s45
    %p52 = scmp.eq.s32.totalorder %s14, 1
    %p53 = por %p51, %p52
    %p54 = scmp.ne.s32.totalorder %s45, %s46
    %p55 = scmp.eq.s32.totalorder %s14, 0
    %p56 = por %p54, %p55
    %p57 = scmp.ne.s32.totalorder %s45, %s46
    %p58 = scmp.eq.s32.totalorder %s15, 1
    %p59 = por %p57, %p58
    %p61 = scmp.ne.s32.totalorder %s46, %s60
    %p62 = scmp.eq.s32.totalorder %s15, 0
    %p63 = por %p61, %p62
    %s65 = sadd.s32 %s64, 1
    %p68 = scmp.eq.s32.totalorder %s9, 1
    %p69 = scmp.ne.s32.totalorder %s64, %s66
    %p70 = scmp.eq.s32.totalorder %s9, 0
    %p71 = por %p69, %p70
    %p72 = scmp.ne.s32.totalorder %s64, %s66
    %p73 = scmp.eq.s32.totalorder %s14, 1
    %p74 = por %p72, %p73
    %p75 = scmp.ne.s32.totalorder %s66, %s67
    %p76 = scmp.eq.s32.totalorder %s14, 0
    %p77 = por %p75, %p76
    %p78 = scmp.ne.s32.totalorder %s66, %s67
    %p79 = scmp.eq.s32.totalorder %s15, 1
    %p80 = por %p78, %p79
    %p82 = scmp.ne.s32.totalorder %s67, %s81
    %p83 = scmp.eq.s32.totalorder %s15, 0
    %p84 = por %p82, %p83
    %s85 = ssub.s32 %s9, %s16
    %p86 = scmp.eq.s32.totalorder %s85, 0
    %s88 = sadd.s32 %s87, 1
    %s89 = scalar_select %p86, %s87, %s88
    %p92 = pneg %p86
    %p93 = scmp.eq.s32.totalorder %s9, 1
    %p94 = por %p92, %p93
    %p95 = scmp.ne.s32.totalorder %s87, %s90
    %p96 = scmp.eq.s32.totalorder %s9, 0
    %p97 = por %p95, %p96
    %p98 = scmp.ne.s32.totalorder %s87, %s90
    %p99 = scmp.eq.s32.totalorder %s14, 1
    %p100 = por %p98, %p99
    %p101 = scmp.ne.s32.totalorder %s90, %s91
    %p102 = scmp.eq.s32.totalorder %s14, 0
    %p103 = por %p101, %p102
    %p104 = scmp.ne.s32.totalorder %s90, %s91
    %p105 = scmp.eq.s32.totalorder %s15, 1
    %p106 = por %p104, %p105
    %p108 = scmp.ne.s32.totalorder %s91, %s107
    %p109 = scmp.eq.s32.totalorder %s15, 0
    %p110 = por %p108, %p109
    %p111 = scmp.le.s32.totalorder 1, %s9
    %p112 = scmp.lt.s32.totalorder %s9, 3
    %p113 = pnand %p111, %p112
    %p114 = pneg %p113
    // Predicated region
    $region9: #{downsample_block_forward.1} parent=5 // pred_check
      _
    $region10: #{downsample_block_forward.1} parent=5 // pred_check_branch
      %116 = sbr.rel (%p113) target = $region12
    $region11: #{downsample_block_forward.1} parent=5 // pred_region
      %s117 = ssub.s32 %s9, 1
      // Predicated region
      $region13: #{downsample_block_forward.1} parent=11 // pred_check
        %p118 = pneg %p56
      $region14: #{downsample_block_forward.1} parent=11 // pred_check_branch
        %120 = sbr.rel (%p118) target = $region16
      $region15: #{downsample_block_forward.1} parent=11 // pred_region
        _
      $region16: #{downsample_block_forward.1} parent=11 // pred_fallthru
        _
      // Predicated region
      $region17: #{downsample_block_forward.1} parent=11 // pred_check
        %p121 = pneg %p77
      $region18: #{downsample_block_forward.1} parent=11 // pred_check_branch
        %123 = sbr.rel (%p121) target = $region20
      $region19: #{downsample_block_forward.1} parent=11 // pred_region
        _
      $region20: #{downsample_block_forward.1} parent=11 // pred_fallthru
        _
    $region12: #{downsample_block_forward.1} parent=5 // pred_fallthru
      _
    %p124 = scmp.lt.s32.totalorder %s9, 2
    // Predicated region
    $region21: #{downsample_block_forward.1} parent=5 // pred_check
      %p125 = pneg %p124
    $region22: #{downsample_block_forward.1} parent=5 // pred_check_branch
      %127 = sbr.rel (%p125) target = $region24
    $region23: #{downsample_block_forward.1} parent=5 // pred_region
      // Predicated region
      $region25: #{downsample_block_forward.1} parent=23 // pred_check
        %p128 = pneg %p29
      $region26: #{downsample_block_forward.1} parent=23 // pred_check_branch
        %130 = sbr.rel (%p128) target = $region28
      $region27: #{downsample_block_forward.1} parent=23 // pred_region
        %p131 = scmp.lt.s32.totalorder %s9, 1
        %s132 = scalar_select %p131, %s9, 1
        %s133 = smul.addr %s132, 54
        %s134 = smul.addr %s133, 8
        %s135 = scalar_lea.vmem %s0, %s134
      $region28: #{downsample_block_forward.1} parent=23 // pred_fallthru
        _
    $region24: #{downsample_block_forward.1} parent=5 // pred_fallthru
      _
    %p136 = scmp.le.s32.totalorder 1, %s9
    %p137 = scmp.lt.s32.totalorder %s9, 3
    %p138 = pnand %p136, %p137
    %p139 = pneg %p138
    // Predicated region
    $region29: #{downsample_block_forward.1} parent=5 // pred_check
      _
    $region30: #{downsample_block_forward.1} parent=5 // pred_check_branch
      %141 = sbr.rel (%p138) target = $region32
    $region31: #{downsample_block_forward.1} parent=5 // pred_region
      %s142 = ssub.s32 %s9, 1
      %p143 = scmp.lt.s32.totalorder %s14, 1
      %s144 = scalar_select %p143, %s14, 1
      %s145 = smul.addr %s144, 54
      %s146 = smul.addr %s145, 8
      %s147 = scalar_lea.vmem %s0, %s146
      %p148 = pneg %p35
      %p149 = pneg %p32
      %p150 = pneg %p56
      %p151 = pneg %p53
      %p152 = pneg %p77
      %p153 = pneg %p74
      %p154 = pneg %p103
      %p155 = pneg %p100
      %p156 = scmp.lt.s32.totalorder %s14, 1
      %s157 = scalar_select %p156, %s14, 1
      %s158 = smul.addr %s157, 32
      %s159 = smul.addr %s158, 8
      %s160 = scalar_lea.vmem %s3, %s159
      %p161 = scmp.lt.s32.totalorder %s14, 1
      %s162 = scalar_select %p161, %s14, 1
      %s163 = smul.addr %s162, 54
      %s164 = smul.addr %s163, 8
      %s165 = scalar_lea.vmem %s0, %s164
      %p166 = scmp.lt.s32.totalorder %s14, 1
      %s167 = scalar_select %p166, %s14, 1
      %s168 = smul.addr %s167, 32
      %s169 = smul.addr %s168, 8
      %s170 = scalar_lea.vmem %s3, %s169
      %v171 = vld [vmem:[%s165] sm:$0xff]
      %v172 = vld [vmem:[%s165 + $0x8] sm:$0xff]
      %v173 = vld [vmem:[%s165 + $0x10] sm:$0x3]
      %v174 = vld [vmem:[%s165 + $0x18] sm:$0xff]
      %v175 = vld [vmem:[%s165 + $0x20] sm:$0xff]
      %v176 = vld [vmem:[%s165 + $0x28] sm:$0x3]
      %v177 = vld [vmem:[%s165 + $0x30] sm:$0xff]
      %v178 = vld [vmem:[%s165 + $0x38] sm:$0xff]
      %v179 = vld [vmem:[%s165 + $0x40] sm:$0x3]
      %v180 = vld [vmem:[%s165 + $0x48] sm:$0xff]
      %v181 = vld [vmem:[%s165 + $0x50] sm:$0xff]
      %v182 = vld [vmem:[%s165 + $0x58] sm:$0x3]
      %v183 = vld [vmem:[%s165 + $0x60] sm:$0xff]
      %v184 = vld [vmem:[%s165 + $0x68] sm:$0xff]
      %v185 = vld [vmem:[%s165 + $0x70] sm:$0x3]
      %v186 = vld [vmem:[%s165 + $0x78] sm:$0xff]
      %v187 = vld [vmem:[%s165 + $0x80] sm:$0xff]
      %v188 = vld [vmem:[%s165 + $0x88] sm:$0x3]
      %v189 = vld [vmem:[%s165 + $0x90] sm:$0xff]
      %v190 = vld [vmem:[%s165 + $0x98] sm:$0xff]
      %v191 = vld [vmem:[%s165 + $0xa0] sm:$0x3]
      %v192 = vld [vmem:[%s165 + $0xa8] sm:$0xff]
      %v193 = vld [vmem:[%s165 + $0xb0] sm:$0xff]
      %v194 = vld [vmem:[%s165 + $0xb8] sm:$0x3]
      %v195 = vld [vmem:[%s165 + $0xc0] sm:$0xff]
      %v196 = vld [vmem:[%s165 + $0xc8] sm:$0xff]
      %v197 = vld [vmem:[%s165 + $0xd0] sm:$0x3]
      %v198 = vld [vmem:[%s165 + $0xd8] sm:$0xff]
      %v199 = vld [vmem:[%s165 + $0xe0] sm:$0xff]
      %v200 = vld [vmem:[%s165 + $0xe8] sm:$0x3]
      %v201 = vld [vmem:[%s165 + $0xf0] sm:$0xff]
      %v202 = vld [vmem:[%s165 + $0xf8] sm:$0xff]
      %v203 = vld [vmem:[%s165 + $0x100] sm:$0x3]
      %v204 = vld [vmem:[%s165 + $0x108] sm:$0xff]
      %v205 = vld [vmem:[%s165 + $0x110] sm:$0xff]
      %v206 = vld [vmem:[%s165 + $0x118] sm:$0x3]
      %v207 = vld [vmem:[%s165 + $0x120] sm:$0xff]
      %v208 = vld [vmem:[%s165 + $0x128] sm:$0xff]
      %v209 = vld [vmem:[%s165 + $0x130] sm:$0x3]
      %v210 = vld [vmem:[%s165 + $0x138] sm:$0xff]
      %v211 = vld [vmem:[%s165 + $0x140] sm:$0xff]
      %v212 = vld [vmem:[%s165 + $0x148] sm:$0x3]
      %v213 = vld [vmem:[%s165 + $0x150] sm:$0xff]
      %v214 = vld [vmem:[%s165 + $0x158] sm:$0xff]
      %v215 = vld [vmem:[%s165 + $0x160] sm:$0x3]
      %v216 = vld [vmem:[%s165 + $0x168] sm:$0xff]
      %v217 = vld [vmem:[%s165 + $0x170] sm:$0xff]
      %v218 = vld [vmem:[%s165 + $0x178] sm:$0x3]
      %v219 = vld [vmem:[%s165 + $0x180] sm:$0xff]
      %v220 = vld [vmem:[%s165 + $0x188] sm:$0xff]
      %v221 = vld [vmem:[%s165 + $0x190] sm:$0x3]
      %v222 = vld [vmem:[%s165 + $0x198] sm:$0xff]
      %v223 = vld [vmem:[%s165 + $0x1a0] sm:$0xff]
      %v224 = vld [vmem:[%s165 + $0x1a8] sm:$0x3]
      %v225 = vld [vmem:[%s1] sm:$0xff]
      %v226 = vld [vmem:[%s1 + $0x8] sm:$0xff]
      %v227 = vld [vmem:[%s1 + $0x10] sm:$0xff]
      %v228 = vld [vmem:[%s1 + $0x18] sm:$0xff]
      %v229 = vld [vmem:[%s1 + $0x20] sm:$0xff]
      %v230 = vld [vmem:[%s1 + $0x28] sm:$0xff]
      %v231 = vld [vmem:[%s1 + $0x30] sm:$0xff]
      %v232 = vld [vmem:[%s1 + $0x38] sm:$0xff]
      %v233 = vld [vmem:[%s1 + $0x40] sm:$0xff]
      %v234 = vld [vmem:[%s1 + $0x48] sm:$0xff]
      %v235 = vld [vmem:[%s1 + $0x50] sm:$0xff]
      %v236 = vld [vmem:[%s1 + $0x58] sm:$0xff]
      %v237 = vld [vmem:[%s1 + $0x60] sm:$0xff]
      %v238 = vld [vmem:[%s1 + $0x68] sm:$0xff]
      %v239 = vld [vmem:[%s1 + $0x70] sm:$0xff]
      %v240 = vld [vmem:[%s1 + $0x78] sm:$0xff]
      %vm289 = vcmask 1046528
      %v290 = vrot.slane %v171, 1
      %v291 = vrot.slane %v172, 1
      %v292 = vsel %vm289, %v290, %v291
      %v293 = vrot.slane %v173, 1
      %v294 = vsel %vm289, %v291, %v293
      %v295 = vrot.slane %v174, 1
      %v296 = vrot.slane %v175, 1
      %v297 = vsel %vm289, %v295, %v296
      %v298 = vrot.slane %v176, 1
      %v299 = vsel %vm289, %v296, %v298
      %v300 = vrot.slane %v177, 1
      %v301 = vrot.slane %v178, 1
      %v302 = vsel %vm289, %v300, %v301
      %v303 = vrot.slane %v179, 1
      %v304 = vsel %vm289, %v301, %v303
      %v305 = vrot.slane %v180, 1
      %v306 = vrot.slane %v181, 1
      %v307 = vsel %vm289, %v305, %v306
      %v308 = vrot.slane %v182, 1
      %v309 = vsel %vm289, %v306, %v308
      %v310 = vrot.slane %v183, 1
      %v311 = vrot.slane %v184, 1
      %v312 = vsel %vm289, %v310, %v311
      %v313 = vrot.slane %v185, 1
      %v314 = vsel %vm289, %v311, %v313
      %v315 = vrot.slane %v186, 1
      %v316 = vrot.slane %v187, 1
      %v317 = vsel %vm289, %v315, %v316
      %v318 = vrot.slane %v188, 1
      %v319 = vsel %vm289, %v316, %v318
      %v320 = vrot.slane %v189, 1
      %v321 = vrot.slane %v190, 1
      %v322 = vsel %vm289, %v320, %v321
      %v323 = vrot.slane %v191, 1
      %v324 = vsel %vm289, %v321, %v323
      %v325 = vrot.slane %v192, 1
      %v326 = vrot.slane %v193, 1
      %v327 = vsel %vm289, %v325, %v326
      %v328 = vrot.slane %v194, 1
      %v329 = vsel %vm289, %v326, %v328
      %v330 = vrot.slane %v195, 1
      %v331 = vrot.slane %v196, 1
      %v332 = vsel %vm289, %v330, %v331
      %v333 = vrot.slane %v197, 1
      %v334 = vsel %vm289, %v331, %v333
      %v335 = vrot.slane %v198, 1
      %v336 = vrot.slane %v199, 1
      %v337 = vsel %vm289, %v335, %v336
      %v338 = vrot.slane %v200, 1
      %v339 = vsel %vm289, %v336, %v338
      %v340 = vrot.slane %v201, 1
      %v341 = vrot.slane %v202, 1
      %v342 = vsel %vm289, %v340, %v341
      %v343 = vrot.slane %v203, 1
      %v344 = vsel %vm289, %v341, %v343
      %v345 = vrot.slane %v204, 1
      %v346 = vrot.slane %v205, 1
      %v347 = vsel %vm289, %v345, %v346
      %v348 = vrot.slane %v206, 1
      %v349 = vsel %vm289, %v346, %v348
      %v350 = vrot.slane %v207, 1
      %v351 = vrot.slane %v208, 1
      %v352 = vsel %vm289, %v350, %v351
      %v353 = vrot.slane %v209, 1
      %v354 = vsel %vm289, %v351, %v353
      %v355 = vrot.slane %v210, 1
      %v356 = vrot.slane %v211, 1
      %v357 = vsel %vm289, %v355, %v356
      %v358 = vrot.slane %v212, 1
      %v359 = vsel %vm289, %v356, %v358
      %v360 = vrot.slane %v213, 1
      %v361 = vrot.slane %v214, 1
      %v362 = vsel %vm289, %v360, %v361
      %v363 = vrot.slane %v215, 1
      %v364 = vsel %vm289, %v361, %v363
      %v365 = vrot.slane %v216, 1
      %v366 = vrot.slane %v217, 1
      %v367 = vsel %vm289, %v365, %v366
      %v368 = vrot.slane %v218, 1
      %v369 = vsel %vm289, %v366, %v368
      %s402 = scalar_lea.vmem %s1, 128
      %v403 = vld [vmem:[%s402] sm:$0xff]
      %v404 = vld [vmem:[%s402 + $0x8] sm:$0xff]
      %v405 = vld [vmem:[%s402 + $0x10] sm:$0xff]
      %v406 = vld [vmem:[%s402 + $0x18] sm:$0xff]
      %v407 = vld [vmem:[%s402 + $0x20] sm:$0xff]
      %v408 = vld [vmem:[%s402 + $0x28] sm:$0xff]
      %v409 = vld [vmem:[%s402 + $0x30] sm:$0xff]
      %v410 = vld [vmem:[%s402 + $0x38] sm:$0xff]
      %v411 = vld [vmem:[%s402 + $0x40] sm:$0xff]
      %v412 = vld [vmem:[%s402 + $0x48] sm:$0xff]
      %v413 = vld [vmem:[%s402 + $0x50] sm:$0xff]
      %v414 = vld [vmem:[%s402 + $0x58] sm:$0xff]
      %v415 = vld [vmem:[%s402 + $0x60] sm:$0xff]
      %v416 = vld [vmem:[%s402 + $0x68] sm:$0xff]
      %v417 = vld [vmem:[%s402 + $0x70] sm:$0xff]
      %v418 = vld [vmem:[%s402 + $0x78] sm:$0xff]
      %419 = vmatprep.subr.mxu0 0.0
      %420 = vmatpush1.msra.mxu0 %v418
      %421 = vmatprep.subr.mxu0 0.0
      %422 = vmatpush1.msra.mxu0 %v417
      %423 = vmatprep.subr.mxu0 0.0
      %424 = vmatpush1.msra.mxu0 %v416
      %425 = vmatprep.subr.mxu0 0.0
      %426 = vmatpush1.msra.mxu0 %v415
      %427 = vmatprep.subr.mxu0 0.0
      %428 = vmatpush1.msra.mxu0 %v414
      %429 = vmatprep.subr.mxu0 0.0
      %430 = vmatpush1.msra.mxu0 %v413
      %431 = vmatprep.subr.mxu0 0.0
      %432 = vmatpush1.msra.mxu0 %v412
      %433 = vmatprep.subr.mxu0 0.0
      %434 = vmatpush1.msra.mxu0 %v411
      %435 = vmatprep.subr.mxu0 0.0
      %436 = vmatpush1.msra.mxu0 %v410
      %437 = vmatprep.subr.mxu0 0.0
      %438 = vmatpush1.msra.mxu0 %v409
      %439 = vmatprep.subr.mxu0 0.0
      %440 = vmatpush1.msra.mxu0 %v408
      %441 = vmatprep.subr.mxu0 0.0
      %442 = vmatpush1.msra.mxu0 %v407
      %443 = vmatprep.subr.mxu0 0.0
      %444 = vmatpush1.msra.mxu0 %v406
      %445 = vmatprep.subr.mxu0 0.0
      %446 = vmatpush1.msra.mxu0 %v405
      %447 = vmatprep.subr.mxu0 0.0
      %448 = vmatpush1.msra.mxu0 %v404
      %449 = vmatprep.subr.mxu0 0.0
      %450 = vmatpush1.msra.mxu0 %v403
      %451 = vmatprep.subr.mxu0 0.0
      %452 = vmatpush2.msra.mxu0 0.0
      %453 = vmatprep.subr.mxu0 0.0
      %454 = vmatpush2.msra.mxu0 0.0
      %455 = vmatprep.subr.mxu0 0.0
      %456 = vmatpush2.msra.mxu0 0.0
      %457 = vmatprep.subr.mxu0 0.0
      %458 = vmatpush2.msra.mxu0 0.0
      %459 = vmatprep.subr.mxu0 0.0
      %460 = vmatpush2.msra.mxu0 0.0
      %461 = vmatprep.subr.mxu0 0.0
      %462 = vmatpush2.msra.mxu0 0.0
      %463 = vmatprep.subr.mxu0 0.0
      %464 = vmatpush2.msra.mxu0 0.0
      %465 = vmatprep.subr.mxu0 0.0
      %466 = vmatpush2.msra.mxu0 0.0
      %467 = vmatprep.subr.mxu0 0.0
      %468 = vmatpush2.msra.mxu0 0.0
      %469 = vmatprep.subr.mxu0 0.0
      %470 = vmatpush2.msra.mxu0 0.0
      %471 = vmatprep.subr.mxu0 0.0
      %472 = vmatpush2.msra.mxu0 0.0
      %473 = vmatprep.subr.mxu0 0.0
      %474 = vmatpush2.msra.mxu0 0.0
      %475 = vmatprep.subr.mxu0 0.0
      %476 = vmatpush2.msra.mxu0 0.0
      %477 = vmatprep.subr.mxu0 0.0
      %478 = vmatpush2.msra.mxu0 0.0
      %479 = vmatprep.subr.mxu0 0.0
      %480 = vmatpush2.msra.mxu0 0.0
      %481 = vmatprep.subr.mxu0 0.0
      %482 = vmatpush2.msra.mxu0 0.0
      %483 = vmatprep.mubr.f32.mxu0 0.0
      %484 = vmatmul.mubr.f32.gmra.mxu0 %v292
      %v485 = vpop.f32.mrf.mxu0
      %v486 = vadd.f32 0.0, %v485
      %v487 = vpop.f32.mrf.mxu0
      %488 = vmatprep.mubr.f32.mxu0 0.0
      %489 = vmatmul.mubr.f32.gmra.mxu0 %v294
      %v490 = vpop.f32.mrf.mxu0
      %v491 = vadd.f32 0.0, %v490
      %v492 = vpop.f32.mrf.mxu0
      %493 = vmatprep.mubr.f32.mxu0 0.0
      %494 = vmatmul.mubr.f32.gmra.mxu0 %v297
      %v495 = vpop.f32.mrf.mxu0
      %v496 = vadd.f32 0.0, %v495
      %v497 = vpop.f32.mrf.mxu0
      %498 = vmatprep.mubr.f32.mxu0 0.0
      %499 = vmatmul.mubr.f32.gmra.mxu0 %v299
      %v500 = vpop.f32.mrf.mxu0
      %v501 = vadd.f32 0.0, %v500
      %v502 = vpop.f32.mrf.mxu0
      %503 = vmatprep.mubr.f32.mxu0 0.0
      %504 = vmatmul.mubr.f32.gmra.mxu0 %v302
      %v505 = vpop.f32.mrf.mxu0
      %v506 = vadd.f32 0.0, %v505
      %v507 = vpop.f32.mrf.mxu0
      %508 = vmatprep.mubr.f32.mxu0 0.0
      %509 = vmatmul.mubr.f32.gmra.mxu0 %v304
      %v510 = vpop.f32.mrf.mxu0
      %v511 = vadd.f32 0.0, %v510
      %v512 = vpop.f32.mrf.mxu0
      %513 = vmatprep.mubr.f32.mxu0 0.0
      %514 = vmatmul.mubr.f32.gmra.mxu0 %v307
      %v515 = vpop.f32.mrf.mxu0
      %v516 = vadd.f32 0.0, %v515
      %v517 = vpop.f32.mrf.mxu0
      %518 = vmatprep.mubr.f32.mxu0 0.0
      %519 = vmatmul.mubr.f32.gmra.mxu0 %v309
      %v520 = vpop.f32.mrf.mxu0
      %v521 = vadd.f32 0.0, %v520
      %v522 = vpop.f32.mrf.mxu0
      %523 = vmatprep.mubr.f32.mxu0 0.0
      %524 = vmatmul.mubr.f32.gmra.mxu0 %v312
      %v525 = vpop.f32.mrf.mxu0
      %v526 = vadd.f32 0.0, %v525
      %v527 = vpop.f32.mrf.mxu0
      %528 = vmatprep.mubr.f32.mxu0 0.0
      %529 = vmatmul.mubr.f32.gmra.mxu0 %v314
      %v530 = vpop.f32.mrf.mxu0
      %v531 = vadd.f32 0.0, %v530
      %v532 = vpop.f32.mrf.mxu0
      %533 = vmatprep.mubr.f32.mxu0 0.0
      %534 = vmatmul.mubr.f32.gmra.mxu0 %v317
      %v535 = vpop.f32.mrf.mxu0
      %v536 = vadd.f32 0.0, %v535
      %v537 = vpop.f32.mrf.mxu0
      %538 = vmatprep.mubr.f32.mxu0 0.0
      %539 = vmatmul.mubr.f32.gmra.mxu0 %v319
      %v540 = vpop.f32.mrf.mxu0
      %v541 = vadd.f32 0.0, %v540
      %v542 = vpop.f32.mrf.mxu0
      %543 = vmatprep.mubr.f32.mxu0 0.0
      %544 = vmatmul.mubr.f32.gmra.mxu0 %v322
      %v545 = vpop.f32.mrf.mxu0
      %v546 = vadd.f32 0.0, %v545
      %v547 = vpop.f32.mrf.mxu0
      %548 = vmatprep.mubr.f32.mxu0 0.0
      %549 = vmatmul.mubr.f32.gmra.mxu0 %v324
      %v550 = vpop.f32.mrf.mxu0
      %v551 = vadd.f32 0.0, %v550
      %v552 = vpop.f32.mrf.mxu0
      %553 = vmatprep.mubr.f32.mxu0 0.0
      %554 = vmatmul.mubr.f32.gmra.mxu0 %v327
      %v555 = vpop.f32.mrf.mxu0
      %v556 = vadd.f32 0.0, %v555
      %v557 = vpop.f32.mrf.mxu0
      %558 = vmatprep.mubr.f32.mxu0 0.0
      %559 = vmatmul.mubr.f32.gmra.mxu0 %v329
      %v560 = vpop.f32.mrf.mxu0
      %v561 = vadd.f32 0.0, %v560
      %v562 = vpop.f32.mrf.mxu0
      %563 = vmatprep.mubr.f32.mxu0 0.0
      %564 = vmatmul.mubr.f32.gmra.mxu0 %v332
      %v565 = vpop.f32.mrf.mxu0
      %v566 = vadd.f32 0.0, %v565
      %v567 = vpop.f32.mrf.mxu0
      %568 = vmatprep.mubr.f32.mxu0 0.0
      %569 = vmatmul.mubr.f32.gmra.mxu0 %v334
      %v570 = vpop.f32.mrf.mxu0
      %v571 = vadd.f32 0.0, %v570
      %v572 = vpop.f32.mrf.mxu0
      %573 = vmatprep.mubr.f32.mxu0 0.0
      %574 = vmatmul.mubr.f32.gmra.mxu0 %v337
      %v575 = vpop.f32.mrf.mxu0
      %v576 = vadd.f32 0.0, %v575
      %v577 = vpop.f32.mrf.mxu0
      %578 = vmatprep.mubr.f32.mxu0 0.0
      %579 = vmatmul.mubr.f32.gmra.mxu0 %v339
      %v580 = vpop.f32.mrf.mxu0
      %v581 = vadd.f32 0.0, %v580
      %v582 = vpop.f32.mrf.mxu0
      %583 = vmatprep.mubr.f32.mxu0 0.0
      %584 = vmatmul.mubr.f32.gmra.mxu0 %v342
      %v585 = vpop.f32.mrf.mxu0
      %v586 = vadd.f32 0.0, %v585
      %v587 = vpop.f32.mrf.mxu0
      %588 = vmatprep.mubr.f32.mxu0 0.0
      %589 = vmatmul.mubr.f32.gmra.mxu0 %v344
      %v590 = vpop.f32.mrf.mxu0
      %v591 = vadd.f32 0.0, %v590
      %v592 = vpop.f32.mrf.mxu0
      %593 = vmatprep.mubr.f32.mxu0 0.0
      %594 = vmatmul.mubr.f32.gmra.mxu0 %v347
      %v595 = vpop.f32.mrf.mxu0
      %v596 = vadd.f32 0.0, %v595
      %v597 = vpop.f32.mrf.mxu0
      %598 = vmatprep.mubr.f32.mxu0 0.0
      %599 = vmatmul.mubr.f32.gmra.mxu0 %v349
      %v600 = vpop.f32.mrf.mxu0
      %v601 = vadd.f32 0.0, %v600
      %v602 = vpop.f32.mrf.mxu0
      %603 = vmatprep.mubr.f32.mxu0 0.0
      %604 = vmatmul.mubr.f32.gmra.mxu0 %v352
      %v605 = vpop.f32.mrf.mxu0
      %v606 = vadd.f32 0.0, %v605
      %v607 = vpop.f32.mrf.mxu0
      %608 = vmatprep.mubr.f32.mxu0 0.0
      %609 = vmatmul.mubr.f32.gmra.mxu0 %v354
      %v610 = vpop.f32.mrf.mxu0
      %v611 = vadd.f32 0.0, %v610
      %v612 = vpop.f32.mrf.mxu0
      %613 = vmatprep.mubr.f32.mxu0 0.0
      %614 = vmatmul.mubr.f32.gmra.mxu0 %v357
      %v615 = vpop.f32.mrf.mxu0
      %v616 = vadd.f32 0.0, %v615
      %v617 = vpop.f32.mrf.mxu0
      %618 = vmatprep.mubr.f32.mxu0 0.0
      %619 = vmatmul.mubr.f32.gmra.mxu0 %v359
      %v620 = vpop.f32.mrf.mxu0
      %v621 = vadd.f32 0.0, %v620
      %v622 = vpop.f32.mrf.mxu0
      %623 = vmatprep.mubr.f32.mxu0 0.0
      %624 = vmatmul.mubr.f32.gmra.mxu0 %v362
      %v625 = vpop.f32.mrf.mxu0
      %v626 = vadd.f32 0.0, %v625
      %v627 = vpop.f32.mrf.mxu0
      %628 = vmatprep.mubr.f32.mxu0 0.0
      %629 = vmatmul.mubr.f32.gmra.mxu0 %v364
      %v630 = vpop.f32.mrf.mxu0
      %v631 = vadd.f32 0.0, %v630
      %v632 = vpop.f32.mrf.mxu0
      %633 = vmatprep.mubr.f32.mxu0 0.0
      %634 = vmatmul.mubr.f32.gmra.mxu0 %v367
      %v635 = vpop.f32.mrf.mxu0
      %v636 = vadd.f32 0.0, %v635
      %v637 = vpop.f32.mrf.mxu0
      %638 = vmatprep.mubr.f32.mxu0 0.0
      %639 = vmatmul.mubr.f32.gmra.mxu0 %v369
      %v640 = vpop.f32.mrf.mxu0
      %v641 = vadd.f32 0.0, %v640
      %v642 = vpop.f32.mrf.mxu0
      %643 = vdwg.mxu0
      %644 = vmatprep.subr.mxu0 0.0
      %645 = vmatpush1.msra.mxu0 %v240
      %646 = vmatprep.subr.mxu0 0.0
      %647 = vmatpush1.msra.mxu0 %v239
      %648 = vmatprep.subr.mxu0 0.0
      %649 = vmatpush1.msra.mxu0 %v238
      %650 = vmatprep.subr.mxu0 0.0
      %651 = vmatpush1.msra.mxu0 %v237
      %652 = vmatprep.subr.mxu0 0.0
      %653 = vmatpush1.msra.mxu0 %v236
      %654 = vmatprep.subr.mxu0 0.0
      %655 = vmatpush1.msra.mxu0 %v235
      %656 = vmatprep.subr.mxu0 0.0
      %657 = vmatpush1.msra.mxu0 %v234
      %658 = vmatprep.subr.mxu0 0.0
      %659 = vmatpush1.msra.mxu0 %v233
      %660 = vmatprep.subr.mxu0 0.0
      %661 = vmatpush1.msra.mxu0 %v232
      %662 = vmatprep.subr.mxu0 0.0
      %663 = vmatpush1.msra.mxu0 %v231
      %664 = vmatprep.subr.mxu0 0.0
      %665 = vmatpush1.msra.mxu0 %v230
      %666 = vmatprep.subr.mxu0 0.0
      %667 = vmatpush1.msra.mxu0 %v229
      %668 = vmatprep.subr.mxu0 0.0
      %669 = vmatpush1.msra.mxu0 %v228
      %670 = vmatprep.subr.mxu0 0.0
      %671 = vmatpush1.msra.mxu0 %v227
      %672 = vmatprep.subr.mxu0 0.0
      %673 = vmatpush1.msra.mxu0 %v226
      %674 = vmatprep.subr.mxu0 0.0
      %675 = vmatpush1.msra.mxu0 %v225
      %676 = vmatprep.subr.mxu0 0.0
      %677 = vmatpush2.msra.mxu0 0.0
      %678 = vmatprep.subr.mxu0 0.0
      %679 = vmatpush2.msra.mxu0 0.0
      %680 = vmatprep.subr.mxu0 0.0
      %681 = vmatpush2.msra.mxu0 0.0
      %682 = vmatprep.subr.mxu0 0.0
      %683 = vmatpush2.msra.mxu0 0.0
      %684 = vmatprep.subr.mxu0 0.0
      %685 = vmatpush2.msra.mxu0 0.0
      %686 = vmatprep.subr.mxu0 0.0
      %687 = vmatpush2.msra.mxu0 0.0
      %688 = vmatprep.subr.mxu0 0.0
      %689 = vmatpush2.msra.mxu0 0.0
      %690 = vmatprep.subr.mxu0 0.0
      %691 = vmatpush2.msra.mxu0 0.0
      %692 = vmatprep.subr.mxu0 0.0
      %693 = vmatpush2.msra.mxu0 0.0
      %694 = vmatprep.subr.mxu0 0.0
      %695 = vmatpush2.msra.mxu0 0.0
      %696 = vmatprep.subr.mxu0 0.0
      %697 = vmatpush2.msra.mxu0 0.0
      %698 = vmatprep.subr.mxu0 0.0
      %699 = vmatpush2.msra.mxu0 0.0
      %700 = vmatprep.subr.mxu0 0.0
      %701 = vmatpush2.msra.mxu0 0.0
      %702 = vmatprep.subr.mxu0 0.0
      %703 = vmatpush2.msra.mxu0 0.0
      %704 = vmatprep.subr.mxu0 0.0
      %705 = vmatpush2.msra.mxu0 0.0
      %706 = vmatprep.subr.mxu0 0.0
      %707 = vmatpush2.msra.mxu0 0.0
      %708 = vmatprep.mubr.f32.mxu0 0.0
      %709 = vmatmul.mubr.f32.gmra.mxu0 %v171
      %v710 = vpop.f32.mrf.mxu0
      %v711 = vadd.f32 %v486, %v710
      %v712 = vpop.f32.mrf.mxu0
      %713 = vmatprep.mubr.f32.mxu0 0.0
      %714 = vmatmul.mubr.f32.gmra.mxu0 %v172
      %v715 = vpop.f32.mrf.mxu0
      %v716 = vadd.f32 %v491, %v715
      %v717 = vpop.f32.mrf.mxu0
      %718 = vmatprep.mubr.f32.mxu0 0.0
      %719 = vmatmul.mubr.f32.gmra.mxu0 %v174
      %v720 = vpop.f32.mrf.mxu0
      %v721 = vadd.f32 %v496, %v720
      %v722 = vpop.f32.mrf.mxu0
      %723 = vmatprep.mubr.f32.mxu0 0.0
      %724 = vmatmul.mubr.f32.gmra.mxu0 %v175
      %v725 = vpop.f32.mrf.mxu0
      %v726 = vadd.f32 %v501, %v725
      %v727 = vpop.f32.mrf.mxu0
      %728 = vmatprep.mubr.f32.mxu0 0.0
      %729 = vmatmul.mubr.f32.gmra.mxu0 %v177
      %v730 = vpop.f32.mrf.mxu0
      %v731 = vadd.f32 %v506, %v730
      %v732 = vpop.f32.mrf.mxu0
      %733 = vmatprep.mubr.f32.mxu0 0.0
      %734 = vmatmul.mubr.f32.gmra.mxu0 %v178
      %v735 = vpop.f32.mrf.mxu0
      %v736 = vadd.f32 %v511, %v735
      %v737 = vpop.f32.mrf.mxu0
      %738 = vmatprep.mubr.f32.mxu0 0.0
      %739 = vmatmul.mubr.f32.gmra.mxu0 %v180
      %v740 = vpop.f32.mrf.mxu0
      %v741 = vadd.f32 %v516, %v740
      %v742 = vpop.f32.mrf.mxu0
      %743 = vmatprep.mubr.f32.mxu0 0.0
      %744 = vmatmul.mubr.f32.gmra.mxu0 %v181
      %v745 = vpop.f32.mrf.mxu0
      %v746 = vadd.f32 %v521, %v745
      %v747 = vpop.f32.mrf.mxu0
      %748 = vmatprep.mubr.f32.mxu0 0.0
      %749 = vmatmul.mubr.f32.gmra.mxu0 %v183
      %v750 = vpop.f32.mrf.mxu0
      %v751 = vadd.f32 %v526, %v750
      %v752 = vpop.f32.mrf.mxu0
      %753 = vmatprep.mubr.f32.mxu0 0.0
      %754 = vmatmul.mubr.f32.gmra.mxu0 %v184
      %v755 = vpop.f32.mrf.mxu0
      %v756 = vadd.f32 %v531, %v755
      %v757 = vpop.f32.mrf.mxu0
      %758 = vmatprep.mubr.f32.mxu0 0.0
      %759 = vmatmul.mubr.f32.gmra.mxu0 %v186
      %v760 = vpop.f32.mrf.mxu0
      %v761 = vadd.f32 %v536, %v760
      %v762 = vpop.f32.mrf.mxu0
      %763 = vmatprep.mubr.f32.mxu0 0.0
      %764 = vmatmul.mubr.f32.gmra.mxu0 %v187
      %v765 = vpop.f32.mrf.mxu0
      %v766 = vadd.f32 %v541, %v765
      %v767 = vpop.f32.mrf.mxu0
      %768 = vmatprep.mubr.f32.mxu0 0.0
      %769 = vmatmul.mubr.f32.gmra.mxu0 %v189
      %v770 = vpop.f32.mrf.mxu0
      %v771 = vadd.f32 %v546, %v770
      %v772 = vpop.f32.mrf.mxu0
      %773 = vmatprep.mubr.f32.mxu0 0.0
      %774 = vmatmul.mubr.f32.gmra.mxu0 %v190
      %v775 = vpop.f32.mrf.mxu0
      %v776 = vadd.f32 %v551, %v775
      %v777 = vpop.f32.mrf.mxu0
      %778 = vmatprep.mubr.f32.mxu0 0.0
      %779 = vmatmul.mubr.f32.gmra.mxu0 %v192
      %v780 = vpop.f32.mrf.mxu0
      %v781 = vadd.f32 %v556, %v780
      %v782 = vpop.f32.mrf.mxu0
      %783 = vmatprep.mubr.f32.mxu0 0.0
      %784 = vmatmul.mubr.f32.gmra.mxu0 %v193
      %v785 = vpop.f32.mrf.mxu0
      %v786 = vadd.f32 %v561, %v785
      %v787 = vpop.f32.mrf.mxu0
      %788 = vmatprep.mubr.f32.mxu0 0.0
      %789 = vmatmul.mubr.f32.gmra.mxu0 %v195
      %v790 = vpop.f32.mrf.mxu0
      %v791 = vadd.f32 %v566, %v790
      %v792 = vpop.f32.mrf.mxu0
      %793 = vmatprep.mubr.f32.mxu0 0.0
      %794 = vmatmul.mubr.f32.gmra.mxu0 %v196
      %v795 = vpop.f32.mrf.mxu0
      %v796 = vadd.f32 %v571, %v795
      %v797 = vpop.f32.mrf.mxu0
      %798 = vmatprep.mubr.f32.mxu0 0.0
      %799 = vmatmul.mubr.f32.gmra.mxu0 %v198
      %v800 = vpop.f32.mrf.mxu0
      %v801 = vadd.f32 %v576, %v800
      %v802 = vpop.f32.mrf.mxu0
      %803 = vmatprep.mubr.f32.mxu0 0.0
      %804 = vmatmul.mubr.f32.gmra.mxu0 %v199
      %v805 = vpop.f32.mrf.mxu0
      %v806 = vadd.f32 %v581, %v805
      %v807 = vpop.f32.mrf.mxu0
      %808 = vmatprep.mubr.f32.mxu0 0.0
      %809 = vmatmul.mubr.f32.gmra.mxu0 %v201
      %v810 = vpop.f32.mrf.mxu0
      %v811 = vadd.f32 %v586, %v810
      %v812 = vpop.f32.mrf.mxu0
      %813 = vmatprep.mubr.f32.mxu0 0.0
      %814 = vmatmul.mubr.f32.gmra.mxu0 %v202
      %v815 = vpop.f32.mrf.mxu0
      %v816 = vadd.f32 %v591, %v815
      %v817 = vpop.f32.mrf.mxu0
      %818 = vmatprep.mubr.f32.mxu0 0.0
      %819 = vmatmul.mubr.f32.gmra.mxu0 %v204
      %v820 = vpop.f32.mrf.mxu0
      %v821 = vadd.f32 %v596, %v820
      %v822 = vpop.f32.mrf.mxu0
      %823 = vmatprep.mubr.f32.mxu0 0.0
      %824 = vmatmul.mubr.f32.gmra.mxu0 %v205
      %v825 = vpop.f32.mrf.mxu0
      %v826 = vadd.f32 %v601, %v825
      %v827 = vpop.f32.mrf.mxu0
      %828 = vmatprep.mubr.f32.mxu0 0.0
      %829 = vmatmul.mubr.f32.gmra.mxu0 %v207
      %v830 = vpop.f32.mrf.mxu0
      %v831 = vadd.f32 %v606, %v830
      %v832 = vpop.f32.mrf.mxu0
      %833 = vmatprep.mubr.f32.mxu0 0.0
      %834 = vmatmul.mubr.f32.gmra.mxu0 %v208
      %v835 = vpop.f32.mrf.mxu0
      %v836 = vadd.f32 %v611, %v835
      %v837 = vpop.f32.mrf.mxu0
      %838 = vmatprep.mubr.f32.mxu0 0.0
      %839 = vmatmul.mubr.f32.gmra.mxu0 %v210
      %v840 = vpop.f32.mrf.mxu0
      %v841 = vadd.f32 %v616, %v840
      %v842 = vpop.f32.mrf.mxu0
      %843 = vmatprep.mubr.f32.mxu0 0.0
      %844 = vmatmul.mubr.f32.gmra.mxu0 %v211
      %v845 = vpop.f32.mrf.mxu0
      %v846 = vadd.f32 %v621, %v845
      %v847 = vpop.f32.mrf.mxu0
      %848 = vmatprep.mubr.f32.mxu0 0.0
      %849 = vmatmul.mubr.f32.gmra.mxu0 %v213
      %v850 = vpop.f32.mrf.mxu0
      %v851 = vadd.f32 %v626, %v850
      %v852 = vpop.f32.mrf.mxu0
      %853 = vmatprep.mubr.f32.mxu0 0.0
      %854 = vmatmul.mubr.f32.gmra.mxu0 %v214
      %v855 = vpop.f32.mrf.mxu0
      %v856 = vadd.f32 %v631, %v855
      %v857 = vpop.f32.mrf.mxu0
      %858 = vmatprep.mubr.f32.mxu0 0.0
      %859 = vmatmul.mubr.f32.gmra.mxu0 %v216
      %v860 = vpop.f32.mrf.mxu0
      %v861 = vadd.f32 %v636, %v860
      %v862 = vpop.f32.mrf.mxu0
      %863 = vmatprep.mubr.f32.mxu0 0.0
      %864 = vmatmul.mubr.f32.gmra.mxu0 %v217
      %v865 = vpop.f32.mrf.mxu0
      %v866 = vadd.f32 %v641, %v865
      %v867 = vpop.f32.mrf.mxu0
      %868 = vdwg.mxu0
      %vm869 = vcmask 1045504
      %v870 = vrot.slane %v171, 2
      %v871 = vrot.slane %v172, 2
      %v872 = vsel %vm869, %v870, %v871
      %v873 = vrot.slane %v173, 2
      %v874 = vsel %vm869, %v871, %v873
      %v875 = vrot.slane %v174, 2
      %v876 = vrot.slane %v175, 2
      %v877 = vsel %vm869, %v875, %v876
      %v878 = vrot.slane %v176, 2
      %v879 = vsel %vm869, %v876, %v878
      %v880 = vrot.slane %v177, 2
      %v881 = vrot.slane %v178, 2
      %v882 = vsel %vm869, %v880, %v881
      %v883 = vrot.slane %v179, 2
      %v884 = vsel %vm869, %v881, %v883
      %v885 = vrot.slane %v180, 2
      %v886 = vrot.slane %v181, 2
      %v887 = vsel %vm869, %v885, %v886
      %v888 = vrot.slane %v182, 2
      %v889 = vsel %vm869, %v886, %v888
      %v890 = vrot.slane %v183, 2
      %v891 = vrot.slane %v184, 2
      %v892 = vsel %vm869, %v890, %v891
      %v893 = vrot.slane %v185, 2
      %v894 = vsel %vm869, %v891, %v893
      %v895 = vrot.slane %v186, 2
      %v896 = vrot.slane %v187, 2
      %v897 = vsel %vm869, %v895, %v896
      %v898 = vrot.slane %v188, 2
      %v899 = vsel %vm869, %v896, %v898
      %v900 = vrot.slane %v189, 2
      %v901 = vrot.slane %v190, 2
      %v902 = vsel %vm869, %v900, %v901
      %v903 = vrot.slane %v191, 2
      %v904 = vsel %vm869, %v901, %v903
      %v905 = vrot.slane %v192, 2
      %v906 = vrot.slane %v193, 2
      %v907 = vsel %vm869, %v905, %v906
      %v908 = vrot.slane %v194, 2
      %v909 = vsel %vm869, %v906, %v908
      %v910 = vrot.slane %v195, 2
      %v911 = vrot.slane %v196, 2
      %v912 = vsel %vm869, %v910, %v911
      %v913 = vrot.slane %v197, 2
      %v914 = vsel %vm869, %v911, %v913
      %v915 = vrot.slane %v198, 2
      %v916 = vrot.slane %v199, 2
      %v917 = vsel %vm869, %v915, %v916
      %v918 = vrot.slane %v200, 2
      %v919 = vsel %vm869, %v916, %v918
      %v920 = vrot.slane %v201, 2
      %v921 = vrot.slane %v202, 2
      %v922 = vsel %vm869, %v920, %v921
      %v923 = vrot.slane %v203, 2
      %v924 = vsel %vm869, %v921, %v923
      %v925 = vrot.slane %v204, 2
      %v926 = vrot.slane %v205, 2
      %v927 = vsel %vm869, %v925, %v926
      %v928 = vrot.slane %v206, 2
      %v929 = vsel %vm869, %v926, %v928
      %v930 = vrot.slane %v207, 2
      %v931 = vrot.slane %v208, 2
      %v932 = vsel %vm869, %v930, %v931
      %v933 = vrot.slane %v209, 2
      %v934 = vsel %vm869, %v931, %v933
      %v935 = vrot.slane %v210, 2
      %v936 = vrot.slane %v211, 2
      %v937 = vsel %vm869, %v935, %v936
      %v938 = vrot.slane %v212, 2
      %v939 = vsel %vm869, %v936, %v938
      %v940 = vrot.slane %v213, 2
      %v941 = vrot.slane %v214, 2
      %v942 = vsel %vm869, %v940, %v941
      %v943 = vrot.slane %v215, 2
      %v944 = vsel %vm869, %v941, %v943
      %v945 = vrot.slane %v216, 2
      %v946 = vrot.slane %v217, 2
      %v947 = vsel %vm869, %v945, %v946
      %v948 = vrot.slane %v218, 2
      %v949 = vsel %vm869, %v946, %v948
      %s982 = scalar_lea.vmem %s1, 256
      %v983 = vld [vmem:[%s982] sm:$0xff]
      %v984 = vld [vmem:[%s982 + $0x8] sm:$0xff]
      %v985 = vld [vmem:[%s982 + $0x10] sm:$0xff]
      %v986 = vld [vmem:[%s982 + $0x18] sm:$0xff]
      %v987 = vld [vmem:[%s982 + $0x20] sm:$0xff]
      %v988 = vld [vmem:[%s982 + $0x28] sm:$0xff]
      %v989 = vld [vmem:[%s982 + $0x30] sm:$0xff]
      %v990 = vld [vmem:[%s982 + $0x38] sm:$0xff]
      %v991 = vld [vmem:[%s982 + $0x40] sm:$0xff]
      %v992 = vld [vmem:[%s982 + $0x48] sm:$0xff]
      %v993 = vld [vmem:[%s982 + $0x50] sm:$0xff]
      %v994 = vld [vmem:[%s982 + $0x58] sm:$0xff]
      %v995 = vld [vmem:[%s982 + $0x60] sm:$0xff]
      %v996 = vld [vmem:[%s982 + $0x68] sm:$0xff]
      %v997 = vld [vmem:[%s982 + $0x70] sm:$0xff]
      %v998 = vld [vmem:[%s982 + $0x78] sm:$0xff]
      %999 = vmatprep.subr.mxu0 0.0
      %1000 = vmatpush1.msra.mxu0 %v998
      %1001 = vmatprep.subr.mxu0 0.0
      %1002 = vmatpush1.msra.mxu0 %v997
      %1003 = vmatprep.subr.mxu0 0.0
      %1004 = vmatpush1.msra.mxu0 %v996
      %1005 = vmatprep.subr.mxu0 0.0
      %1006 = vmatpush1.msra.mxu0 %v995
      %1007 = vmatprep.subr.mxu0 0.0
      %1008 = vmatpush1.msra.mxu0 %v994
      %1009 = vmatprep.subr.mxu0 0.0
      %1010 = vmatpush1.msra.mxu0 %v993
      %1011 = vmatprep.subr.mxu0 0.0
      %1012 = vmatpush1.msra.mxu0 %v992
      %1013 = vmatprep.subr.mxu0 0.0
      %1014 = vmatpush1.msra.mxu0 %v991
      %1015 = vmatprep.subr.mxu0 0.0
      %1016 = vmatpush1.msra.mxu0 %v990
      %1017 = vmatprep.subr.mxu0 0.0
      %1018 = vmatpush1.msra.mxu0 %v989
      %1019 = vmatprep.subr.mxu0 0.0
      %1020 = vmatpush1.msra.mxu0 %v988
      %1021 = vmatprep.subr.mxu0 0.0
      %1022 = vmatpush1.msra.mxu0 %v987
      %1023 = vmatprep.subr.mxu0 0.0
      %1024 = vmatpush1.msra.mxu0 %v986
      %1025 = vmatprep.subr.mxu0 0.0
      %1026 = vmatpush1.msra.mxu0 %v985
      %1027 = vmatprep.subr.mxu0 0.0
      %1028 = vmatpush1.msra.mxu0 %v984
      %1029 = vmatprep.subr.mxu0 0.0
      %1030 = vmatpush1.msra.mxu0 %v983
      %1031 = vmatprep.subr.mxu0 0.0
      %1032 = vmatpush2.msra.mxu0 0.0
      %1033 = vmatprep.subr.mxu0 0.0
      %1034 = vmatpush2.msra.mxu0 0.0
      %1035 = vmatprep.subr.mxu0 0.0
      %1036 = vmatpush2.msra.mxu0 0.0
      %1037 = vmatprep.subr.mxu0 0.0
      %1038 = vmatpush2.msra.mxu0 0.0
      %1039 = vmatprep.subr.mxu0 0.0
      %1040 = vmatpush2.msra.mxu0 0.0
      %1041 = vmatprep.subr.mxu0 0.0
      %1042 = vmatpush2.msra.mxu0 0.0
      %1043 = vmatprep.subr.mxu0 0.0
      %1044 = vmatpush2.msra.mxu0 0.0
      %1045 = vmatprep.subr.mxu0 0.0
      %1046 = vmatpush2.msra.mxu0 0.0
      %1047 = vmatprep.subr.mxu0 0.0
      %1048 = vmatpush2.msra.mxu0 0.0
      %1049 = vmatprep.subr.mxu0 0.0
      %1050 = vmatpush2.msra.mxu0 0.0
      %1051 = vmatprep.subr.mxu0 0.0
      %1052 = vmatpush2.msra.mxu0 0.0
      %1053 = vmatprep.subr.mxu0 0.0
      %1054 = vmatpush2.msra.mxu0 0.0
      %1055 = vmatprep.subr.mxu0 0.0
      %1056 = vmatpush2.msra.mxu0 0.0
      %1057 = vmatprep.subr.mxu0 0.0
      %1058 = vmatpush2.msra.mxu0 0.0
      %1059 = vmatprep.subr.mxu0 0.0
      %1060 = vmatpush2.msra.mxu0 0.0
      %1061 = vmatprep.subr.mxu0 0.0
      %1062 = vmatpush2.msra.mxu0 0.0
      %1063 = vmatprep.mubr.f32.mxu0 0.0
      %1064 = vmatmul.mubr.f32.gmra.mxu0 %v872
      %v1065 = vpop.f32.mrf.mxu0
      %v1066 = vadd.f32 0.0, %v1065
      %v1067 = vpop.f32.mrf.mxu0
      %1068 = vmatprep.mubr.f32.mxu0 0.0
      %1069 = vmatmul.mubr.f32.gmra.mxu0 %v874
      %v1070 = vpop.f32.mrf.mxu0
      %v1071 = vadd.f32 0.0, %v1070
      %v1072 = vpop.f32.mrf.mxu0
      %1073 = vmatprep.mubr.f32.mxu0 0.0
      %1074 = vmatmul.mubr.f32.gmra.mxu0 %v877
      %v1075 = vpop.f32.mrf.mxu0
      %v1076 = vadd.f32 0.0, %v1075
      %v1077 = vpop.f32.mrf.mxu0
      %1078 = vmatprep.mubr.f32.mxu0 0.0
      %1079 = vmatmul.mubr.f32.gmra.mxu0 %v879
      %v1080 = vpop.f32.mrf.mxu0
      %v1081 = vadd.f32 0.0, %v1080
      %v1082 = vpop.f32.mrf.mxu0
      %1083 = vmatprep.mubr.f32.mxu0 0.0
      %1084 = vmatmul.mubr.f32.gmra.mxu0 %v882
      %v1085 = vpop.f32.mrf.mxu0
      %v1086 = vadd.f32 0.0, %v1085
      %v1087 = vpop.f32.mrf.mxu0
      %1088 = vmatprep.mubr.f32.mxu0 0.0
      %1089 = vmatmul.mubr.f32.gmra.mxu0 %v884
      %v1090 = vpop.f32.mrf.mxu0
      %v1091 = vadd.f32 0.0, %v1090
      %v1092 = vpop.f32.mrf.mxu0
      %1093 = vmatprep.mubr.f32.mxu0 0.0
      %1094 = vmatmul.mubr.f32.gmra.mxu0 %v887
      %v1095 = vpop.f32.mrf.mxu0
      %v1096 = vadd.f32 0.0, %v1095
      %v1097 = vpop.f32.mrf.mxu0
      %1098 = vmatprep.mubr.f32.mxu0 0.0
      %1099 = vmatmul.mubr.f32.gmra.mxu0 %v889
      %v1100 = vpop.f32.mrf.mxu0
      %v1101 = vadd.f32 0.0, %v1100
      %v1102 = vpop.f32.mrf.mxu0
      %1103 = vmatprep.mubr.f32.mxu0 0.0
      %1104 = vmatmul.mubr.f32.gmra.mxu0 %v892
      %v1105 = vpop.f32.mrf.mxu0
      %v1106 = vadd.f32 0.0, %v1105
      %v1107 = vpop.f32.mrf.mxu0
      %1108 = vmatprep.mubr.f32.mxu0 0.0
      %1109 = vmatmul.mubr.f32.gmra.mxu0 %v894
      %v1110 = vpop.f32.mrf.mxu0
      %v1111 = vadd.f32 0.0, %v1110
      %v1112 = vpop.f32.mrf.mxu0
      %1113 = vmatprep.mubr.f32.mxu0 0.0
      %1114 = vmatmul.mubr.f32.gmra.mxu0 %v897
      %v1115 = vpop.f32.mrf.mxu0
      %v1116 = vadd.f32 0.0, %v1115
      %v1117 = vpop.f32.mrf.mxu0
      %1118 = vmatprep.mubr.f32.mxu0 0.0
      %1119 = vmatmul.mubr.f32.gmra.mxu0 %v899
      %v1120 = vpop.f32.mrf.mxu0
      %v1121 = vadd.f32 0.0, %v1120
      %v1122 = vpop.f32.mrf.mxu0
      %1123 = vmatprep.mubr.f32.mxu0 0.0
      %1124 = vmatmul.mubr.f32.gmra.mxu0 %v902
      %v1125 = vpop.f32.mrf.mxu0
      %v1126 = vadd.f32 0.0, %v1125
      %v1127 = vpop.f32.mrf.mxu0
      %1128 = vmatprep.mubr.f32.mxu0 0.0
      %1129 = vmatmul.mubr.f32.gmra.mxu0 %v904
      %v1130 = vpop.f32.mrf.mxu0
      %v1131 = vadd.f32 0.0, %v1130
      %v1132 = vpop.f32.mrf.mxu0
      %1133 = vmatprep.mubr.f32.mxu0 0.0
      %1134 = vmatmul.mubr.f32.gmra.mxu0 %v907
      %v1135 = vpop.f32.mrf.mxu0
      %v1136 = vadd.f32 0.0, %v1135
      %v1137 = vpop.f32.mrf.mxu0
      %1138 = vmatprep.mubr.f32.mxu0 0.0
      %1139 = vmatmul.mubr.f32.gmra.mxu0 %v909
      %v1140 = vpop.f32.mrf.mxu0
      %v1141 = vadd.f32 0.0, %v1140
      %v1142 = vpop.f32.mrf.mxu0
      %1143 = vmatprep.mubr.f32.mxu0 0.0
      %1144 = vmatmul.mubr.f32.gmra.mxu0 %v912
      %v1145 = vpop.f32.mrf.mxu0
      %v1146 = vadd.f32 0.0, %v1145
      %v1147 = vpop.f32.mrf.mxu0
      %1148 = vmatprep.mubr.f32.mxu0 0.0
      %1149 = vmatmul.mubr.f32.gmra.mxu0 %v914
      %v1150 = vpop.f32.mrf.mxu0
      %v1151 = vadd.f32 0.0, %v1150
      %v1152 = vpop.f32.mrf.mxu0
      %1153 = vmatprep.mubr.f32.mxu0 0.0
      %1154 = vmatmul.mubr.f32.gmra.mxu0 %v917
      %v1155 = vpop.f32.mrf.mxu0
      %v1156 = vadd.f32 0.0, %v1155
      %v1157 = vpop.f32.mrf.mxu0
      %1158 = vmatprep.mubr.f32.mxu0 0.0
      %1159 = vmatmul.mubr.f32.gmra.mxu0 %v919
      %v1160 = vpop.f32.mrf.mxu0
      %v1161 = vadd.f32 0.0, %v1160
      %v1162 = vpop.f32.mrf.mxu0
      %1163 = vmatprep.mubr.f32.mxu0 0.0
      %1164 = vmatmul.mubr.f32.gmra.mxu0 %v922
      %v1165 = vpop.f32.mrf.mxu0
      %v1166 = vadd.f32 0.0, %v1165
      %v1167 = vpop.f32.mrf.mxu0
      %1168 = vmatprep.mubr.f32.mxu0 0.0
      %1169 = vmatmul.mubr.f32.gmra.mxu0 %v924
      %v1170 = vpop.f32.mrf.mxu0
      %v1171 = vadd.f32 0.0, %v1170
      %v1172 = vpop.f32.mrf.mxu0
      %1173 = vmatprep.mubr.f32.mxu0 0.0
      %1174 = vmatmul.mubr.f32.gmra.mxu0 %v927
      %v1175 = vpop.f32.mrf.mxu0
      %v1176 = vadd.f32 0.0, %v1175
      %v1177 = vpop.f32.mrf.mxu0
      %1178 = vmatprep.mubr.f32.mxu0 0.0
      %1179 = vmatmul.mubr.f32.gmra.mxu0 %v929
      %v1180 = vpop.f32.mrf.mxu0
      %v1181 = vadd.f32 0.0, %v1180
      %v1182 = vpop.f32.mrf.mxu0
      %1183 = vmatprep.mubr.f32.mxu0 0.0
      %1184 = vmatmul.mubr.f32.gmra.mxu0 %v932
      %v1185 = vpop.f32.mrf.mxu0
      %v1186 = vadd.f32 0.0, %v1185
      %v1187 = vpop.f32.mrf.mxu0
      %1188 = vmatprep.mubr.f32.mxu0 0.0
      %1189 = vmatmul.mubr.f32.gmra.mxu0 %v934
      %v1190 = vpop.f32.mrf.mxu0
      %v1191 = vadd.f32 0.0, %v1190
      %v1192 = vpop.f32.mrf.mxu0
      %1193 = vmatprep.mubr.f32.mxu0 0.0
      %1194 = vmatmul.mubr.f32.gmra.mxu0 %v937
      %v1195 = vpop.f32.mrf.mxu0
      %v1196 = vadd.f32 0.0, %v1195
      %v1197 = vpop.f32.mrf.mxu0
      %1198 = vmatprep.mubr.f32.mxu0 0.0
      %1199 = vmatmul.mubr.f32.gmra.mxu0 %v939
      %v1200 = vpop.f32.mrf.mxu0
      %v1201 = vadd.f32 0.0, %v1200
      %v1202 = vpop.f32.mrf.mxu0
      %1203 = vmatprep.mubr.f32.mxu0 0.0
      %1204 = vmatmul.mubr.f32.gmra.mxu0 %v942
      %v1205 = vpop.f32.mrf.mxu0
      %v1206 = vadd.f32 0.0, %v1205
      %v1207 = vpop.f32.mrf.mxu0
      %1208 = vmatprep.mubr.f32.mxu0 0.0
      %1209 = vmatmul.mubr.f32.gmra.mxu0 %v944
      %v1210 = vpop.f32.mrf.mxu0
      %v1211 = vadd.f32 0.0, %v1210
      %v1212 = vpop.f32.mrf.mxu0
      %1213 = vmatprep.mubr.f32.mxu0 0.0
      %1214 = vmatmul.mubr.f32.gmra.mxu0 %v947
      %v1215 = vpop.f32.mrf.mxu0
      %v1216 = vadd.f32 0.0, %v1215
      %v1217 = vpop.f32.mrf.mxu0
      %1218 = vmatprep.mubr.f32.mxu0 0.0
      %1219 = vmatmul.mubr.f32.gmra.mxu0 %v949
      %v1220 = vpop.f32.mrf.mxu0
      %v1221 = vadd.f32 0.0, %v1220
      %v1222 = vpop.f32.mrf.mxu0
      %1223 = vdwg.mxu0
      %v1224 = vadd.f32 %v711, %v1066
      %v1225 = vadd.f32 %v716, %v1071
      %v1226 = vadd.f32 %v721, %v1076
      %v1227 = vadd.f32 %v726, %v1081
      %v1228 = vadd.f32 %v731, %v1086
      %v1229 = vadd.f32 %v736, %v1091
      %v1230 = vadd.f32 %v741, %v1096
      %v1231 = vadd.f32 %v746, %v1101
      %v1232 = vadd.f32 %v751, %v1106
      %v1233 = vadd.f32 %v756, %v1111
      %v1234 = vadd.f32 %v761, %v1116
      %v1235 = vadd.f32 %v766, %v1121
      %v1236 = vadd.f32 %v771, %v1126
      %v1237 = vadd.f32 %v776, %v1131
      %v1238 = vadd.f32 %v781, %v1136
      %v1239 = vadd.f32 %v786, %v1141
      %v1240 = vadd.f32 %v791, %v1146
      %v1241 = vadd.f32 %v796, %v1151
      %v1242 = vadd.f32 %v801, %v1156
      %v1243 = vadd.f32 %v806, %v1161
      %v1244 = vadd.f32 %v811, %v1166
      %v1245 = vadd.f32 %v816, %v1171
      %v1246 = vadd.f32 %v821, %v1176
      %v1247 = vadd.f32 %v826, %v1181
      %v1248 = vadd.f32 %v831, %v1186
      %v1249 = vadd.f32 %v836, %v1191
      %v1250 = vadd.f32 %v841, %v1196
      %v1251 = vadd.f32 %v846, %v1201
      %v1252 = vadd.f32 %v851, %v1206
      %v1253 = vadd.f32 %v856, %v1211
      %v1254 = vadd.f32 %v861, %v1216
      %v1255 = vadd.f32 %v866, %v1221
      %s1256 = scalar_lea.vmem %s1, 384
      %v1257 = vld [vmem:[%s1256] sm:$0xff]
      %v1258 = vld [vmem:[%s1256 + $0x8] sm:$0xff]
      %v1259 = vld [vmem:[%s1256 + $0x10] sm:$0xff]
      %v1260 = vld [vmem:[%s1256 + $0x18] sm:$0xff]
      %v1261 = vld [vmem:[%s1256 + $0x20] sm:$0xff]
      %v1262 = vld [vmem:[%s1256 + $0x28] sm:$0xff]
      %v1263 = vld [vmem:[%s1256 + $0x30] sm:$0xff]
      %v1264 = vld [vmem:[%s1256 + $0x38] sm:$0xff]
      %v1265 = vld [vmem:[%s1256 + $0x40] sm:$0xff]
      %v1266 = vld [vmem:[%s1256 + $0x48] sm:$0xff]
      %v1267 = vld [vmem:[%s1256 + $0x50] sm:$0xff]
      %v1268 = vld [vmem:[%s1256 + $0x58] sm:$0xff]
      %v1269 = vld [vmem:[%s1256 + $0x60] sm:$0xff]
      %v1270 = vld [vmem:[%s1256 + $0x68] sm:$0xff]
      %v1271 = vld [vmem:[%s1256 + $0x70] sm:$0xff]
      %v1272 = vld [vmem:[%s1256 + $0x78] sm:$0xff]
      %1273 = vmatprep.subr.mxu0 0.0
      %1274 = vmatpush1.msra.mxu0 %v1272
      %1275 = vmatprep.subr.mxu0 0.0
      %1276 = vmatpush1.msra.mxu0 %v1271
      %1277 = vmatprep.subr.mxu0 0.0
      %1278 = vmatpush1.msra.mxu0 %v1270
      %1279 = vmatprep.subr.mxu0 0.0
      %1280 = vmatpush1.msra.mxu0 %v1269
      %1281 = vmatprep.subr.mxu0 0.0
      %1282 = vmatpush1.msra.mxu0 %v1268
      %1283 = vmatprep.subr.mxu0 0.0
      %1284 = vmatpush1.msra.mxu0 %v1267
      %1285 = vmatprep.subr.mxu0 0.0
      %1286 = vmatpush1.msra.mxu0 %v1266
      %1287 = vmatprep.subr.mxu0 0.0
      %1288 = vmatpush1.msra.mxu0 %v1265
      %1289 = vmatprep.subr.mxu0 0.0
      %1290 = vmatpush1.msra.mxu0 %v1264
      %1291 = vmatprep.subr.mxu0 0.0
      %1292 = vmatpush1.msra.mxu0 %v1263
      %1293 = vmatprep.subr.mxu0 0.0
      %1294 = vmatpush1.msra.mxu0 %v1262
      %1295 = vmatprep.subr.mxu0 0.0
      %1296 = vmatpush1.msra.mxu0 %v1261
      %1297 = vmatprep.subr.mxu0 0.0
      %1298 = vmatpush1.msra.mxu0 %v1260
      %1299 = vmatprep.subr.mxu0 0.0
      %1300 = vmatpush1.msra.mxu0 %v1259
      %1301 = vmatprep.subr.mxu0 0.0
      %1302 = vmatpush1.msra.mxu0 %v1258
      %1303 = vmatprep.subr.mxu0 0.0
      %1304 = vmatpush1.msra.mxu0 %v1257
      %1305 = vmatprep.subr.mxu0 0.0
      %1306 = vmatpush2.msra.mxu0 0.0
      %1307 = vmatprep.subr.mxu0 0.0
      %1308 = vmatpush2.msra.mxu0 0.0
      %1309 = vmatprep.subr.mxu0 0.0
      %1310 = vmatpush2.msra.mxu0 0.0
      %1311 = vmatprep.subr.mxu0 0.0
      %1312 = vmatpush2.msra.mxu0 0.0
      %1313 = vmatprep.subr.mxu0 0.0
      %1314 = vmatpush2.msra.mxu0 0.0
      %1315 = vmatprep.subr.mxu0 0.0
      %1316 = vmatpush2.msra.mxu0 0.0
      %1317 = vmatprep.subr.mxu0 0.0
      %1318 = vmatpush2.msra.mxu0 0.0
      %1319 = vmatprep.subr.mxu0 0.0
      %1320 = vmatpush2.msra.mxu0 0.0
      %1321 = vmatprep.subr.mxu0 0.0
      %1322 = vmatpush2.msra.mxu0 0.0
      %1323 = vmatprep.subr.mxu0 0.0
      %1324 = vmatpush2.msra.mxu0 0.0
      %1325 = vmatprep.subr.mxu0 0.0
      %1326 = vmatpush2.msra.mxu0 0.0
      %1327 = vmatprep.subr.mxu0 0.0
      %1328 = vmatpush2.msra.mxu0 0.0
      %1329 = vmatprep.subr.mxu0 0.0
      %1330 = vmatpush2.msra.mxu0 0.0
      %1331 = vmatprep.subr.mxu0 0.0
      %1332 = vmatpush2.msra.mxu0 0.0
      %1333 = vmatprep.subr.mxu0 0.0
      %1334 = vmatpush2.msra.mxu0 0.0
      %1335 = vmatprep.subr.mxu0 0.0
      %1336 = vmatpush2.msra.mxu0 0.0
      %1337 = vmatprep.mubr.f32.mxu0 0.0
      %1338 = vmatmul.mubr.f32.gmra.mxu0 %v174
      %v1339 = vpop.f32.mrf.mxu0
      %v1340 = vadd.f32 0.0, %v1339
      %v1341 = vpop.f32.mrf.mxu0
      %1342 = vmatprep.mubr.f32.mxu0 0.0
      %1343 = vmatmul.mubr.f32.gmra.mxu0 %v175
      %v1344 = vpop.f32.mrf.mxu0
      %v1345 = vadd.f32 0.0, %v1344
      %v1346 = vpop.f32.mrf.mxu0
      %1347 = vmatprep.mubr.f32.mxu0 0.0
      %1348 = vmatmul.mubr.f32.gmra.mxu0 %v177
      %v1349 = vpop.f32.mrf.mxu0
      %v1350 = vadd.f32 0.0, %v1349
      %v1351 = vpop.f32.mrf.mxu0
      %1352 = vmatprep.mubr.f32.mxu0 0.0
      %1353 = vmatmul.mubr.f32.gmra.mxu0 %v178
      %v1354 = vpop.f32.mrf.mxu0
      %v1355 = vadd.f32 0.0, %v1354
      %v1356 = vpop.f32.mrf.mxu0
      %1357 = vmatprep.mubr.f32.mxu0 0.0
      %1358 = vmatmul.mubr.f32.gmra.mxu0 %v180
      %v1359 = vpop.f32.mrf.mxu0
      %v1360 = vadd.f32 0.0, %v1359
      %v1361 = vpop.f32.mrf.mxu0
      %1362 = vmatprep.mubr.f32.mxu0 0.0
      %1363 = vmatmul.mubr.f32.gmra.mxu0 %v181
      %v1364 = vpop.f32.mrf.mxu0
      %v1365 = vadd.f32 0.0, %v1364
      %v1366 = vpop.f32.mrf.mxu0
      %1367 = vmatprep.mubr.f32.mxu0 0.0
      %1368 = vmatmul.mubr.f32.gmra.mxu0 %v183
      %v1369 = vpop.f32.mrf.mxu0
      %v1370 = vadd.f32 0.0, %v1369
      %v1371 = vpop.f32.mrf.mxu0
      %1372 = vmatprep.mubr.f32.mxu0 0.0
      %1373 = vmatmul.mubr.f32.gmra.mxu0 %v184
      %v1374 = vpop.f32.mrf.mxu0
      %v1375 = vadd.f32 0.0, %v1374
      %v1376 = vpop.f32.mrf.mxu0
      %1377 = vmatprep.mubr.f32.mxu0 0.0
      %1378 = vmatmul.mubr.f32.gmra.mxu0 %v186
      %v1379 = vpop.f32.mrf.mxu0
      %v1380 = vadd.f32 0.0, %v1379
      %v1381 = vpop.f32.mrf.mxu0
      %1382 = vmatprep.mubr.f32.mxu0 0.0
      %1383 = vmatmul.mubr.f32.gmra.mxu0 %v187
      %v1384 = vpop.f32.mrf.mxu0
      %v1385 = vadd.f32 0.0, %v1384
      %v1386 = vpop.f32.mrf.mxu0
      %1387 = vmatprep.mubr.f32.mxu0 0.0
      %1388 = vmatmul.mubr.f32.gmra.mxu0 %v189
      %v1389 = vpop.f32.mrf.mxu0
      %v1390 = vadd.f32 0.0, %v1389
      %v1391 = vpop.f32.mrf.mxu0
      %1392 = vmatprep.mubr.f32.mxu0 0.0
      %1393 = vmatmul.mubr.f32.gmra.mxu0 %v190
      %v1394 = vpop.f32.mrf.mxu0
      %v1395 = vadd.f32 0.0, %v1394
      %v1396 = vpop.f32.mrf.mxu0
      %1397 = vmatprep.mubr.f32.mxu0 0.0
      %1398 = vmatmul.mubr.f32.gmra.mxu0 %v192
      %v1399 = vpop.f32.mrf.mxu0
      %v1400 = vadd.f32 0.0, %v1399
      %v1401 = vpop.f32.mrf.mxu0
      %1402 = vmatprep.mubr.f32.mxu0 0.0
      %1403 = vmatmul.mubr.f32.gmra.mxu0 %v193
      %v1404 = vpop.f32.mrf.mxu0
      %v1405 = vadd.f32 0.0, %v1404
      %v1406 = vpop.f32.mrf.mxu0
      %1407 = vmatprep.mubr.f32.mxu0 0.0
      %1408 = vmatmul.mubr.f32.gmra.mxu0 %v195
      %v1409 = vpop.f32.mrf.mxu0
      %v1410 = vadd.f32 0.0, %v1409
      %v1411 = vpop.f32.mrf.mxu0
      %1412 = vmatprep.mubr.f32.mxu0 0.0
      %1413 = vmatmul.mubr.f32.gmra.mxu0 %v196
      %v1414 = vpop.f32.mrf.mxu0
      %v1415 = vadd.f32 0.0, %v1414
      %v1416 = vpop.f32.mrf.mxu0
      %1417 = vmatprep.mubr.f32.mxu0 0.0
      %1418 = vmatmul.mubr.f32.gmra.mxu0 %v198
      %v1419 = vpop.f32.mrf.mxu0
      %v1420 = vadd.f32 0.0, %v1419
      %v1421 = vpop.f32.mrf.mxu0
      %1422 = vmatprep.mubr.f32.mxu0 0.0
      %1423 = vmatmul.mubr.f32.gmra.mxu0 %v199
      %v1424 = vpop.f32.mrf.mxu0
      %v1425 = vadd.f32 0.0, %v1424
      %v1426 = vpop.f32.mrf.mxu0
      %1427 = vmatprep.mubr.f32.mxu0 0.0
      %1428 = vmatmul.mubr.f32.gmra.mxu0 %v201
      %v1429 = vpop.f32.mrf.mxu0
      %v1430 = vadd.f32 0.0, %v1429
      %v1431 = vpop.f32.mrf.mxu0
      %1432 = vmatprep.mubr.f32.mxu0 0.0
      %1433 = vmatmul.mubr.f32.gmra.mxu0 %v202
      %v1434 = vpop.f32.mrf.mxu0
      %v1435 = vadd.f32 0.0, %v1434
      %v1436 = vpop.f32.mrf.mxu0
      %1437 = vmatprep.mubr.f32.mxu0 0.0
      %1438 = vmatmul.mubr.f32.gmra.mxu0 %v204
      %v1439 = vpop.f32.mrf.mxu0
      %v1440 = vadd.f32 0.0, %v1439
      %v1441 = vpop.f32.mrf.mxu0
      %1442 = vmatprep.mubr.f32.mxu0 0.0
      %1443 = vmatmul.mubr.f32.gmra.mxu0 %v205
      %v1444 = vpop.f32.mrf.mxu0
      %v1445 = vadd.f32 0.0, %v1444
      %v1446 = vpop.f32.mrf.mxu0
      %1447 = vmatprep.mubr.f32.mxu0 0.0
      %1448 = vmatmul.mubr.f32.gmra.mxu0 %v207
      %v1449 = vpop.f32.mrf.mxu0
      %v1450 = vadd.f32 0.0, %v1449
      %v1451 = vpop.f32.mrf.mxu0
      %1452 = vmatprep.mubr.f32.mxu0 0.0
      %1453 = vmatmul.mubr.f32.gmra.mxu0 %v208
      %v1454 = vpop.f32.mrf.mxu0
      %v1455 = vadd.f32 0.0, %v1454
      %v1456 = vpop.f32.mrf.mxu0
      %1457 = vmatprep.mubr.f32.mxu0 0.0
      %1458 = vmatmul.mubr.f32.gmra.mxu0 %v210
      %v1459 = vpop.f32.mrf.mxu0
      %v1460 = vadd.f32 0.0, %v1459
      %v1461 = vpop.f32.mrf.mxu0
      %1462 = vmatprep.mubr.f32.mxu0 0.0
      %1463 = vmatmul.mubr.f32.gmra.mxu0 %v211
      %v1464 = vpop.f32.mrf.mxu0
      %v1465 = vadd.f32 0.0, %v1464
      %v1466 = vpop.f32.mrf.mxu0
      %1467 = vmatprep.mubr.f32.mxu0 0.0
      %1468 = vmatmul.mubr.f32.gmra.mxu0 %v213
      %v1469 = vpop.f32.mrf.mxu0
      %v1470 = vadd.f32 0.0, %v1469
      %v1471 = vpop.f32.mrf.mxu0
      %1472 = vmatprep.mubr.f32.mxu0 0.0
      %1473 = vmatmul.mubr.f32.gmra.mxu0 %v214
      %v1474 = vpop.f32.mrf.mxu0
      %v1475 = vadd.f32 0.0, %v1474
      %v1476 = vpop.f32.mrf.mxu0
      %1477 = vmatprep.mubr.f32.mxu0 0.0
      %1478 = vmatmul.mubr.f32.gmra.mxu0 %v216
      %v1479 = vpop.f32.mrf.mxu0
      %v1480 = vadd.f32 0.0, %v1479
      %v1481 = vpop.f32.mrf.mxu0
      %1482 = vmatprep.mubr.f32.mxu0 0.0
      %1483 = vmatmul.mubr.f32.gmra.mxu0 %v217
      %v1484 = vpop.f32.mrf.mxu0
      %v1485 = vadd.f32 0.0, %v1484
      %v1486 = vpop.f32.mrf.mxu0
      %1487 = vmatprep.mubr.f32.mxu0 0.0
      %1488 = vmatmul.mubr.f32.gmra.mxu0 %v219
      %v1489 = vpop.f32.mrf.mxu0
      %v1490 = vadd.f32 0.0, %v1489
      %v1491 = vpop.f32.mrf.mxu0
      %1492 = vmatprep.mubr.f32.mxu0 0.0
      %1493 = vmatmul.mubr.f32.gmra.mxu0 %v220
      %v1494 = vpop.f32.mrf.mxu0
      %v1495 = vadd.f32 0.0, %v1494
      %v1496 = vpop.f32.mrf.mxu0
      %1497 = vdwg.mxu0
      %v1498 = vadd.f32 %v1224, %v1340
      %v1499 = vadd.f32 %v1225, %v1345
      %v1500 = vadd.f32 %v1226, %v1350
      %v1501 = vadd.f32 %v1227, %v1355
      %v1502 = vadd.f32 %v1228, %v1360
      %v1503 = vadd.f32 %v1229, %v1365
      %v1504 = vadd.f32 %v1230, %v1370
      %v1505 = vadd.f32 %v1231, %v1375
      %v1506 = vadd.f32 %v1232, %v1380
      %v1507 = vadd.f32 %v1233, %v1385
      %v1508 = vadd.f32 %v1234, %v1390
      %v1509 = vadd.f32 %v1235, %v1395
      %v1510 = vadd.f32 %v1236, %v1400
      %v1511 = vadd.f32 %v1237, %v1405
      %v1512 = vadd.f32 %v1238, %v1410
      %v1513 = vadd.f32 %v1239, %v1415
      %v1514 = vadd.f32 %v1240, %v1420
      %v1515 = vadd.f32 %v1241, %v1425
      %v1516 = vadd.f32 %v1242, %v1430
      %v1517 = vadd.f32 %v1243, %v1435
      %v1518 = vadd.f32 %v1244, %v1440
      %v1519 = vadd.f32 %v1245, %v1445
      %v1520 = vadd.f32 %v1246, %v1450
      %v1521 = vadd.f32 %v1247, %v1455
      %v1522 = vadd.f32 %v1248, %v1460
      %v1523 = vadd.f32 %v1249, %v1465
      %v1524 = vadd.f32 %v1250, %v1470
      %v1525 = vadd.f32 %v1251, %v1475
      %v1526 = vadd.f32 %v1252, %v1480
      %v1527 = vadd.f32 %v1253, %v1485
      %v1528 = vadd.f32 %v1254, %v1490
      %v1529 = vadd.f32 %v1255, %v1495
      %v1533 = vrot.slane %v219, 1
      %v1534 = vrot.slane %v220, 1
      %v1535 = vsel %vm289, %v1533, %v1534
      %v1536 = vrot.slane %v221, 1
      %v1537 = vsel %vm289, %v1534, %v1536
      %s1540 = scalar_lea.vmem %s1, 512
      %v1541 = vld [vmem:[%s1540] sm:$0xff]
      %v1542 = vld [vmem:[%s1540 + $0x8] sm:$0xff]
      %v1543 = vld [vmem:[%s1540 + $0x10] sm:$0xff]
      %v1544 = vld [vmem:[%s1540 + $0x18] sm:$0xff]
      %v1545 = vld [vmem:[%s1540 + $0x20] sm:$0xff]
      %v1546 = vld [vmem:[%s1540 + $0x28] sm:$0xff]
      %v1547 = vld [vmem:[%s1540 + $0x30] sm:$0xff]
      %v1548 = vld [vmem:[%s1540 + $0x38] sm:$0xff]
      %v1549 = vld [vmem:[%s1540 + $0x40] sm:$0xff]
      %v1550 = vld [vmem:[%s1540 + $0x48] sm:$0xff]
      %v1551 = vld [vmem:[%s1540 + $0x50] sm:$0xff]
      %v1552 = vld [vmem:[%s1540 + $0x58] sm:$0xff]
      %v1553 = vld [vmem:[%s1540 + $0x60] sm:$0xff]
      %v1554 = vld [vmem:[%s1540 + $0x68] sm:$0xff]
      %v1555 = vld [vmem:[%s1540 + $0x70] sm:$0xff]
      %v1556 = vld [vmem:[%s1540 + $0x78] sm:$0xff]
      %1557 = vmatprep.subr.mxu0 0.0
      %1558 = vmatpush1.msra.mxu0 %v1556
      %1559 = vmatprep.subr.mxu0 0.0
      %1560 = vmatpush1.msra.mxu0 %v1555
      %1561 = vmatprep.subr.mxu0 0.0
      %1562 = vmatpush1.msra.mxu0 %v1554
      %1563 = vmatprep.subr.mxu0 0.0
      %1564 = vmatpush1.msra.mxu0 %v1553
      %1565 = vmatprep.subr.mxu0 0.0
      %1566 = vmatpush1.msra.mxu0 %v1552
      %1567 = vmatprep.subr.mxu0 0.0
      %1568 = vmatpush1.msra.mxu0 %v1551
      %1569 = vmatprep.subr.mxu0 0.0
      %1570 = vmatpush1.msra.mxu0 %v1550
      %1571 = vmatprep.subr.mxu0 0.0
      %1572 = vmatpush1.msra.mxu0 %v1549
      %1573 = vmatprep.subr.mxu0 0.0
      %1574 = vmatpush1.msra.mxu0 %v1548
      %1575 = vmatprep.subr.mxu0 0.0
      %1576 = vmatpush1.msra.mxu0 %v1547
      %1577 = vmatprep.subr.mxu0 0.0
      %1578 = vmatpush1.msra.mxu0 %v1546
      %1579 = vmatprep.subr.mxu0 0.0
      %1580 = vmatpush1.msra.mxu0 %v1545
      %1581 = vmatprep.subr.mxu0 0.0
      %1582 = vmatpush1.msra.mxu0 %v1544
      %1583 = vmatprep.subr.mxu0 0.0
      %1584 = vmatpush1.msra.mxu0 %v1543
      %1585 = vmatprep.subr.mxu0 0.0
      %1586 = vmatpush1.msra.mxu0 %v1542
      %1587 = vmatprep.subr.mxu0 0.0
      %1588 = vmatpush1.msra.mxu0 %v1541
      %1589 = vmatprep.subr.mxu0 0.0
      %1590 = vmatpush2.msra.mxu0 0.0
      %1591 = vmatprep.subr.mxu0 0.0
      %1592 = vmatpush2.msra.mxu0 0.0
      %1593 = vmatprep.subr.mxu0 0.0
      %1594 = vmatpush2.msra.mxu0 0.0
      %1595 = vmatprep.subr.mxu0 0.0
      %1596 = vmatpush2.msra.mxu0 0.0
      %1597 = vmatprep.subr.mxu0 0.0
      %1598 = vmatpush2.msra.mxu0 0.0
      %1599 = vmatprep.subr.mxu0 0.0
      %1600 = vmatpush2.msra.mxu0 0.0
      %1601 = vmatprep.subr.mxu0 0.0
      %1602 = vmatpush2.msra.mxu0 0.0
      %1603 = vmatprep.subr.mxu0 0.0
      %1604 = vmatpush2.msra.mxu0 0.0
      %1605 = vmatprep.subr.mxu0 0.0
      %1606 = vmatpush2.msra.mxu0 0.0
      %1607 = vmatprep.subr.mxu0 0.0
      %1608 = vmatpush2.msra.mxu0 0.0
      %1609 = vmatprep.subr.mxu0 0.0
      %1610 = vmatpush2.msra.mxu0 0.0
      %1611 = vmatprep.subr.mxu0 0.0
      %1612 = vmatpush2.msra.mxu0 0.0
      %1613 = vmatprep.subr.mxu0 0.0
      %1614 = vmatpush2.msra.mxu0 0.0
      %1615 = vmatprep.subr.mxu0 0.0
      %1616 = vmatpush2.msra.mxu0 0.0
      %1617 = vmatprep.subr.mxu0 0.0
      %1618 = vmatpush2.msra.mxu0 0.0
      %1619 = vmatprep.subr.mxu0 0.0
      %1620 = vmatpush2.msra.mxu0 0.0
      %1621 = vmatprep.mubr.f32.mxu0 0.0
      %1622 = vmatmul.mubr.f32.gmra.mxu0 %v297
      %v1623 = vpop.f32.mrf.mxu0
      %v1624 = vadd.f32 0.0, %v1623
      %v1625 = vpop.f32.mrf.mxu0
      %1626 = vmatprep.mubr.f32.mxu0 0.0
      %1627 = vmatmul.mubr.f32.gmra.mxu0 %v299
      %v1628 = vpop.f32.mrf.mxu0
      %v1629 = vadd.f32 0.0, %v1628
      %v1630 = vpop.f32.mrf.mxu0
      %1631 = vmatprep.mubr.f32.mxu0 0.0
      %1632 = vmatmul.mubr.f32.gmra.mxu0 %v302
      %v1633 = vpop.f32.mrf.mxu0
      %v1634 = vadd.f32 0.0, %v1633
      %v1635 = vpop.f32.mrf.mxu0
      %1636 = vmatprep.mubr.f32.mxu0 0.0
      %1637 = vmatmul.mubr.f32.gmra.mxu0 %v304
      %v1638 = vpop.f32.mrf.mxu0
      %v1639 = vadd.f32 0.0, %v1638
      %v1640 = vpop.f32.mrf.mxu0
      %1641 = vmatprep.mubr.f32.mxu0 0.0
      %1642 = vmatmul.mubr.f32.gmra.mxu0 %v307
      %v1643 = vpop.f32.mrf.mxu0
      %v1644 = vadd.f32 0.0, %v1643
      %v1645 = vpop.f32.mrf.mxu0
      %1646 = vmatprep.mubr.f32.mxu0 0.0
      %1647 = vmatmul.mubr.f32.gmra.mxu0 %v309
      %v1648 = vpop.f32.mrf.mxu0
      %v1649 = vadd.f32 0.0, %v1648
      %v1650 = vpop.f32.mrf.mxu0
      %1651 = vmatprep.mubr.f32.mxu0 0.0
      %1652 = vmatmul.mubr.f32.gmra.mxu0 %v312
      %v1653 = vpop.f32.mrf.mxu0
      %v1654 = vadd.f32 0.0, %v1653
      %v1655 = vpop.f32.mrf.mxu0
      %1656 = vmatprep.mubr.f32.mxu0 0.0
      %1657 = vmatmul.mubr.f32.gmra.mxu0 %v314
      %v1658 = vpop.f32.mrf.mxu0
      %v1659 = vadd.f32 0.0, %v1658
      %v1660 = vpop.f32.mrf.mxu0
      %1661 = vmatprep.mubr.f32.mxu0 0.0
      %1662 = vmatmul.mubr.f32.gmra.mxu0 %v317
      %v1663 = vpop.f32.mrf.mxu0
      %v1664 = vadd.f32 0.0, %v1663
      %v1665 = vpop.f32.mrf.mxu0
      %1666 = vmatprep.mubr.f32.mxu0 0.0
      %1667 = vmatmul.mubr.f32.gmra.mxu0 %v319
      %v1668 = vpop.f32.mrf.mxu0
      %v1669 = vadd.f32 0.0, %v1668
      %v1670 = vpop.f32.mrf.mxu0
      %1671 = vmatprep.mubr.f32.mxu0 0.0
      %1672 = vmatmul.mubr.f32.gmra.mxu0 %v322
      %v1673 = vpop.f32.mrf.mxu0
      %v1674 = vadd.f32 0.0, %v1673
      %v1675 = vpop.f32.mrf.mxu0
      %1676 = vmatprep.mubr.f32.mxu0 0.0
      %1677 = vmatmul.mubr.f32.gmra.mxu0 %v324
      %v1678 = vpop.f32.mrf.mxu0
      %v1679 = vadd.f32 0.0, %v1678
      %v1680 = vpop.f32.mrf.mxu0
      %1681 = vmatprep.mubr.f32.mxu0 0.0
      %1682 = vmatmul.mubr.f32.gmra.mxu0 %v327
      %v1683 = vpop.f32.mrf.mxu0
      %v1684 = vadd.f32 0.0, %v1683
      %v1685 = vpop.f32.mrf.mxu0
      %1686 = vmatprep.mubr.f32.mxu0 0.0
      %1687 = vmatmul.mubr.f32.gmra.mxu0 %v329
      %v1688 = vpop.f32.mrf.mxu0
      %v1689 = vadd.f32 0.0, %v1688
      %v1690 = vpop.f32.mrf.mxu0
      %1691 = vmatprep.mubr.f32.mxu0 0.0
      %1692 = vmatmul.mubr.f32.gmra.mxu0 %v332
      %v1693 = vpop.f32.mrf.mxu0
      %v1694 = vadd.f32 0.0, %v1693
      %v1695 = vpop.f32.mrf.mxu0
      %1696 = vmatprep.mubr.f32.mxu0 0.0
      %1697 = vmatmul.mubr.f32.gmra.mxu0 %v334
      %v1698 = vpop.f32.mrf.mxu0
      %v1699 = vadd.f32 0.0, %v1698
      %v1700 = vpop.f32.mrf.mxu0
      %1701 = vmatprep.mubr.f32.mxu0 0.0
      %1702 = vmatmul.mubr.f32.gmra.mxu0 %v337
      %v1703 = vpop.f32.mrf.mxu0
      %v1704 = vadd.f32 0.0, %v1703
      %v1705 = vpop.f32.mrf.mxu0
      %1706 = vmatprep.mubr.f32.mxu0 0.0
      %1707 = vmatmul.mubr.f32.gmra.mxu0 %v339
      %v1708 = vpop.f32.mrf.mxu0
      %v1709 = vadd.f32 0.0, %v1708
      %v1710 = vpop.f32.mrf.mxu0
      %1711 = vmatprep.mubr.f32.mxu0 0.0
      %1712 = vmatmul.mubr.f32.gmra.mxu0 %v342
      %v1713 = vpop.f32.mrf.mxu0
      %v1714 = vadd.f32 0.0, %v1713
      %v1715 = vpop.f32.mrf.mxu0
      %1716 = vmatprep.mubr.f32.mxu0 0.0
      %1717 = vmatmul.mubr.f32.gmra.mxu0 %v344
      %v1718 = vpop.f32.mrf.mxu0
      %v1719 = vadd.f32 0.0, %v1718
      %v1720 = vpop.f32.mrf.mxu0
      %1721 = vmatprep.mubr.f32.mxu0 0.0
      %1722 = vmatmul.mubr.f32.gmra.mxu0 %v347
      %v1723 = vpop.f32.mrf.mxu0
      %v1724 = vadd.f32 0.0, %v1723
      %v1725 = vpop.f32.mrf.mxu0
      %1726 = vmatprep.mubr.f32.mxu0 0.0
      %1727 = vmatmul.mubr.f32.gmra.mxu0 %v349
      %v1728 = vpop.f32.mrf.mxu0
      %v1729 = vadd.f32 0.0, %v1728
      %v1730 = vpop.f32.mrf.mxu0
      %1731 = vmatprep.mubr.f32.mxu0 0.0
      %1732 = vmatmul.mubr.f32.gmra.mxu0 %v352
      %v1733 = vpop.f32.mrf.mxu0
      %v1734 = vadd.f32 0.0, %v1733
      %v1735 = vpop.f32.mrf.mxu0
      %1736 = vmatprep.mubr.f32.mxu0 0.0
      %1737 = vmatmul.mubr.f32.gmra.mxu0 %v354
      %v1738 = vpop.f32.mrf.mxu0
      %v1739 = vadd.f32 0.0, %v1738
      %v1740 = vpop.f32.mrf.mxu0
      %1741 = vmatprep.mubr.f32.mxu0 0.0
      %1742 = vmatmul.mubr.f32.gmra.mxu0 %v357
      %v1743 = vpop.f32.mrf.mxu0
      %v1744 = vadd.f32 0.0, %v1743
      %v1745 = vpop.f32.mrf.mxu0
      %1746 = vmatprep.mubr.f32.mxu0 0.0
      %1747 = vmatmul.mubr.f32.gmra.mxu0 %v359
      %v1748 = vpop.f32.mrf.mxu0
      %v1749 = vadd.f32 0.0, %v1748
      %v1750 = vpop.f32.mrf.mxu0
      %1751 = vmatprep.mubr.f32.mxu0 0.0
      %1752 = vmatmul.mubr.f32.gmra.mxu0 %v362
      %v1753 = vpop.f32.mrf.mxu0
      %v1754 = vadd.f32 0.0, %v1753
      %v1755 = vpop.f32.mrf.mxu0
      %1756 = vmatprep.mubr.f32.mxu0 0.0
      %1757 = vmatmul.mubr.f32.gmra.mxu0 %v364
      %v1758 = vpop.f32.mrf.mxu0
      %v1759 = vadd.f32 0.0, %v1758
      %v1760 = vpop.f32.mrf.mxu0
      %1761 = vmatprep.mubr.f32.mxu0 0.0
      %1762 = vmatmul.mubr.f32.gmra.mxu0 %v367
      %v1763 = vpop.f32.mrf.mxu0
      %v1764 = vadd.f32 0.0, %v1763
      %v1765 = vpop.f32.mrf.mxu0
      %1766 = vmatprep.mubr.f32.mxu0 0.0
      %1767 = vmatmul.mubr.f32.gmra.mxu0 %v369
      %v1768 = vpop.f32.mrf.mxu0
      %v1769 = vadd.f32 0.0, %v1768
      %v1770 = vpop.f32.mrf.mxu0
      %1771 = vmatprep.mubr.f32.mxu0 0.0
      %1772 = vmatmul.mubr.f32.gmra.mxu0 %v1535
      %v1773 = vpop.f32.mrf.mxu0
      %v1774 = vadd.f32 0.0, %v1773
      %v1775 = vpop.f32.mrf.mxu0
      %1776 = vmatprep.mubr.f32.mxu0 0.0
      %1777 = vmatmul.mubr.f32.gmra.mxu0 %v1537
      %v1778 = vpop.f32.mrf.mxu0
      %v1779 = vadd.f32 0.0, %v1778
      %v1780 = vpop.f32.mrf.mxu0
      %1781 = vdwg.mxu0
      %v1782 = vadd.f32 %v1498, %v1624
      %v1783 = vadd.f32 %v1499, %v1629
      %v1784 = vadd.f32 %v1500, %v1634
      %v1785 = vadd.f32 %v1501, %v1639
      %v1786 = vadd.f32 %v1502, %v1644
      %v1787 = vadd.f32 %v1503, %v1649
      %v1788 = vadd.f32 %v1504, %v1654
      %v1789 = vadd.f32 %v1505, %v1659
      %v1790 = vadd.f32 %v1506, %v1664
      %v1791 = vadd.f32 %v1507, %v1669
      %v1792 = vadd.f32 %v1508, %v1674
      %v1793 = vadd.f32 %v1509, %v1679
      %v1794 = vadd.f32 %v1510, %v1684
      %v1795 = vadd.f32 %v1511, %v1689
      %v1796 = vadd.f32 %v1512, %v1694
      %v1797 = vadd.f32 %v1513, %v1699
      %v1798 = vadd.f32 %v1514, %v1704
      %v1799 = vadd.f32 %v1515, %v1709
      %v1800 = vadd.f32 %v1516, %v1714
      %v1801 = vadd.f32 %v1517, %v1719
      %v1802 = vadd.f32 %v1518, %v1724
      %v1803 = vadd.f32 %v1519, %v1729
      %v1804 = vadd.f32 %v1520, %v1734
      %v1805 = vadd.f32 %v1521, %v1739
      %v1806 = vadd.f32 %v1522, %v1744
      %v1807 = vadd.f32 %v1523, %v1749
      %v1808 = vadd.f32 %v1524, %v1754
      %v1809 = vadd.f32 %v1525, %v1759
      %v1810 = vadd.f32 %v1526, %v1764
      %v1811 = vadd.f32 %v1527, %v1769
      %v1812 = vadd.f32 %v1528, %v1774
      %v1813 = vadd.f32 %v1529, %v1779
      %v1814 = vrot.slane %v219, 2
      %v1815 = vrot.slane %v220, 2
      %v1816 = vsel %vm869, %v1814, %v1815
      %v1817 = vrot.slane %v221, 2
      %v1818 = vsel %vm869, %v1815, %v1817
      %s1821 = scalar_lea.vmem %s1, 640
      %v1822 = vld [vmem:[%s1821] sm:$0xff]
      %v1823 = vld [vmem:[%s1821 + $0x8] sm:$0xff]
      %v1824 = vld [vmem:[%s1821 + $0x10] sm:$0xff]
      %v1825 = vld [vmem:[%s1821 + $0x18] sm:$0xff]
      %v1826 = vld [vmem:[%s1821 + $0x20] sm:$0xff]
      %v1827 = vld [vmem:[%s1821 + $0x28] sm:$0xff]
      %v1828 = vld [vmem:[%s1821 + $0x30] sm:$0xff]
      %v1829 = vld [vmem:[%s1821 + $0x38] sm:$0xff]
      %v1830 = vld [vmem:[%s1821 + $0x40] sm:$0xff]
      %v1831 = vld [vmem:[%s1821 + $0x48] sm:$0xff]
      %v1832 = vld [vmem:[%s1821 + $0x50] sm:$0xff]
      %v1833 = vld [vmem:[%s1821 + $0x58] sm:$0xff]
      %v1834 = vld [vmem:[%s1821 + $0x60] sm:$0xff]
      %v1835 = vld [vmem:[%s1821 + $0x68] sm:$0xff]
      %v1836 = vld [vmem:[%s1821 + $0x70] sm:$0xff]
      %v1837 = vld [vmem:[%s1821 + $0x78] sm:$0xff]
      %1838 = vmatprep.subr.mxu0 0.0
      %1839 = vmatpush1.msra.mxu0 %v1837
      %1840 = vmatprep.subr.mxu0 0.0
      %1841 = vmatpush1.msra.mxu0 %v1836
      %1842 = vmatprep.subr.mxu0 0.0
      %1843 = vmatpush1.msra.mxu0 %v1835
      %1844 = vmatprep.subr.mxu0 0.0
      %1845 = vmatpush1.msra.mxu0 %v1834
      %1846 = vmatprep.subr.mxu0 0.0
      %1847 = vmatpush1.msra.mxu0 %v1833
      %1848 = vmatprep.subr.mxu0 0.0
      %1849 = vmatpush1.msra.mxu0 %v1832
      %1850 = vmatprep.subr.mxu0 0.0
      %1851 = vmatpush1.msra.mxu0 %v1831
      %1852 = vmatprep.subr.mxu0 0.0
      %1853 = vmatpush1.msra.mxu0 %v1830
      %1854 = vmatprep.subr.mxu0 0.0
      %1855 = vmatpush1.msra.mxu0 %v1829
      %1856 = vmatprep.subr.mxu0 0.0
      %1857 = vmatpush1.msra.mxu0 %v1828
      %1858 = vmatprep.subr.mxu0 0.0
      %1859 = vmatpush1.msra.mxu0 %v1827
      %1860 = vmatprep.subr.mxu0 0.0
      %1861 = vmatpush1.msra.mxu0 %v1826
      %1862 = vmatprep.subr.mxu0 0.0
      %1863 = vmatpush1.msra.mxu0 %v1825
      %1864 = vmatprep.subr.mxu0 0.0
      %1865 = vmatpush1.msra.mxu0 %v1824
      %1866 = vmatprep.subr.mxu0 0.0
      %1867 = vmatpush1.msra.mxu0 %v1823
      %1868 = vmatprep.subr.mxu0 0.0
      %1869 = vmatpush1.msra.mxu0 %v1822
      %1870 = vmatprep.subr.mxu0 0.0
      %1871 = vmatpush2.msra.mxu0 0.0
      %1872 = vmatprep.subr.mxu0 0.0
      %1873 = vmatpush2.msra.mxu0 0.0
      %1874 = vmatprep.subr.mxu0 0.0
      %1875 = vmatpush2.msra.mxu0 0.0
      %1876 = vmatprep.subr.mxu0 0.0
      %1877 = vmatpush2.msra.mxu0 0.0
      %1878 = vmatprep.subr.mxu0 0.0
      %1879 = vmatpush2.msra.mxu0 0.0
      %1880 = vmatprep.subr.mxu0 0.0
      %1881 = vmatpush2.msra.mxu0 0.0
      %1882 = vmatprep.subr.mxu0 0.0
      %1883 = vmatpush2.msra.mxu0 0.0
      %1884 = vmatprep.subr.mxu0 0.0
      %1885 = vmatpush2.msra.mxu0 0.0
      %1886 = vmatprep.subr.mxu0 0.0
      %1887 = vmatpush2.msra.mxu0 0.0
      %1888 = vmatprep.subr.mxu0 0.0
      %1889 = vmatpush2.msra.mxu0 0.0
      %1890 = vmatprep.subr.mxu0 0.0
      %1891 = vmatpush2.msra.mxu0 0.0
      %1892 = vmatprep.subr.mxu0 0.0
      %1893 = vmatpush2.msra.mxu0 0.0
      %1894 = vmatprep.subr.mxu0 0.0
      %1895 = vmatpush2.msra.mxu0 0.0
      %1896 = vmatprep.subr.mxu0 0.0
      %1897 = vmatpush2.msra.mxu0 0.0
      %1898 = vmatprep.subr.mxu0 0.0
      %1899 = vmatpush2.msra.mxu0 0.0
      %1900 = vmatprep.subr.mxu0 0.0
      %1901 = vmatpush2.msra.mxu0 0.0
      %1902 = vmatprep.mubr.f32.mxu0 0.0
      %1903 = vmatmul.mubr.f32.gmra.mxu0 %v877
      %v1904 = vpop.f32.mrf.mxu0
      %v1905 = vadd.f32 0.0, %v1904
      %v1906 = vpop.f32.mrf.mxu0
      %1907 = vmatprep.mubr.f32.mxu0 0.0
      %1908 = vmatmul.mubr.f32.gmra.mxu0 %v879
      %v1909 = vpop.f32.mrf.mxu0
      %v1910 = vadd.f32 0.0, %v1909
      %v1911 = vpop.f32.mrf.mxu0
      %1912 = vmatprep.mubr.f32.mxu0 0.0
      %1913 = vmatmul.mubr.f32.gmra.mxu0 %v882
      %v1914 = vpop.f32.mrf.mxu0
      %v1915 = vadd.f32 0.0, %v1914
      %v1916 = vpop.f32.mrf.mxu0
      %1917 = vmatprep.mubr.f32.mxu0 0.0
      %1918 = vmatmul.mubr.f32.gmra.mxu0 %v884
      %v1919 = vpop.f32.mrf.mxu0
      %v1920 = vadd.f32 0.0, %v1919
      %v1921 = vpop.f32.mrf.mxu0
      %1922 = vmatprep.mubr.f32.mxu0 0.0
      %1923 = vmatmul.mubr.f32.gmra.mxu0 %v887
      %v1924 = vpop.f32.mrf.mxu0
      %v1925 = vadd.f32 0.0, %v1924
      %v1926 = vpop.f32.mrf.mxu0
      %1927 = vmatprep.mubr.f32.mxu0 0.0
      %1928 = vmatmul.mubr.f32.gmra.mxu0 %v889
      %v1929 = vpop.f32.mrf.mxu0
      %v1930 = vadd.f32 0.0, %v1929
      %v1931 = vpop.f32.mrf.mxu0
      %1932 = vmatprep.mubr.f32.mxu0 0.0
      %1933 = vmatmul.mubr.f32.gmra.mxu0 %v892
      %v1934 = vpop.f32.mrf.mxu0
      %v1935 = vadd.f32 0.0, %v1934
      %v1936 = vpop.f32.mrf.mxu0
      %1937 = vmatprep.mubr.f32.mxu0 0.0
      %1938 = vmatmul.mubr.f32.gmra.mxu0 %v894
      %v1939 = vpop.f32.mrf.mxu0
      %v1940 = vadd.f32 0.0, %v1939
      %v1941 = vpop.f32.mrf.mxu0
      %1942 = vmatprep.mubr.f32.mxu0 0.0
      %1943 = vmatmul.mubr.f32.gmra.mxu0 %v897
      %v1944 = vpop.f32.mrf.mxu0
      %v1945 = vadd.f32 0.0, %v1944
      %v1946 = vpop.f32.mrf.mxu0
      %1947 = vmatprep.mubr.f32.mxu0 0.0
      %1948 = vmatmul.mubr.f32.gmra.mxu0 %v899
      %v1949 = vpop.f32.mrf.mxu0
      %v1950 = vadd.f32 0.0, %v1949
      %v1951 = vpop.f32.mrf.mxu0
      %1952 = vmatprep.mubr.f32.mxu0 0.0
      %1953 = vmatmul.mubr.f32.gmra.mxu0 %v902
      %v1954 = vpop.f32.mrf.mxu0
      %v1955 = vadd.f32 0.0, %v1954
      %v1956 = vpop.f32.mrf.mxu0
      %1957 = vmatprep.mubr.f32.mxu0 0.0
      %1958 = vmatmul.mubr.f32.gmra.mxu0 %v904
      %v1959 = vpop.f32.mrf.mxu0
      %v1960 = vadd.f32 0.0, %v1959
      %v1961 = vpop.f32.mrf.mxu0
      %1962 = vmatprep.mubr.f32.mxu0 0.0
      %1963 = vmatmul.mubr.f32.gmra.mxu0 %v907
      %v1964 = vpop.f32.mrf.mxu0
      %v1965 = vadd.f32 0.0, %v1964
      %v1966 = vpop.f32.mrf.mxu0
      %1967 = vmatprep.mubr.f32.mxu0 0.0
      %1968 = vmatmul.mubr.f32.gmra.mxu0 %v909
      %v1969 = vpop.f32.mrf.mxu0
      %v1970 = vadd.f32 0.0, %v1969
      %v1971 = vpop.f32.mrf.mxu0
      %1972 = vmatprep.mubr.f32.mxu0 0.0
      %1973 = vmatmul.mubr.f32.gmra.mxu0 %v912
      %v1974 = vpop.f32.mrf.mxu0
      %v1975 = vadd.f32 0.0, %v1974
      %v1976 = vpop.f32.mrf.mxu0
      %1977 = vmatprep.mubr.f32.mxu0 0.0
      %1978 = vmatmul.mubr.f32.gmra.mxu0 %v914
      %v1979 = vpop.f32.mrf.mxu0
      %v1980 = vadd.f32 0.0, %v1979
      %v1981 = vpop.f32.mrf.mxu0
      %1982 = vmatprep.mubr.f32.mxu0 0.0
      %1983 = vmatmul.mubr.f32.gmra.mxu0 %v917
      %v1984 = vpop.f32.mrf.mxu0
      %v1985 = vadd.f32 0.0, %v1984
      %v1986 = vpop.f32.mrf.mxu0
      %1987 = vmatprep.mubr.f32.mxu0 0.0
      %1988 = vmatmul.mubr.f32.gmra.mxu0 %v919
      %v1989 = vpop.f32.mrf.mxu0
      %v1990 = vadd.f32 0.0, %v1989
      %v1991 = vpop.f32.mrf.mxu0
      %1992 = vmatprep.mubr.f32.mxu0 0.0
      %1993 = vmatmul.mubr.f32.gmra.mxu0 %v922
      %v1994 = vpop.f32.mrf.mxu0
      %v1995 = vadd.f32 0.0, %v1994
      %v1996 = vpop.f32.mrf.mxu0
      %1997 = vmatprep.mubr.f32.mxu0 0.0
      %1998 = vmatmul.mubr.f32.gmra.mxu0 %v924
      %v1999 = vpop.f32.mrf.mxu0
      %v2000 = vadd.f32 0.0, %v1999
      %v2001 = vpop.f32.mrf.mxu0
      %2002 = vmatprep.mubr.f32.mxu0 0.0
      %2003 = vmatmul.mubr.f32.gmra.mxu0 %v927
      %v2004 = vpop.f32.mrf.mxu0
      %v2005 = vadd.f32 0.0, %v2004
      %v2006 = vpop.f32.mrf.mxu0
      %2007 = vmatprep.mubr.f32.mxu0 0.0
      %2008 = vmatmul.mubr.f32.gmra.mxu0 %v929
      %v2009 = vpop.f32.mrf.mxu0
      %v2010 = vadd.f32 0.0, %v2009
      %v2011 = vpop.f32.mrf.mxu0
      %2012 = vmatprep.mubr.f32.mxu0 0.0
      %2013 = vmatmul.mubr.f32.gmra.mxu0 %v932
      %v2014 = vpop.f32.mrf.mxu0
      %v2015 = vadd.f32 0.0, %v2014
      %v2016 = vpop.f32.mrf.mxu0
      %2017 = vmatprep.mubr.f32.mxu0 0.0
      %2018 = vmatmul.mubr.f32.gmra.mxu0 %v934
      %v2019 = vpop.f32.mrf.mxu0
      %v2020 = vadd.f32 0.0, %v2019
      %v2021 = vpop.f32.mrf.mxu0
      %2022 = vmatprep.mubr.f32.mxu0 0.0
      %2023 = vmatmul.mubr.f32.gmra.mxu0 %v937
      %v2024 = vpop.f32.mrf.mxu0
      %v2025 = vadd.f32 0.0, %v2024
      %v2026 = vpop.f32.mrf.mxu0
      %2027 = vmatprep.mubr.f32.mxu0 0.0
      %2028 = vmatmul.mubr.f32.gmra.mxu0 %v939
      %v2029 = vpop.f32.mrf.mxu0
      %v2030 = vadd.f32 0.0, %v2029
      %v2031 = vpop.f32.mrf.mxu0
      %2032 = vmatprep.mubr.f32.mxu0 0.0
      %2033 = vmatmul.mubr.f32.gmra.mxu0 %v942
      %v2034 = vpop.f32.mrf.mxu0
      %v2035 = vadd.f32 0.0, %v2034
      %v2036 = vpop.f32.mrf.mxu0
      %2037 = vmatprep.mubr.f32.mxu0 0.0
      %2038 = vmatmul.mubr.f32.gmra.mxu0 %v944
      %v2039 = vpop.f32.mrf.mxu0
      %v2040 = vadd.f32 0.0, %v2039
      %v2041 = vpop.f32.mrf.mxu0
      %2042 = vmatprep.mubr.f32.mxu0 0.0
      %2043 = vmatmul.mubr.f32.gmra.mxu0 %v947
      %v2044 = vpop.f32.mrf.mxu0
      %v2045 = vadd.f32 0.0, %v2044
      %v2046 = vpop.f32.mrf.mxu0
      %2047 = vmatprep.mubr.f32.mxu0 0.0
      %2048 = vmatmul.mubr.f32.gmra.mxu0 %v949
      %v2049 = vpop.f32.mrf.mxu0
      %v2050 = vadd.f32 0.0, %v2049
      %v2051 = vpop.f32.mrf.mxu0
      %2052 = vmatprep.mubr.f32.mxu0 0.0
      %2053 = vmatmul.mubr.f32.gmra.mxu0 %v1816
      %v2054 = vpop.f32.mrf.mxu0
      %v2055 = vadd.f32 0.0, %v2054
      %v2056 = vpop.f32.mrf.mxu0
      %2057 = vmatprep.mubr.f32.mxu0 0.0
      %2058 = vmatmul.mubr.f32.gmra.mxu0 %v1818
      %v2059 = vpop.f32.mrf.mxu0
      %v2060 = vadd.f32 0.0, %v2059
      %v2061 = vpop.f32.mrf.mxu0
      %2062 = vdwg.mxu0
      %v2063 = vadd.f32 %v1782, %v1905
      %v2064 = vadd.f32 %v1783, %v1910
      %v2065 = vadd.f32 %v1784, %v1915
      %v2066 = vadd.f32 %v1785, %v1920
      %v2067 = vadd.f32 %v1786, %v1925
      %v2068 = vadd.f32 %v1787, %v1930
      %v2069 = vadd.f32 %v1788, %v1935
      %v2070 = vadd.f32 %v1789, %v1940
      %v2071 = vadd.f32 %v1790, %v1945
      %v2072 = vadd.f32 %v1791, %v1950
      %v2073 = vadd.f32 %v1792, %v1955
      %v2074 = vadd.f32 %v1793, %v1960
      %v2075 = vadd.f32 %v1794, %v1965
      %v2076 = vadd.f32 %v1795, %v1970
      %v2077 = vadd.f32 %v1796, %v1975
      %v2078 = vadd.f32 %v1797, %v1980
      %v2079 = vadd.f32 %v1798, %v1985
      %v2080 = vadd.f32 %v1799, %v1990
      %v2081 = vadd.f32 %v1800, %v1995
      %v2082 = vadd.f32 %v1801, %v2000
      %v2083 = vadd.f32 %v1802, %v2005
      %v2084 = vadd.f32 %v1803, %v2010
      %v2085 = vadd.f32 %v1804, %v2015
      %v2086 = vadd.f32 %v1805, %v2020
      %v2087 = vadd.f32 %v1806, %v2025
      %v2088 = vadd.f32 %v1807, %v2030
      %v2089 = vadd.f32 %v1808, %v2035
      %v2090 = vadd.f32 %v1809, %v2040
      %v2091 = vadd.f32 %v1810, %v2045
      %v2092 = vadd.f32 %v1811, %v2050
      %v2093 = vadd.f32 %v1812, %v2055
      %v2094 = vadd.f32 %v1813, %v2060
      %s2095 = scalar_lea.vmem %s1, 768
      %v2096 = vld [vmem:[%s2095] sm:$0xff]
      %v2097 = vld [vmem:[%s2095 + $0x8] sm:$0xff]
      %v2098 = vld [vmem:[%s2095 + $0x10] sm:$0xff]
      %v2099 = vld [vmem:[%s2095 + $0x18] sm:$0xff]
      %v2100 = vld [vmem:[%s2095 + $0x20] sm:$0xff]
      %v2101 = vld [vmem:[%s2095 + $0x28] sm:$0xff]
      %v2102 = vld [vmem:[%s2095 + $0x30] sm:$0xff]
      %v2103 = vld [vmem:[%s2095 + $0x38] sm:$0xff]
      %v2104 = vld [vmem:[%s2095 + $0x40] sm:$0xff]
      %v2105 = vld [vmem:[%s2095 + $0x48] sm:$0xff]
      %v2106 = vld [vmem:[%s2095 + $0x50] sm:$0xff]
      %v2107 = vld [vmem:[%s2095 + $0x58] sm:$0xff]
      %v2108 = vld [vmem:[%s2095 + $0x60] sm:$0xff]
      %v2109 = vld [vmem:[%s2095 + $0x68] sm:$0xff]
      %v2110 = vld [vmem:[%s2095 + $0x70] sm:$0xff]
      %v2111 = vld [vmem:[%s2095 + $0x78] sm:$0xff]
      %2112 = vmatprep.subr.mxu0 0.0
      %2113 = vmatpush1.msra.mxu0 %v2111
      %2114 = vmatprep.subr.mxu0 0.0
      %2115 = vmatpush1.msra.mxu0 %v2110
      %2116 = vmatprep.subr.mxu0 0.0
      %2117 = vmatpush1.msra.mxu0 %v2109
      %2118 = vmatprep.subr.mxu0 0.0
      %2119 = vmatpush1.msra.mxu0 %v2108
      %2120 = vmatprep.subr.mxu0 0.0
      %2121 = vmatpush1.msra.mxu0 %v2107
      %2122 = vmatprep.subr.mxu0 0.0
      %2123 = vmatpush1.msra.mxu0 %v2106
      %2124 = vmatprep.subr.mxu0 0.0
      %2125 = vmatpush1.msra.mxu0 %v2105
      %2126 = vmatprep.subr.mxu0 0.0
      %2127 = vmatpush1.msra.mxu0 %v2104
      %2128 = vmatprep.subr.mxu0 0.0
      %2129 = vmatpush1.msra.mxu0 %v2103
      %2130 = vmatprep.subr.mxu0 0.0
      %2131 = vmatpush1.msra.mxu0 %v2102
      %2132 = vmatprep.subr.mxu0 0.0
      %2133 = vmatpush1.msra.mxu0 %v2101
      %2134 = vmatprep.subr.mxu0 0.0
      %2135 = vmatpush1.msra.mxu0 %v2100
      %2136 = vmatprep.subr.mxu0 0.0
      %2137 = vmatpush1.msra.mxu0 %v2099
      %2138 = vmatprep.subr.mxu0 0.0
      %2139 = vmatpush1.msra.mxu0 %v2098
      %2140 = vmatprep.subr.mxu0 0.0
      %2141 = vmatpush1.msra.mxu0 %v2097
      %2142 = vmatprep.subr.mxu0 0.0
      %2143 = vmatpush1.msra.mxu0 %v2096
      %2144 = vmatprep.subr.mxu0 0.0
      %2145 = vmatpush2.msra.mxu0 0.0
      %2146 = vmatprep.subr.mxu0 0.0
      %2147 = vmatpush2.msra.mxu0 0.0
      %2148 = vmatprep.subr.mxu0 0.0
      %2149 = vmatpush2.msra.mxu0 0.0
      %2150 = vmatprep.subr.mxu0 0.0
      %2151 = vmatpush2.msra.mxu0 0.0
      %2152 = vmatprep.subr.mxu0 0.0
      %2153 = vmatpush2.msra.mxu0 0.0
      %2154 = vmatprep.subr.mxu0 0.0
      %2155 = vmatpush2.msra.mxu0 0.0
      %2156 = vmatprep.subr.mxu0 0.0
      %2157 = vmatpush2.msra.mxu0 0.0
      %2158 = vmatprep.subr.mxu0 0.0
      %2159 = vmatpush2.msra.mxu0 0.0
      %2160 = vmatprep.subr.mxu0 0.0
      %2161 = vmatpush2.msra.mxu0 0.0
      %2162 = vmatprep.subr.mxu0 0.0
      %2163 = vmatpush2.msra.mxu0 0.0
      %2164 = vmatprep.subr.mxu0 0.0
      %2165 = vmatpush2.msra.mxu0 0.0
      %2166 = vmatprep.subr.mxu0 0.0
      %2167 = vmatpush2.msra.mxu0 0.0
      %2168 = vmatprep.subr.mxu0 0.0
      %2169 = vmatpush2.msra.mxu0 0.0
      %2170 = vmatprep.subr.mxu0 0.0
      %2171 = vmatpush2.msra.mxu0 0.0
      %2172 = vmatprep.subr.mxu0 0.0
      %2173 = vmatpush2.msra.mxu0 0.0
      %2174 = vmatprep.subr.mxu0 0.0
      %2175 = vmatpush2.msra.mxu0 0.0
      %2176 = vmatprep.mubr.f32.mxu0 0.0
      %2177 = vmatmul.mubr.f32.gmra.mxu0 %v177
      %v2178 = vpop.f32.mrf.mxu0
      %v2179 = vadd.f32 0.0, %v2178
      %v2180 = vpop.f32.mrf.mxu0
      %2181 = vmatprep.mubr.f32.mxu0 0.0
      %2182 = vmatmul.mubr.f32.gmra.mxu0 %v178
      %v2183 = vpop.f32.mrf.mxu0
      %v2184 = vadd.f32 0.0, %v2183
      %v2185 = vpop.f32.mrf.mxu0
      %2186 = vmatprep.mubr.f32.mxu0 0.0
      %2187 = vmatmul.mubr.f32.gmra.mxu0 %v180
      %v2188 = vpop.f32.mrf.mxu0
      %v2189 = vadd.f32 0.0, %v2188
      %v2190 = vpop.f32.mrf.mxu0
      %2191 = vmatprep.mubr.f32.mxu0 0.0
      %2192 = vmatmul.mubr.f32.gmra.mxu0 %v181
      %v2193 = vpop.f32.mrf.mxu0
      %v2194 = vadd.f32 0.0, %v2193
      %v2195 = vpop.f32.mrf.mxu0
      %2196 = vmatprep.mubr.f32.mxu0 0.0
      %2197 = vmatmul.mubr.f32.gmra.mxu0 %v183
      %v2198 = vpop.f32.mrf.mxu0
      %v2199 = vadd.f32 0.0, %v2198
      %v2200 = vpop.f32.mrf.mxu0
      %2201 = vmatprep.mubr.f32.mxu0 0.0
      %2202 = vmatmul.mubr.f32.gmra.mxu0 %v184
      %v2203 = vpop.f32.mrf.mxu0
      %v2204 = vadd.f32 0.0, %v2203
      %v2205 = vpop.f32.mrf.mxu0
      %2206 = vmatprep.mubr.f32.mxu0 0.0
      %2207 = vmatmul.mubr.f32.gmra.mxu0 %v186
      %v2208 = vpop.f32.mrf.mxu0
      %v2209 = vadd.f32 0.0, %v2208
      %v2210 = vpop.f32.mrf.mxu0
      %2211 = vmatprep.mubr.f32.mxu0 0.0
      %2212 = vmatmul.mubr.f32.gmra.mxu0 %v187
      %v2213 = vpop.f32.mrf.mxu0
      %v2214 = vadd.f32 0.0, %v2213
      %v2215 = vpop.f32.mrf.mxu0
      %2216 = vmatprep.mubr.f32.mxu0 0.0
      %2217 = vmatmul.mubr.f32.gmra.mxu0 %v189
      %v2218 = vpop.f32.mrf.mxu0
      %v2219 = vadd.f32 0.0, %v2218
      %v2220 = vpop.f32.mrf.mxu0
      %2221 = vmatprep.mubr.f32.mxu0 0.0
      %2222 = vmatmul.mubr.f32.gmra.mxu0 %v190
      %v2223 = vpop.f32.mrf.mxu0
      %v2224 = vadd.f32 0.0, %v2223
      %v2225 = vpop.f32.mrf.mxu0
      %2226 = vmatprep.mubr.f32.mxu0 0.0
      %2227 = vmatmul.mubr.f32.gmra.mxu0 %v192
      %v2228 = vpop.f32.mrf.mxu0
      %v2229 = vadd.f32 0.0, %v2228
      %v2230 = vpop.f32.mrf.mxu0
      %2231 = vmatprep.mubr.f32.mxu0 0.0
      %2232 = vmatmul.mubr.f32.gmra.mxu0 %v193
      %v2233 = vpop.f32.mrf.mxu0
      %v2234 = vadd.f32 0.0, %v2233
      %v2235 = vpop.f32.mrf.mxu0
      %2236 = vmatprep.mubr.f32.mxu0 0.0
      %2237 = vmatmul.mubr.f32.gmra.mxu0 %v195
      %v2238 = vpop.f32.mrf.mxu0
      %v2239 = vadd.f32 0.0, %v2238
      %v2240 = vpop.f32.mrf.mxu0
      %2241 = vmatprep.mubr.f32.mxu0 0.0
      %2242 = vmatmul.mubr.f32.gmra.mxu0 %v196
      %v2243 = vpop.f32.mrf.mxu0
      %v2244 = vadd.f32 0.0, %v2243
      %v2245 = vpop.f32.mrf.mxu0
      %2246 = vmatprep.mubr.f32.mxu0 0.0
      %2247 = vmatmul.mubr.f32.gmra.mxu0 %v198
      %v2248 = vpop.f32.mrf.mxu0
      %v2249 = vadd.f32 0.0, %v2248
      %v2250 = vpop.f32.mrf.mxu0
      %2251 = vmatprep.mubr.f32.mxu0 0.0
      %2252 = vmatmul.mubr.f32.gmra.mxu0 %v199
      %v2253 = vpop.f32.mrf.mxu0
      %v2254 = vadd.f32 0.0, %v2253
      %v2255 = vpop.f32.mrf.mxu0
      %2256 = vmatprep.mubr.f32.mxu0 0.0
      %2257 = vmatmul.mubr.f32.gmra.mxu0 %v201
      %v2258 = vpop.f32.mrf.mxu0
      %v2259 = vadd.f32 0.0, %v2258
      %v2260 = vpop.f32.mrf.mxu0
      %2261 = vmatprep.mubr.f32.mxu0 0.0
      %2262 = vmatmul.mubr.f32.gmra.mxu0 %v202
      %v2263 = vpop.f32.mrf.mxu0
      %v2264 = vadd.f32 0.0, %v2263
      %v2265 = vpop.f32.mrf.mxu0
      %2266 = vmatprep.mubr.f32.mxu0 0.0
      %2267 = vmatmul.mubr.f32.gmra.mxu0 %v204
      %v2268 = vpop.f32.mrf.mxu0
      %v2269 = vadd.f32 0.0, %v2268
      %v2270 = vpop.f32.mrf.mxu0
      %2271 = vmatprep.mubr.f32.mxu0 0.0
      %2272 = vmatmul.mubr.f32.gmra.mxu0 %v205
      %v2273 = vpop.f32.mrf.mxu0
      %v2274 = vadd.f32 0.0, %v2273
      %v2275 = vpop.f32.mrf.mxu0
      %2276 = vmatprep.mubr.f32.mxu0 0.0
      %2277 = vmatmul.mubr.f32.gmra.mxu0 %v207
      %v2278 = vpop.f32.mrf.mxu0
      %v2279 = vadd.f32 0.0, %v2278
      %v2280 = vpop.f32.mrf.mxu0
      %2281 = vmatprep.mubr.f32.mxu0 0.0
      %2282 = vmatmul.mubr.f32.gmra.mxu0 %v208
      %v2283 = vpop.f32.mrf.mxu0
      %v2284 = vadd.f32 0.0, %v2283
      %v2285 = vpop.f32.mrf.mxu0
      %2286 = vmatprep.mubr.f32.mxu0 0.0
      %2287 = vmatmul.mubr.f32.gmra.mxu0 %v210
      %v2288 = vpop.f32.mrf.mxu0
      %v2289 = vadd.f32 0.0, %v2288
      %v2290 = vpop.f32.mrf.mxu0
      %2291 = vmatprep.mubr.f32.mxu0 0.0
      %2292 = vmatmul.mubr.f32.gmra.mxu0 %v211
      %v2293 = vpop.f32.mrf.mxu0
      %v2294 = vadd.f32 0.0, %v2293
      %v2295 = vpop.f32.mrf.mxu0
      %2296 = vmatprep.mubr.f32.mxu0 0.0
      %2297 = vmatmul.mubr.f32.gmra.mxu0 %v213
      %v2298 = vpop.f32.mrf.mxu0
      %v2299 = vadd.f32 0.0, %v2298
      %v2300 = vpop.f32.mrf.mxu0
      %2301 = vmatprep.mubr.f32.mxu0 0.0
      %2302 = vmatmul.mubr.f32.gmra.mxu0 %v214
      %v2303 = vpop.f32.mrf.mxu0
      %v2304 = vadd.f32 0.0, %v2303
      %v2305 = vpop.f32.mrf.mxu0
      %2306 = vmatprep.mubr.f32.mxu0 0.0
      %2307 = vmatmul.mubr.f32.gmra.mxu0 %v216
      %v2308 = vpop.f32.mrf.mxu0
      %v2309 = vadd.f32 0.0, %v2308
      %v2310 = vpop.f32.mrf.mxu0
      %2311 = vmatprep.mubr.f32.mxu0 0.0
      %2312 = vmatmul.mubr.f32.gmra.mxu0 %v217
      %v2313 = vpop.f32.mrf.mxu0
      %v2314 = vadd.f32 0.0, %v2313
      %v2315 = vpop.f32.mrf.mxu0
      %2316 = vmatprep.mubr.f32.mxu0 0.0
      %2317 = vmatmul.mubr.f32.gmra.mxu0 %v219
      %v2318 = vpop.f32.mrf.mxu0
      %v2319 = vadd.f32 0.0, %v2318
      %v2320 = vpop.f32.mrf.mxu0
      %2321 = vmatprep.mubr.f32.mxu0 0.0
      %2322 = vmatmul.mubr.f32.gmra.mxu0 %v220
      %v2323 = vpop.f32.mrf.mxu0
      %v2324 = vadd.f32 0.0, %v2323
      %v2325 = vpop.f32.mrf.mxu0
      %2326 = vmatprep.mubr.f32.mxu0 0.0
      %2327 = vmatmul.mubr.f32.gmra.mxu0 %v222
      %v2328 = vpop.f32.mrf.mxu0
      %v2329 = vadd.f32 0.0, %v2328
      %v2330 = vpop.f32.mrf.mxu0
      %2331 = vmatprep.mubr.f32.mxu0 0.0
      %2332 = vmatmul.mubr.f32.gmra.mxu0 %v223
      %v2333 = vpop.f32.mrf.mxu0
      %v2334 = vadd.f32 0.0, %v2333
      %v2335 = vpop.f32.mrf.mxu0
      %2336 = vdwg.mxu0
      %v2337 = vadd.f32 %v2063, %v2179
      %v2338 = vadd.f32 %v2064, %v2184
      %v2339 = vadd.f32 %v2065, %v2189
      %v2340 = vadd.f32 %v2066, %v2194
      %v2341 = vadd.f32 %v2067, %v2199
      %v2342 = vadd.f32 %v2068, %v2204
      %v2343 = vadd.f32 %v2069, %v2209
      %v2344 = vadd.f32 %v2070, %v2214
      %v2345 = vadd.f32 %v2071, %v2219
      %v2346 = vadd.f32 %v2072, %v2224
      %v2347 = vadd.f32 %v2073, %v2229
      %v2348 = vadd.f32 %v2074, %v2234
      %v2349 = vadd.f32 %v2075, %v2239
      %v2350 = vadd.f32 %v2076, %v2244
      %v2351 = vadd.f32 %v2077, %v2249
      %v2352 = vadd.f32 %v2078, %v2254
      %v2353 = vadd.f32 %v2079, %v2259
      %v2354 = vadd.f32 %v2080, %v2264
      %v2355 = vadd.f32 %v2081, %v2269
      %v2356 = vadd.f32 %v2082, %v2274
      %v2357 = vadd.f32 %v2083, %v2279
      %v2358 = vadd.f32 %v2084, %v2284
      %v2359 = vadd.f32 %v2085, %v2289
      %v2360 = vadd.f32 %v2086, %v2294
      %v2361 = vadd.f32 %v2087, %v2299
      %v2362 = vadd.f32 %v2088, %v2304
      %v2363 = vadd.f32 %v2089, %v2309
      %v2364 = vadd.f32 %v2090, %v2314
      %v2365 = vadd.f32 %v2091, %v2319
      %v2366 = vadd.f32 %v2092, %v2324
      %v2367 = vadd.f32 %v2093, %v2329
      %v2368 = vadd.f32 %v2094, %v2334
      %v2372 = vrot.slane %v222, 1
      %v2373 = vrot.slane %v223, 1
      %v2374 = vsel %vm289, %v2372, %v2373
      %v2375 = vrot.slane %v224, 1
      %v2376 = vsel %vm289, %v2373, %v2375
      %s2379 = scalar_lea.vmem %s1, 896
      %v2380 = vld [vmem:[%s2379] sm:$0xff]
      %v2381 = vld [vmem:[%s2379 + $0x8] sm:$0xff]
      %v2382 = vld [vmem:[%s2379 + $0x10] sm:$0xff]
      %v2383 = vld [vmem:[%s2379 + $0x18] sm:$0xff]
      %v2384 = vld [vmem:[%s2379 + $0x20] sm:$0xff]
      %v2385 = vld [vmem:[%s2379 + $0x28] sm:$0xff]
      %v2386 = vld [vmem:[%s2379 + $0x30] sm:$0xff]
      %v2387 = vld [vmem:[%s2379 + $0x38] sm:$0xff]
      %v2388 = vld [vmem:[%s2379 + $0x40] sm:$0xff]
      %v2389 = vld [vmem:[%s2379 + $0x48] sm:$0xff]
      %v2390 = vld [vmem:[%s2379 + $0x50] sm:$0xff]
      %v2391 = vld [vmem:[%s2379 + $0x58] sm:$0xff]
      %v2392 = vld [vmem:[%s2379 + $0x60] sm:$0xff]
      %v2393 = vld [vmem:[%s2379 + $0x68] sm:$0xff]
      %v2394 = vld [vmem:[%s2379 + $0x70] sm:$0xff]
      %v2395 = vld [vmem:[%s2379 + $0x78] sm:$0xff]
      %2396 = vmatprep.subr.mxu0 0.0
      %2397 = vmatpush1.msra.mxu0 %v2395
      %2398 = vmatprep.subr.mxu0 0.0
      %2399 = vmatpush1.msra.mxu0 %v2394
      %2400 = vmatprep.subr.mxu0 0.0
      %2401 = vmatpush1.msra.mxu0 %v2393
      %2402 = vmatprep.subr.mxu0 0.0
      %2403 = vmatpush1.msra.mxu0 %v2392
      %2404 = vmatprep.subr.mxu0 0.0
      %2405 = vmatpush1.msra.mxu0 %v2391
      %2406 = vmatprep.subr.mxu0 0.0
      %2407 = vmatpush1.msra.mxu0 %v2390
      %2408 = vmatprep.subr.mxu0 0.0
      %2409 = vmatpush1.msra.mxu0 %v2389
      %2410 = vmatprep.subr.mxu0 0.0
      %2411 = vmatpush1.msra.mxu0 %v2388
      %2412 = vmatprep.subr.mxu0 0.0
      %2413 = vmatpush1.msra.mxu0 %v2387
      %2414 = vmatprep.subr.mxu0 0.0
      %2415 = vmatpush1.msra.mxu0 %v2386
      %2416 = vmatprep.subr.mxu0 0.0
      %2417 = vmatpush1.msra.mxu0 %v2385
      %2418 = vmatprep.subr.mxu0 0.0
      %2419 = vmatpush1.msra.mxu0 %v2384
      %2420 = vmatprep.subr.mxu0 0.0
      %2421 = vmatpush1.msra.mxu0 %v2383
      %2422 = vmatprep.subr.mxu0 0.0
      %2423 = vmatpush1.msra.mxu0 %v2382
      %2424 = vmatprep.subr.mxu0 0.0
      %2425 = vmatpush1.msra.mxu0 %v2381
      %2426 = vmatprep.subr.mxu0 0.0
      %2427 = vmatpush1.msra.mxu0 %v2380
      %2428 = vmatprep.subr.mxu0 0.0
      %2429 = vmatpush2.msra.mxu0 0.0
      %2430 = vmatprep.subr.mxu0 0.0
      %2431 = vmatpush2.msra.mxu0 0.0
      %2432 = vmatprep.subr.mxu0 0.0
      %2433 = vmatpush2.msra.mxu0 0.0
      %2434 = vmatprep.subr.mxu0 0.0
      %2435 = vmatpush2.msra.mxu0 0.0
      %2436 = vmatprep.subr.mxu0 0.0
      %2437 = vmatpush2.msra.mxu0 0.0
      %2438 = vmatprep.subr.mxu0 0.0
      %2439 = vmatpush2.msra.mxu0 0.0
      %2440 = vmatprep.subr.mxu0 0.0
      %2441 = vmatpush2.msra.mxu0 0.0
      %2442 = vmatprep.subr.mxu0 0.0
      %2443 = vmatpush2.msra.mxu0 0.0
      %2444 = vmatprep.subr.mxu0 0.0
      %2445 = vmatpush2.msra.mxu0 0.0
      %2446 = vmatprep.subr.mxu0 0.0
      %2447 = vmatpush2.msra.mxu0 0.0
      %2448 = vmatprep.subr.mxu0 0.0
      %2449 = vmatpush2.msra.mxu0 0.0
      %2450 = vmatprep.subr.mxu0 0.0
      %2451 = vmatpush2.msra.mxu0 0.0
      %2452 = vmatprep.subr.mxu0 0.0
      %2453 = vmatpush2.msra.mxu0 0.0
      %2454 = vmatprep.subr.mxu0 0.0
      %2455 = vmatpush2.msra.mxu0 0.0
      %2456 = vmatprep.subr.mxu0 0.0
      %2457 = vmatpush2.msra.mxu0 0.0
      %2458 = vmatprep.subr.mxu0 0.0
      %2459 = vmatpush2.msra.mxu0 0.0
      %2460 = vmatprep.mubr.f32.mxu0 0.0
      %2461 = vmatmul.mubr.f32.gmra.mxu0 %v302
      %v2462 = vpop.f32.mrf.mxu0
      %v2463 = vadd.f32 0.0, %v2462
      %v2464 = vpop.f32.mrf.mxu0
      %2465 = vmatprep.mubr.f32.mxu0 0.0
      %2466 = vmatmul.mubr.f32.gmra.mxu0 %v304
      %v2467 = vpop.f32.mrf.mxu0
      %v2468 = vadd.f32 0.0, %v2467
      %v2469 = vpop.f32.mrf.mxu0
      %2470 = vmatprep.mubr.f32.mxu0 0.0
      %2471 = vmatmul.mubr.f32.gmra.mxu0 %v307
      %v2472 = vpop.f32.mrf.mxu0
      %v2473 = vadd.f32 0.0, %v2472
      %v2474 = vpop.f32.mrf.mxu0
      %2475 = vmatprep.mubr.f32.mxu0 0.0
      %2476 = vmatmul.mubr.f32.gmra.mxu0 %v309
      %v2477 = vpop.f32.mrf.mxu0
      %v2478 = vadd.f32 0.0, %v2477
      %v2479 = vpop.f32.mrf.mxu0
      %2480 = vmatprep.mubr.f32.mxu0 0.0
      %2481 = vmatmul.mubr.f32.gmra.mxu0 %v312
      %v2482 = vpop.f32.mrf.mxu0
      %v2483 = vadd.f32 0.0, %v2482
      %v2484 = vpop.f32.mrf.mxu0
      %2485 = vmatprep.mubr.f32.mxu0 0.0
      %2486 = vmatmul.mubr.f32.gmra.mxu0 %v314
      %v2487 = vpop.f32.mrf.mxu0
      %v2488 = vadd.f32 0.0, %v2487
      %v2489 = vpop.f32.mrf.mxu0
      %2490 = vmatprep.mubr.f32.mxu0 0.0
      %2491 = vmatmul.mubr.f32.gmra.mxu0 %v317
      %v2492 = vpop.f32.mrf.mxu0
      %v2493 = vadd.f32 0.0, %v2492
      %v2494 = vpop.f32.mrf.mxu0
      %2495 = vmatprep.mubr.f32.mxu0 0.0
      %2496 = vmatmul.mubr.f32.gmra.mxu0 %v319
      %v2497 = vpop.f32.mrf.mxu0
      %v2498 = vadd.f32 0.0, %v2497
      %v2499 = vpop.f32.mrf.mxu0
      %2500 = vmatprep.mubr.f32.mxu0 0.0
      %2501 = vmatmul.mubr.f32.gmra.mxu0 %v322
      %v2502 = vpop.f32.mrf.mxu0
      %v2503 = vadd.f32 0.0, %v2502
      %v2504 = vpop.f32.mrf.mxu0
      %2505 = vmatprep.mubr.f32.mxu0 0.0
      %2506 = vmatmul.mubr.f32.gmra.mxu0 %v324
      %v2507 = vpop.f32.mrf.mxu0
      %v2508 = vadd.f32 0.0, %v2507
      %v2509 = vpop.f32.mrf.mxu0
      %2510 = vmatprep.mubr.f32.mxu0 0.0
      %2511 = vmatmul.mubr.f32.gmra.mxu0 %v327
      %v2512 = vpop.f32.mrf.mxu0
      %v2513 = vadd.f32 0.0, %v2512
      %v2514 = vpop.f32.mrf.mxu0
      %2515 = vmatprep.mubr.f32.mxu0 0.0
      %2516 = vmatmul.mubr.f32.gmra.mxu0 %v329
      %v2517 = vpop.f32.mrf.mxu0
      %v2518 = vadd.f32 0.0, %v2517
      %v2519 = vpop.f32.mrf.mxu0
      %2520 = vmatprep.mubr.f32.mxu0 0.0
      %2521 = vmatmul.mubr.f32.gmra.mxu0 %v332
      %v2522 = vpop.f32.mrf.mxu0
      %v2523 = vadd.f32 0.0, %v2522
      %v2524 = vpop.f32.mrf.mxu0
      %2525 = vmatprep.mubr.f32.mxu0 0.0
      %2526 = vmatmul.mubr.f32.gmra.mxu0 %v334
      %v2527 = vpop.f32.mrf.mxu0
      %v2528 = vadd.f32 0.0, %v2527
      %v2529 = vpop.f32.mrf.mxu0
      %2530 = vmatprep.mubr.f32.mxu0 0.0
      %2531 = vmatmul.mubr.f32.gmra.mxu0 %v337
      %v2532 = vpop.f32.mrf.mxu0
      %v2533 = vadd.f32 0.0, %v2532
      %v2534 = vpop.f32.mrf.mxu0
      %2535 = vmatprep.mubr.f32.mxu0 0.0
      %2536 = vmatmul.mubr.f32.gmra.mxu0 %v339
      %v2537 = vpop.f32.mrf.mxu0
      %v2538 = vadd.f32 0.0, %v2537
      %v2539 = vpop.f32.mrf.mxu0
      %2540 = vmatprep.mubr.f32.mxu0 0.0
      %2541 = vmatmul.mubr.f32.gmra.mxu0 %v342
      %v2542 = vpop.f32.mrf.mxu0
      %v2543 = vadd.f32 0.0, %v2542
      %v2544 = vpop.f32.mrf.mxu0
      %2545 = vmatprep.mubr.f32.mxu0 0.0
      %2546 = vmatmul.mubr.f32.gmra.mxu0 %v344
      %v2547 = vpop.f32.mrf.mxu0
      %v2548 = vadd.f32 0.0, %v2547
      %v2549 = vpop.f32.mrf.mxu0
      %2550 = vmatprep.mubr.f32.mxu0 0.0
      %2551 = vmatmul.mubr.f32.gmra.mxu0 %v347
      %v2552 = vpop.f32.mrf.mxu0
      %v2553 = vadd.f32 0.0, %v2552
      %v2554 = vpop.f32.mrf.mxu0
      %2555 = vmatprep.mubr.f32.mxu0 0.0
      %2556 = vmatmul.mubr.f32.gmra.mxu0 %v349
      %v2557 = vpop.f32.mrf.mxu0
      %v2558 = vadd.f32 0.0, %v2557
      %v2559 = vpop.f32.mrf.mxu0
      %2560 = vmatprep.mubr.f32.mxu0 0.0
      %2561 = vmatmul.mubr.f32.gmra.mxu0 %v352
      %v2562 = vpop.f32.mrf.mxu0
      %v2563 = vadd.f32 0.0, %v2562
      %v2564 = vpop.f32.mrf.mxu0
      %2565 = vmatprep.mubr.f32.mxu0 0.0
      %2566 = vmatmul.mubr.f32.gmra.mxu0 %v354
      %v2567 = vpop.f32.mrf.mxu0
      %v2568 = vadd.f32 0.0, %v2567
      %v2569 = vpop.f32.mrf.mxu0
      %2570 = vmatprep.mubr.f32.mxu0 0.0
      %2571 = vmatmul.mubr.f32.gmra.mxu0 %v357
      %v2572 = vpop.f32.mrf.mxu0
      %v2573 = vadd.f32 0.0, %v2572
      %v2574 = vpop.f32.mrf.mxu0
      %2575 = vmatprep.mubr.f32.mxu0 0.0
      %2576 = vmatmul.mubr.f32.gmra.mxu0 %v359
      %v2577 = vpop.f32.mrf.mxu0
      %v2578 = vadd.f32 0.0, %v2577
      %v2579 = vpop.f32.mrf.mxu0
      %2580 = vmatprep.mubr.f32.mxu0 0.0
      %2581 = vmatmul.mubr.f32.gmra.mxu0 %v362
      %v2582 = vpop.f32.mrf.mxu0
      %v2583 = vadd.f32 0.0, %v2582
      %v2584 = vpop.f32.mrf.mxu0
      %2585 = vmatprep.mubr.f32.mxu0 0.0
      %2586 = vmatmul.mubr.f32.gmra.mxu0 %v364
      %v2587 = vpop.f32.mrf.mxu0
      %v2588 = vadd.f32 0.0, %v2587
      %v2589 = vpop.f32.mrf.mxu0
      %2590 = vmatprep.mubr.f32.mxu0 0.0
      %2591 = vmatmul.mubr.f32.gmra.mxu0 %v367
      %v2592 = vpop.f32.mrf.mxu0
      %v2593 = vadd.f32 0.0, %v2592
      %v2594 = vpop.f32.mrf.mxu0
      %2595 = vmatprep.mubr.f32.mxu0 0.0
      %2596 = vmatmul.mubr.f32.gmra.mxu0 %v369
      %v2597 = vpop.f32.mrf.mxu0
      %v2598 = vadd.f32 0.0, %v2597
      %v2599 = vpop.f32.mrf.mxu0
      %2600 = vmatprep.mubr.f32.mxu0 0.0
      %2601 = vmatmul.mubr.f32.gmra.mxu0 %v1535
      %v2602 = vpop.f32.mrf.mxu0
      %v2603 = vadd.f32 0.0, %v2602
      %v2604 = vpop.f32.mrf.mxu0
      %2605 = vmatprep.mubr.f32.mxu0 0.0
      %2606 = vmatmul.mubr.f32.gmra.mxu0 %v1537
      %v2607 = vpop.f32.mrf.mxu0
      %v2608 = vadd.f32 0.0, %v2607
      %v2609 = vpop.f32.mrf.mxu0
      %2610 = vmatprep.mubr.f32.mxu0 0.0
      %2611 = vmatmul.mubr.f32.gmra.mxu0 %v2374
      %v2612 = vpop.f32.mrf.mxu0
      %v2613 = vadd.f32 0.0, %v2612
      %v2614 = vpop.f32.mrf.mxu0
      %2615 = vmatprep.mubr.f32.mxu0 0.0
      %2616 = vmatmul.mubr.f32.gmra.mxu0 %v2376
      %v2617 = vpop.f32.mrf.mxu0
      %v2618 = vadd.f32 0.0, %v2617
      %v2619 = vpop.f32.mrf.mxu0
      %2620 = vdwg.mxu0
      %v2621 = vadd.f32 %v2337, %v2463
      %v2622 = vadd.f32 %v2338, %v2468
      %v2623 = vadd.f32 %v2339, %v2473
      %v2624 = vadd.f32 %v2340, %v2478
      %v2625 = vadd.f32 %v2341, %v2483
      %v2626 = vadd.f32 %v2342, %v2488
      %v2627 = vadd.f32 %v2343, %v2493
      %v2628 = vadd.f32 %v2344, %v2498
      %v2629 = vadd.f32 %v2345, %v2503
      %v2630 = vadd.f32 %v2346, %v2508
      %v2631 = vadd.f32 %v2347, %v2513
      %v2632 = vadd.f32 %v2348, %v2518
      %v2633 = vadd.f32 %v2349, %v2523
      %v2634 = vadd.f32 %v2350, %v2528
      %v2635 = vadd.f32 %v2351, %v2533
      %v2636 = vadd.f32 %v2352, %v2538
      %v2637 = vadd.f32 %v2353, %v2543
      %v2638 = vadd.f32 %v2354, %v2548
      %v2639 = vadd.f32 %v2355, %v2553
      %v2640 = vadd.f32 %v2356, %v2558
      %v2641 = vadd.f32 %v2357, %v2563
      %v2642 = vadd.f32 %v2358, %v2568
      %v2643 = vadd.f32 %v2359, %v2573
      %v2644 = vadd.f32 %v2360, %v2578
      %v2645 = vadd.f32 %v2361, %v2583
      %v2646 = vadd.f32 %v2362, %v2588
      %v2647 = vadd.f32 %v2363, %v2593
      %v2648 = vadd.f32 %v2364, %v2598
      %v2649 = vadd.f32 %v2365, %v2603
      %v2650 = vadd.f32 %v2366, %v2608
      %v2651 = vadd.f32 %v2367, %v2613
      %v2652 = vadd.f32 %v2368, %v2618
      %v2653 = vrot.slane %v222, 2
      %v2654 = vrot.slane %v223, 2
      %v2655 = vsel %vm869, %v2653, %v2654
      %v2656 = vrot.slane %v224, 2
      %v2657 = vsel %vm869, %v2654, %v2656
      %s2660 = scalar_lea.vmem %s1, 1024
      %v2661 = vld [vmem:[%s2660] sm:$0xff]
      %v2662 = vld [vmem:[%s2660 + $0x8] sm:$0xff]
      %v2663 = vld [vmem:[%s2660 + $0x10] sm:$0xff]
      %v2664 = vld [vmem:[%s2660 + $0x18] sm:$0xff]
      %v2665 = vld [vmem:[%s2660 + $0x20] sm:$0xff]
      %v2666 = vld [vmem:[%s2660 + $0x28] sm:$0xff]
      %v2667 = vld [vmem:[%s2660 + $0x30] sm:$0xff]
      %v2668 = vld [vmem:[%s2660 + $0x38] sm:$0xff]
      %v2669 = vld [vmem:[%s2660 + $0x40] sm:$0xff]
      %v2670 = vld [vmem:[%s2660 + $0x48] sm:$0xff]
      %v2671 = vld [vmem:[%s2660 + $0x50] sm:$0xff]
      %v2672 = vld [vmem:[%s2660 + $0x58] sm:$0xff]
      %v2673 = vld [vmem:[%s2660 + $0x60] sm:$0xff]
      %v2674 = vld [vmem:[%s2660 + $0x68] sm:$0xff]
      %v2675 = vld [vmem:[%s2660 + $0x70] sm:$0xff]
      %v2676 = vld [vmem:[%s2660 + $0x78] sm:$0xff]
      %2677 = vmatprep.subr.mxu0 0.0
      %2678 = vmatpush1.msra.mxu0 %v2676
      %2679 = vmatprep.subr.mxu0 0.0
      %2680 = vmatpush1.msra.mxu0 %v2675
      %2681 = vmatprep.subr.mxu0 0.0
      %2682 = vmatpush1.msra.mxu0 %v2674
      %2683 = vmatprep.subr.mxu0 0.0
      %2684 = vmatpush1.msra.mxu0 %v2673
      %2685 = vmatprep.subr.mxu0 0.0
      %2686 = vmatpush1.msra.mxu0 %v2672
      %2687 = vmatprep.subr.mxu0 0.0
      %2688 = vmatpush1.msra.mxu0 %v2671
      %2689 = vmatprep.subr.mxu0 0.0
      %2690 = vmatpush1.msra.mxu0 %v2670
      %2691 = vmatprep.subr.mxu0 0.0
      %2692 = vmatpush1.msra.mxu0 %v2669
      %2693 = vmatprep.subr.mxu0 0.0
      %2694 = vmatpush1.msra.mxu0 %v2668
      %2695 = vmatprep.subr.mxu0 0.0
      %2696 = vmatpush1.msra.mxu0 %v2667
      %2697 = vmatprep.subr.mxu0 0.0
      %2698 = vmatpush1.msra.mxu0 %v2666
      %2699 = vmatprep.subr.mxu0 0.0
      %2700 = vmatpush1.msra.mxu0 %v2665
      %2701 = vmatprep.subr.mxu0 0.0
      %2702 = vmatpush1.msra.mxu0 %v2664
      %2703 = vmatprep.subr.mxu0 0.0
      %2704 = vmatpush1.msra.mxu0 %v2663
      %2705 = vmatprep.subr.mxu0 0.0
      %2706 = vmatpush1.msra.mxu0 %v2662
      %2707 = vmatprep.subr.mxu0 0.0
      %2708 = vmatpush1.msra.mxu0 %v2661
      %2709 = vmatprep.subr.mxu0 0.0
      %2710 = vmatpush2.msra.mxu0 0.0
      %2711 = vmatprep.subr.mxu0 0.0
      %2712 = vmatpush2.msra.mxu0 0.0
      %2713 = vmatprep.subr.mxu0 0.0
      %2714 = vmatpush2.msra.mxu0 0.0
      %2715 = vmatprep.subr.mxu0 0.0
      %2716 = vmatpush2.msra.mxu0 0.0
      %2717 = vmatprep.subr.mxu0 0.0
      %2718 = vmatpush2.msra.mxu0 0.0
      %2719 = vmatprep.subr.mxu0 0.0
      %2720 = vmatpush2.msra.mxu0 0.0
      %2721 = vmatprep.subr.mxu0 0.0
      %2722 = vmatpush2.msra.mxu0 0.0
      %2723 = vmatprep.subr.mxu0 0.0
      %2724 = vmatpush2.msra.mxu0 0.0
      %2725 = vmatprep.subr.mxu0 0.0
      %2726 = vmatpush2.msra.mxu0 0.0
      %2727 = vmatprep.subr.mxu0 0.0
      %2728 = vmatpush2.msra.mxu0 0.0
      %2729 = vmatprep.subr.mxu0 0.0
      %2730 = vmatpush2.msra.mxu0 0.0
      %2731 = vmatprep.subr.mxu0 0.0
      %2732 = vmatpush2.msra.mxu0 0.0
      %2733 = vmatprep.subr.mxu0 0.0
      %2734 = vmatpush2.msra.mxu0 0.0
      %2735 = vmatprep.subr.mxu0 0.0
      %2736 = vmatpush2.msra.mxu0 0.0
      %2737 = vmatprep.subr.mxu0 0.0
      %2738 = vmatpush2.msra.mxu0 0.0
      %2739 = vmatprep.subr.mxu0 0.0
      %2740 = vmatpush2.msra.mxu0 0.0
      %2741 = vmatprep.mubr.f32.mxu0 0.0
      %2742 = vmatmul.mubr.f32.gmra.mxu0 %v882
      %v2743 = vpop.f32.mrf.mxu0
      %v2744 = vadd.f32 0.0, %v2743
      %v2745 = vpop.f32.mrf.mxu0
      %2746 = vmatprep.mubr.f32.mxu0 0.0
      %2747 = vmatmul.mubr.f32.gmra.mxu0 %v884
      %v2748 = vpop.f32.mrf.mxu0
      %v2749 = vadd.f32 0.0, %v2748
      %v2750 = vpop.f32.mrf.mxu0
      %2751 = vmatprep.mubr.f32.mxu0 0.0
      %2752 = vmatmul.mubr.f32.gmra.mxu0 %v887
      %v2753 = vpop.f32.mrf.mxu0
      %v2754 = vadd.f32 0.0, %v2753
      %v2755 = vpop.f32.mrf.mxu0
      %2756 = vmatprep.mubr.f32.mxu0 0.0
      %2757 = vmatmul.mubr.f32.gmra.mxu0 %v889
      %v2758 = vpop.f32.mrf.mxu0
      %v2759 = vadd.f32 0.0, %v2758
      %v2760 = vpop.f32.mrf.mxu0
      %2761 = vmatprep.mubr.f32.mxu0 0.0
      %2762 = vmatmul.mubr.f32.gmra.mxu0 %v892
      %v2763 = vpop.f32.mrf.mxu0
      %v2764 = vadd.f32 0.0, %v2763
      %v2765 = vpop.f32.mrf.mxu0
      %2766 = vmatprep.mubr.f32.mxu0 0.0
      %2767 = vmatmul.mubr.f32.gmra.mxu0 %v894
      %v2768 = vpop.f32.mrf.mxu0
      %v2769 = vadd.f32 0.0, %v2768
      %v2770 = vpop.f32.mrf.mxu0
      %2771 = vmatprep.mubr.f32.mxu0 0.0
      %2772 = vmatmul.mubr.f32.gmra.mxu0 %v897
      %v2773 = vpop.f32.mrf.mxu0
      %v2774 = vadd.f32 0.0, %v2773
      %v2775 = vpop.f32.mrf.mxu0
      %2776 = vmatprep.mubr.f32.mxu0 0.0
      %2777 = vmatmul.mubr.f32.gmra.mxu0 %v899
      %v2778 = vpop.f32.mrf.mxu0
      %v2779 = vadd.f32 0.0, %v2778
      %v2780 = vpop.f32.mrf.mxu0
      %2781 = vmatprep.mubr.f32.mxu0 0.0
      %2782 = vmatmul.mubr.f32.gmra.mxu0 %v902
      %v2783 = vpop.f32.mrf.mxu0
      %v2784 = vadd.f32 0.0, %v2783
      %v2785 = vpop.f32.mrf.mxu0
      %2786 = vmatprep.mubr.f32.mxu0 0.0
      %2787 = vmatmul.mubr.f32.gmra.mxu0 %v904
      %v2788 = vpop.f32.mrf.mxu0
      %v2789 = vadd.f32 0.0, %v2788
      %v2790 = vpop.f32.mrf.mxu0
      %2791 = vmatprep.mubr.f32.mxu0 0.0
      %2792 = vmatmul.mubr.f32.gmra.mxu0 %v907
      %v2793 = vpop.f32.mrf.mxu0
      %v2794 = vadd.f32 0.0, %v2793
      %v2795 = vpop.f32.mrf.mxu0
      %2796 = vmatprep.mubr.f32.mxu0 0.0
      %2797 = vmatmul.mubr.f32.gmra.mxu0 %v909
      %v2798 = vpop.f32.mrf.mxu0
      %v2799 = vadd.f32 0.0, %v2798
      %v2800 = vpop.f32.mrf.mxu0
      %2801 = vmatprep.mubr.f32.mxu0 0.0
      %2802 = vmatmul.mubr.f32.gmra.mxu0 %v912
      %v2803 = vpop.f32.mrf.mxu0
      %v2804 = vadd.f32 0.0, %v2803
      %v2805 = vpop.f32.mrf.mxu0
      %2806 = vmatprep.mubr.f32.mxu0 0.0
      %2807 = vmatmul.mubr.f32.gmra.mxu0 %v914
      %v2808 = vpop.f32.mrf.mxu0
      %v2809 = vadd.f32 0.0, %v2808
      %v2810 = vpop.f32.mrf.mxu0
      %2811 = vmatprep.mubr.f32.mxu0 0.0
      %2812 = vmatmul.mubr.f32.gmra.mxu0 %v917
      %v2813 = vpop.f32.mrf.mxu0
      %v2814 = vadd.f32 0.0, %v2813
      %v2815 = vpop.f32.mrf.mxu0
      %2816 = vmatprep.mubr.f32.mxu0 0.0
      %2817 = vmatmul.mubr.f32.gmra.mxu0 %v919
      %v2818 = vpop.f32.mrf.mxu0
      %v2819 = vadd.f32 0.0, %v2818
      %v2820 = vpop.f32.mrf.mxu0
      %2821 = vmatprep.mubr.f32.mxu0 0.0
      %2822 = vmatmul.mubr.f32.gmra.mxu0 %v922
      %v2823 = vpop.f32.mrf.mxu0
      %v2824 = vadd.f32 0.0, %v2823
      %v2825 = vpop.f32.mrf.mxu0
      %2826 = vmatprep.mubr.f32.mxu0 0.0
      %2827 = vmatmul.mubr.f32.gmra.mxu0 %v924
      %v2828 = vpop.f32.mrf.mxu0
      %v2829 = vadd.f32 0.0, %v2828
      %v2830 = vpop.f32.mrf.mxu0
      %2831 = vmatprep.mubr.f32.mxu0 0.0
      %2832 = vmatmul.mubr.f32.gmra.mxu0 %v927
      %v2833 = vpop.f32.mrf.mxu0
      %v2834 = vadd.f32 0.0, %v2833
      %v2835 = vpop.f32.mrf.mxu0
      %2836 = vmatprep.mubr.f32.mxu0 0.0
      %2837 = vmatmul.mubr.f32.gmra.mxu0 %v929
      %v2838 = vpop.f32.mrf.mxu0
      %v2839 = vadd.f32 0.0, %v2838
      %v2840 = vpop.f32.mrf.mxu0
      %2841 = vmatprep.mubr.f32.mxu0 0.0
      %2842 = vmatmul.mubr.f32.gmra.mxu0 %v932
      %v2843 = vpop.f32.mrf.mxu0
      %v2844 = vadd.f32 0.0, %v2843
      %v2845 = vpop.f32.mrf.mxu0
      %2846 = vmatprep.mubr.f32.mxu0 0.0
      %2847 = vmatmul.mubr.f32.gmra.mxu0 %v934
      %v2848 = vpop.f32.mrf.mxu0
      %v2849 = vadd.f32 0.0, %v2848
      %v2850 = vpop.f32.mrf.mxu0
      %2851 = vmatprep.mubr.f32.mxu0 0.0
      %2852 = vmatmul.mubr.f32.gmra.mxu0 %v937
      %v2853 = vpop.f32.mrf.mxu0
      %v2854 = vadd.f32 0.0, %v2853
      %v2855 = vpop.f32.mrf.mxu0
      %2856 = vmatprep.mubr.f32.mxu0 0.0
      %2857 = vmatmul.mubr.f32.gmra.mxu0 %v939
      %v2858 = vpop.f32.mrf.mxu0
      %v2859 = vadd.f32 0.0, %v2858
      %v2860 = vpop.f32.mrf.mxu0
      %2861 = vmatprep.mubr.f32.mxu0 0.0
      %2862 = vmatmul.mubr.f32.gmra.mxu0 %v942
      %v2863 = vpop.f32.mrf.mxu0
      %v2864 = vadd.f32 0.0, %v2863
      %v2865 = vpop.f32.mrf.mxu0
      %2866 = vmatprep.mubr.f32.mxu0 0.0
      %2867 = vmatmul.mubr.f32.gmra.mxu0 %v944
      %v2868 = vpop.f32.mrf.mxu0
      %v2869 = vadd.f32 0.0, %v2868
      %v2870 = vpop.f32.mrf.mxu0
      %2871 = vmatprep.mubr.f32.mxu0 0.0
      %2872 = vmatmul.mubr.f32.gmra.mxu0 %v947
      %v2873 = vpop.f32.mrf.mxu0
      %v2874 = vadd.f32 0.0, %v2873
      %v2875 = vpop.f32.mrf.mxu0
      %2876 = vmatprep.mubr.f32.mxu0 0.0
      %2877 = vmatmul.mubr.f32.gmra.mxu0 %v949
      %v2878 = vpop.f32.mrf.mxu0
      %v2879 = vadd.f32 0.0, %v2878
      %v2880 = vpop.f32.mrf.mxu0
      %2881 = vmatprep.mubr.f32.mxu0 0.0
      %2882 = vmatmul.mubr.f32.gmra.mxu0 %v1816
      %v2883 = vpop.f32.mrf.mxu0
      %v2884 = vadd.f32 0.0, %v2883
      %v2885 = vpop.f32.mrf.mxu0
      %2886 = vmatprep.mubr.f32.mxu0 0.0
      %2887 = vmatmul.mubr.f32.gmra.mxu0 %v1818
      %v2888 = vpop.f32.mrf.mxu0
      %v2889 = vadd.f32 0.0, %v2888
      %v2890 = vpop.f32.mrf.mxu0
      %2891 = vmatprep.mubr.f32.mxu0 0.0
      %2892 = vmatmul.mubr.f32.gmra.mxu0 %v2655
      %v2893 = vpop.f32.mrf.mxu0
      %v2894 = vadd.f32 0.0, %v2893
      %v2895 = vpop.f32.mrf.mxu0
      %2896 = vmatprep.mubr.f32.mxu0 0.0
      %2897 = vmatmul.mubr.f32.gmra.mxu0 %v2657
      %v2898 = vpop.f32.mrf.mxu0
      %v2899 = vadd.f32 0.0, %v2898
      %v2900 = vpop.f32.mrf.mxu0
      %2901 = vdwg.mxu0
      %v2902 = vadd.f32 %v2621, %v2744
      %v2903 = vadd.f32 %v2622, %v2749
      %v2904 = vadd.f32 %v2623, %v2754
      %v2905 = vadd.f32 %v2624, %v2759
      %v2906 = vadd.f32 %v2625, %v2764
      %v2907 = vadd.f32 %v2626, %v2769
      %v2908 = vadd.f32 %v2627, %v2774
      %v2909 = vadd.f32 %v2628, %v2779
      %v2910 = vadd.f32 %v2629, %v2784
      %v2911 = vadd.f32 %v2630, %v2789
      %v2912 = vadd.f32 %v2631, %v2794
      %v2913 = vadd.f32 %v2632, %v2799
      %v2914 = vadd.f32 %v2633, %v2804
      %v2915 = vadd.f32 %v2634, %v2809
      %v2916 = vadd.f32 %v2635, %v2814
      %v2917 = vadd.f32 %v2636, %v2819
      %v2918 = vadd.f32 %v2637, %v2824
      %v2919 = vadd.f32 %v2638, %v2829
      %v2920 = vadd.f32 %v2639, %v2834
      %v2921 = vadd.f32 %v2640, %v2839
      %v2922 = vadd.f32 %v2641, %v2844
      %v2923 = vadd.f32 %v2642, %v2849
      %v2924 = vadd.f32 %v2643, %v2854
      %v2925 = vadd.f32 %v2644, %v2859
      %v2926 = vadd.f32 %v2645, %v2864
      %v2927 = vadd.f32 %v2646, %v2869
      %v2928 = vadd.f32 %v2647, %v2874
      %v2929 = vadd.f32 %v2648, %v2879
      %v2930 = vadd.f32 %v2649, %v2884
      %v2931 = vadd.f32 %v2650, %v2889
      %v2932 = vadd.f32 %v2651, %v2894
      %v2933 = vadd.f32 %v2652, %v2899
      %v2934 = vld [vmem:[%s2] sm:$0x1]
      %v2936 = vlaneseq
      %v2937 = vshrl.u32 %v2936, 7
      %v2938 = vsub.s32 0, %v2937
      %v2939 = vrot.slane %v2934, %v2938
      %v2941 = vadd.f32 %v2902, %v2939
      %v2942 = vadd.f32 %v2903, %v2939
      %v2943 = vadd.f32 %v2904, %v2939
      %v2944 = vadd.f32 %v2905, %v2939
      %v2945 = vadd.f32 %v2906, %v2939
      %v2946 = vadd.f32 %v2907, %v2939
      %v2947 = vadd.f32 %v2908, %v2939
      %v2948 = vadd.f32 %v2909, %v2939
      %v2949 = vadd.f32 %v2910, %v2939
      %v2950 = vadd.f32 %v2911, %v2939
      %v2951 = vadd.f32 %v2912, %v2939
      %v2952 = vadd.f32 %v2913, %v2939
      %v2953 = vadd.f32 %v2914, %v2939
      %v2954 = vadd.f32 %v2915, %v2939
      %v2955 = vadd.f32 %v2916, %v2939
      %v2956 = vadd.f32 %v2917, %v2939
      %v2957 = vadd.f32 %v2918, %v2939
      %v2958 = vadd.f32 %v2919, %v2939
      %v2959 = vadd.f32 %v2920, %v2939
      %v2960 = vadd.f32 %v2921, %v2939
      %v2961 = vadd.f32 %v2922, %v2939
      %v2962 = vadd.f32 %v2923, %v2939
      %v2963 = vadd.f32 %v2924, %v2939
      %v2964 = vadd.f32 %v2925, %v2939
      %v2965 = vadd.f32 %v2926, %v2939
      %v2966 = vadd.f32 %v2927, %v2939
      %v2967 = vadd.f32 %v2928, %v2939
      %v2968 = vadd.f32 %v2929, %v2939
      %v2969 = vadd.f32 %v2930, %v2939
      %v2970 = vadd.f32 %v2931, %v2939
      %v2971 = vadd.f32 %v2932, %v2939
      %v2972 = vadd.f32 %v2933, %v2939
      %2973 = vst [vmem:[%s170] sm:$0xff] %v2941
      %2974 = vst [vmem:[%s170 + $0x8] sm:$0xff] %v2942
      %2975 = vst [vmem:[%s170 + $0x10] sm:$0xff] %v2943
      %2976 = vst [vmem:[%s170 + $0x18] sm:$0xff] %v2944
      %2977 = vst [vmem:[%s170 + $0x20] sm:$0xff] %v2945
      %2978 = vst [vmem:[%s170 + $0x28] sm:$0xff] %v2946
      %2979 = vst [vmem:[%s170 + $0x30] sm:$0xff] %v2947
      %2980 = vst [vmem:[%s170 + $0x38] sm:$0xff] %v2948
      %2981 = vst [vmem:[%s170 + $0x40] sm:$0xff] %v2949
      %2982 = vst [vmem:[%s170 + $0x48] sm:$0xff] %v2950
      %2983 = vst [vmem:[%s170 + $0x50] sm:$0xff] %v2951
      %2984 = vst [vmem:[%s170 + $0x58] sm:$0xff] %v2952
      %2985 = vst [vmem:[%s170 + $0x60] sm:$0xff] %v2953
      %2986 = vst [vmem:[%s170 + $0x68] sm:$0xff] %v2954
      %2987 = vst [vmem:[%s170 + $0x70] sm:$0xff] %v2955
      %2988 = vst [vmem:[%s170 + $0x78] sm:$0xff] %v2956
      %2989 = vst [vmem:[%s170 + $0x80] sm:$0xff] %v2957
      %2990 = vst [vmem:[%s170 + $0x88] sm:$0xff] %v2958
      %2991 = vst [vmem:[%s170 + $0x90] sm:$0xff] %v2959
      %2992 = vst [vmem:[%s170 + $0x98] sm:$0xff] %v2960
      %2993 = vst [vmem:[%s170 + $0xa0] sm:$0xff] %v2961
      %2994 = vst [vmem:[%s170 + $0xa8] sm:$0xff] %v2962
      %2995 = vst [vmem:[%s170 + $0xb0] sm:$0xff] %v2963
      %2996 = vst [vmem:[%s170 + $0xb8] sm:$0xff] %v2964
      %2997 = vst [vmem:[%s170 + $0xc0] sm:$0xff] %v2965
      %2998 = vst [vmem:[%s170 + $0xc8] sm:$0xff] %v2966
      %2999 = vst [vmem:[%s170 + $0xd0] sm:$0xff] %v2967
      %3000 = vst [vmem:[%s170 + $0xd8] sm:$0xff] %v2968
      %3001 = vst [vmem:[%s170 + $0xe0] sm:$0xff] %v2969
      %3002 = vst [vmem:[%s170 + $0xe8] sm:$0xff] %v2970
      %3003 = vst [vmem:[%s170 + $0xf0] sm:$0xff] %v2971
      %3004 = vst [vmem:[%s170 + $0xf8] sm:$0xff] %v2972
      %p3005 = scmp.lt.s32.totalorder %s14, 1
      %s3006 = scalar_select %p3005, %s14, 1
      %s3007 = smul.addr %s3006, 32
      %s3008 = smul.addr %s3007, 8
      %s3009 = scalar_lea.vmem %s3, %s3008
      // Predicated region
      $region33: #{downsample_block_forward.1} parent=31 // pred_check
        %p3010 = pneg %p100
      $region34: #{downsample_block_forward.1} parent=31 // pred_check_branch
        %3012 = sbr.rel (%p3010) target = $region36
      $region35: #{downsample_block_forward.1} parent=31 // pred_region
        _
      $region36: #{downsample_block_forward.1} parent=31 // pred_fallthru
        _
    $region32: #{downsample_block_forward.1} parent=5 // pred_fallthru
      _
    %p3013 = scmp.le.s32.totalorder 2, %s9
    // Predicated region
    $region37: #{downsample_block_forward.1} parent=5 // pred_check
      %p3014 = pneg %p3013
    $region38: #{downsample_block_forward.1} parent=5 // pred_check_branch
      %3016 = sbr.rel (%p3014) target = $region40
    $region39: #{downsample_block_forward.1} parent=5 // pred_region
      %s3017 = ssub.s32 %s9, 2
      // Predicated region
      $region41: #{downsample_block_forward.1} parent=39 // pred_check
        %p3018 = pneg %p106
      $region42: #{downsample_block_forward.1} parent=39 // pred_check_branch
        %3020 = sbr.rel (%p3018) target = $region44
      $region43: #{downsample_block_forward.1} parent=39 // pred_region
        %p3021 = scmp.lt.s32.totalorder %s15, 1
        %s3022 = scalar_select %p3021, %s15, 1
        %s3023 = smul.addr %s3022, 32
        %s3024 = smul.addr %s3023, 8
        %s3025 = scalar_lea.vmem %s3, %s3024
      $region44: #{downsample_block_forward.1} parent=39 // pred_fallthru
        _
    $region40: #{downsample_block_forward.1} parent=5 // pred_fallthru
      _
  $region6: #{downsample_block_forward.1} parent=0 // loop_footer
    %s13 = sadd.s32 1, %s9
  $region7: #{downsample_block_forward.1} parent=0 // loop_footer_branch
    %8 = sbr.rel target = $region3
  $region8: #{downsample_block_forward.1} parent=0 // loop_exit
    _

</llo_original>
